<compile_context>
chip_gen: v6e
topology: v6e:2x2x1
jax: 0.10.0
libtpu: 0.0.40
codegen_flags: <defaults>
</compile_context>

<pallas_src>
import functools

import jax
import jax.numpy as jnp
from jax import lax
from jax.experimental import pallas as pl
from jax.experimental.pallas import tpu as pltpu

PAD = 4  # max dilation used inside a ResBlock (conv6: dilation=4, padding=4)


def _resblock_kernel(x_ref, w_ref, b_ref, m_ref, o_ref, ext_ref, *, H, W, C, M0):
    """One batch element per grid step.

    x_ref  : (1, C, H*W)  unpadded input (channels on sublanes, spatial on lanes)
    w_ref  : (6C, 9C)     packed im2col weights [conv1 | conv3 | conv5 | conv2 | 0.1*conv4 | 0.1*conv6]
    b_ref  : (6C, 1)      packed biases (same order, 0.1 folded into conv4/conv6)
    m_ref  : (1, Hp*Wp)   1.0 on the H*W interior of the padded domain, 0.0 on the border
    o_ref  : (1, C, H*W)  output
    ext_ref: (4C, Lext)   scratch: 4 zero-padded activations with zero margins,
                          row blocks = [x_padded | t1 | t3 | t5]
    """
    Hp, Wp = H + 2 * PAD, W + 2 * PAD
    L = Hp * Wp

    xv = x_ref[0]                                               # (C, H*W), lane-dense

    # ---- build the zero-padded input in scratch block 0 (no wrapper pad) ----
    ext_ref[0:C, M0:M0 + L] = jnp.zeros((C, L), jnp.float32)
    for h in range(H):
        dst = M0 + (PAD + h) * Wp + PAD
        ext_ref[0:C, dst:dst + W] = xv[:, h * W:(h + 1) * W]

    inside = m_ref[...] != 0.0                                  # (1, L) bool

    def conv_relu(src_row, n_in, w_row, n_out, d):
        # ONE im2col matmul per conv: concatenate the 9 shifted views of the
        # padded source (static slices of the scratch ref) along the sublane
        # (K) dim and hit the MXU once with K = 9*n_in, N = Hp*Wp.
        taps = []
        for kh in range(3):
            for kw in range(3):
                s = M0 + (kh - 1) * d * Wp + (kw - 1) * d
                taps.append(ext_ref[src_row:src_row + n_in, s:s + L])
        patch = jnp.concatenate(taps, axis=0)                   # (9*n_in, L)
        acc = jnp.dot(w_ref[w_row:w_row + n_out, :], patch,
                      preferred_element_type=jnp.float32)
        acc = acc + b_ref[w_row:w_row + n_out, :]               # lane-broadcast bias
        return jnp.maximum(acc, 0.0)                            # (n_out, L)

    # ---- stage A: conv1 (d=1) and fused conv3+conv5 (shared d=2 patch) ------
    t1 = conv_relu(0, C, 0 * C, C, d=1)                         # (C, L)
    t35 = conv_relu(0, C, 1 * C, 2 * C, d=2)                    # (2C, L) = [t3 | t5]
    # Re-zero the padded-domain border (it is the next conv's zero padding);
    # jnp.where (select) also shields against any garbage in the margins.
    ext_ref[C:2 * C, M0:M0 + L] = jnp.where(inside, t1, 0.0)
    ext_ref[2 * C:4 * C, M0:M0 + L] = jnp.where(inside, t35, 0.0)

    # ---- stage B: conv2(t1) + conv4'(t3) + conv6'(t5)  (0.1 already folded) --
    br = (conv_relu(1 * C, C, 3 * C, C, d=1)
          + conv_relu(2 * C, C, 4 * C, C, d=2)
          + conv_relu(3 * C, C, 5 * C, C, d=4))                 # (C, L)

    # ---- residual add + interior extraction, one lane-dense (C, H*W) store --
    rows = [br[:, (PAD + h) * Wp + PAD:(PAD + h) * Wp + PAD + W] for h in range(H)]
    o_ref[0] = xv + jnp.concatenate(rows, axis=1)


def pack_resblock_params(ws, bs):
    """ws: 6 PyTorch-layout (C, C, 3, 3) weights (conv1..conv6); bs: 6 (C,) biases.

    Returns (W_packed (6C, 9C), B_packed (6C, 1)); the 0.1 branch scales are
    folded into conv4/conv6 (valid since relu(0.1*x) == 0.1*relu(x)).
    """
    C = ws[0].shape[0]

    def cat(w):  # (Cout, Cin, 3, 3) -> (Cout, 9*Cin), tap-major (kh*3+kw), Cin minor
        return jnp.transpose(w, (0, 2, 3, 1)).reshape(C, 9 * C)

    w1, w2, w3, w4, w5, w6 = [cat(w) for w in ws]
    b1, b2, b3, b4, b5, b6 = bs
    w4, b4 = 0.1 * w4, 0.1 * b4
    w6, b6 = 0.1 * w6, 0.1 * b6
    w_packed = jnp.concatenate([w1, w3, w5, w2, w4, w6], axis=0)            # (6C, 9C)
    b_packed = jnp.concatenate([b1, b3, b5, b2, b4, b6], axis=0)[:, None]   # (6C, 1)
    return w_packed, b_packed


def resblock(x_nchw, w_packed, b_packed):
    N, C, H, W = x_nchw.shape
    HW = H * W
    Hp, Wp = H + 2 * PAD, W + 2 * PAD
    L = Hp * Wp
    maxoff = PAD * Wp + PAD                      # largest |tap shift| in the flat layout
    M0 = ((maxoff + 127) // 128) * 128           # lane-aligned zero margin (>= maxoff)
    Lext = 2 * M0 + L

    # 0/1 interior mask over the flattened padded domain (tiny, computed once).
    mask = jnp.zeros((Hp, Wp), jnp.float32).at[PAD:PAD + H, PAD:PAD + W].set(1.0)
    mask = mask.reshape(1, L)

    x = x_nchw.reshape(N, C, HW)                 # free: contiguous reshape, no relayout

    kernel = functools.partial(_resblock_kernel, H=H, W=W, C=C, M0=M0)
    out = pl.pallas_call(
        kernel,
        out_shape=jax.ShapeDtypeStruct((N, C, HW), jnp.float32),
        grid=(N,),
        in_specs=[
            pl.BlockSpec((1, C, HW), lambda n: (n, 0, 0)),
            pl.BlockSpec((6 * C, 9 * C), lambda n: (0, 0)),
            pl.BlockSpec((6 * C, 1), lambda n: (0, 0)),
            pl.BlockSpec((1, L), lambda n: (0, 0)),
        ],
        out_specs=pl.BlockSpec((1, C, HW), lambda n: (n, 0, 0)),
        scratch_shapes=[pltpu.VMEM((4 * C, Lext), jnp.float32)],
        compiler_params=pltpu.CompilerParams(dimension_semantics=("parallel",)),
    )(x, w_packed, b_packed, mask)
    return out.reshape(N, C, H, W)


# --------------------------- pure-JAX reference ------------------------------
def resblock_ref(x, ws, bs):
    def conv(v, w, b, d):
        out = lax.conv_general_dilated(
            v, w, window_strides=(1, 1), padding=[(d, d), (d, d)],
            rhs_dilation=(d, d), dimension_numbers=("NCHW", "OIHW", "NCHW"),
            precision=lax.Precision.HIGHEST)
        return out + b.reshape(1, -1, 1, 1)

    r = jax.nn.relu
    y1 = r(conv(r(conv(x, ws[0], bs[0], 1)), ws[1], bs[1], 1))
    y2 = r(conv(r(conv(x, ws[2], bs[2], 2)), ws[3], bs[3], 2))
    y3 = r(conv(r(conv(x, ws[4], bs[4], 2)), ws[5], bs[5], 4))
    return x + y1 + 0.1 * y2 + 0.1 * y3


if __name__ == "__main__":
    N, C, H, W = 2, 8, 16, 16
    key = jax.random.PRNGKey(0)
    kx, kp = jax.random.split(key)
    x = jax.random.normal(kx, (N, C, H, W), jnp.float32)

    ws, bs = [], []
    for ck in jax.random.split(kp, 6):          # conv1..conv6
        kw_, kb_ = jax.random.split(ck)
        ws.append(jax.random.normal(kw_, (C, C, 3, 3), jnp.float32) * 0.05)
        bs.append(jax.random.normal(kb_, (C,), jnp.float32) * 0.01)

    w_packed, b_packed = pack_resblock_params(ws, bs)

    run = jax.jit(resblock)
    out = jax.block_until_ready(run(x, w_packed, b_packed))

    assert out.shape == (N, C, H, W), out.shape
    assert bool(jnp.all(jnp.isfinite(out)))

    ref = resblock_ref(x, ws, bs)
    err = float(jnp.max(jnp.abs(out - ref)))
    assert err < 2e-2, f"max abs err vs reference: {err}"
    print("KERNEL_OK")
</pallas_src>

<mosaic_0001>
module attributes {stable_mosaic.version = 11 : i64} {
  func.func @_resblock_kernel(%arg0: i32, %arg1: memref<1x8x256xf32, #tpu.memory_space<vmem>>, %arg2: memref<48x72xf32, #tpu.memory_space<vmem>>, %arg3: memref<48x1xf32, #tpu.memory_space<vmem>>, %arg4: memref<1x576xf32, #tpu.memory_space<vmem>>, %arg5: memref<1x8x256xf32, #tpu.memory_space<vmem>>, %arg6: memref<32x832xf32, #tpu.memory_space<vmem>>) attributes {dimension_semantics = [#tpu.dimension_semantics<parallel>], iteration_bounds = array<i64: 2>, scalar_prefetch = 0 : i64, scratch_operands = 1 : i64, tpu.core_type = #tpu.core_type<tc>, window_params = [{transform_indices = @transform_0, window_bounds = array<i64: 1, 8, 256>}, {pipeline_mode = #tpu.pipeline_mode<synchronous>, transform_indices = @transform_1, window_bounds = array<i64: 48, 72>}, {pipeline_mode = #tpu.pipeline_mode<synchronous>, transform_indices = @transform_2, window_bounds = array<i64: 48, 1>}, {pipeline_mode = #tpu.pipeline_mode<synchronous>, transform_indices = @transform_3, window_bounds = array<i64: 1, 576>}, {transform_indices = @transform_4, window_bounds = array<i64: 1, 8, 256>}]} {
    %c0 = arith.constant 0 : index
    %c0_0 = arith.constant 0 : index
    %c0_1 = arith.constant 0 : index
    %0 = vector.load %arg1[%c0, %c0_0, %c0_1] : memref<1x8x256xf32, #tpu.memory_space<vmem>>, vector<1x8x256xf32>
    %1 = vector.shape_cast %0 : vector<1x8x256xf32> to vector<8x256xf32>
    %cst = arith.constant 0.000000e+00 : f32
    %2 = vector.broadcast %cst : f32 to vector<8x576xf32>
    %c0_2 = arith.constant 0 : index
    %c128 = arith.constant 128 : index
    %3 = vector.load %arg6[%c0_2, %c128] : memref<32x832xf32, #tpu.memory_space<vmem>>, vector<8x576xf32>
    tpu.vector_store %arg6[%c0_2, %c128], %2 {strides = array<i32>} : memref<32x832xf32, #tpu.memory_space<vmem>>, vector<8x576xf32>,
    %4 = vector.extract_strided_slice %1 {offsets = [0, 0], sizes = [8, 16], strides = [1, 1]} : vector<8x256xf32> to vector<8x16xf32>
    %c0_3 = arith.constant 0 : index
    %c228 = arith.constant 228 : index
    %5 = vector.load %arg6[%c0_3, %c228] : memref<32x832xf32, #tpu.memory_space<vmem>>, vector<8x16xf32>
    tpu.vector_store %arg6[%c0_3, %c228], %4 {strides = array<i32>} : memref<32x832xf32, #tpu.memory_space<vmem>>, vector<8x16xf32>,
    %6 = vector.extract_strided_slice %1 {offsets = [0, 16], sizes = [8, 16], strides = [1, 1]} : vector<8x256xf32> to vector<8x16xf32>
    %c0_4 = arith.constant 0 : index
    %c252 = arith.constant 252 : index
    %7 = vector.load %arg6[%c0_4, %c252] : memref<32x832xf32, #tpu.memory_space<vmem>>, vector<8x16xf32>
    tpu.vector_store %arg6[%c0_4, %c252], %6 {strides = array<i32>} : memref<32x832xf32, #tpu.memory_space<vmem>>, vector<8x16xf32>,
    %8 = vector.extract_strided_slice %1 {offsets = [0, 32], sizes = [8, 16], strides = [1, 1]} : vector<8x256xf32> to vector<8x16xf32>
    %c0_5 = arith.constant 0 : index
    %c276 = arith.constant 276 : index
    %9 = vector.load %arg6[%c0_5, %c276] : memref<32x832xf32, #tpu.memory_space<vmem>>, vector<8x16xf32>
    tpu.vector_store %arg6[%c0_5, %c276], %8 {strides = array<i32>} : memref<32x832xf32, #tpu.memory_space<vmem>>, vector<8x16xf32>,
    %10 = vector.extract_strided_slice %1 {offsets = [0, 48], sizes = [8, 16], strides = [1, 1]} : vector<8x256xf32> to vector<8x16xf32>
    %c0_6 = arith.constant 0 : index
    %c300 = arith.constant 300 : index
    %11 = vector.load %arg6[%c0_6, %c300] : memref<32x832xf32, #tpu.memory_space<vmem>>, vector<8x16xf32>
    tpu.vector_store %arg6[%c0_6, %c300], %10 {strides = array<i32>} : memref<32x832xf32, #tpu.memory_space<vmem>>, vector<8x16xf32>,
    %12 = vector.extract_strided_slice %1 {offsets = [0, 64], sizes = [8, 16], strides = [1, 1]} : vector<8x256xf32> to vector<8x16xf32>
    %c0_7 = arith.constant 0 : index
    %c324 = arith.constant 324 : index
    %13 = vector.load %arg6[%c0_7, %c324] : memref<32x832xf32, #tpu.memory_space<vmem>>, vector<8x16xf32>
    tpu.vector_store %arg6[%c0_7, %c324], %12 {strides = array<i32>} : memref<32x832xf32, #tpu.memory_space<vmem>>, vector<8x16xf32>,
    %14 = vector.extract_strided_slice %1 {offsets = [0, 80], sizes = [8, 16], strides = [1, 1]} : vector<8x256xf32> to vector<8x16xf32>
    %c0_8 = arith.constant 0 : index
    %c348 = arith.constant 348 : index
    %15 = vector.load %arg6[%c0_8, %c348] : memref<32x832xf32, #tpu.memory_space<vmem>>, vector<8x16xf32>
    tpu.vector_store %arg6[%c0_8, %c348], %14 {strides = array<i32>} : memref<32x832xf32, #tpu.memory_space<vmem>>, vector<8x16xf32>,
    %16 = vector.extract_strided_slice %1 {offsets = [0, 96], sizes = [8, 16], strides = [1, 1]} : vector<8x256xf32> to vector<8x16xf32>
    %c0_9 = arith.constant 0 : index
    %c372 = arith.constant 372 : index
    %17 = vector.load %arg6[%c0_9, %c372] : memref<32x832xf32, #tpu.memory_space<vmem>>, vector<8x16xf32>
    tpu.vector_store %arg6[%c0_9, %c372], %16 {strides = array<i32>} : memref<32x832xf32, #tpu.memory_space<vmem>>, vector<8x16xf32>,
    %18 = vector.extract_strided_slice %1 {offsets = [0, 112], sizes = [8, 16], strides = [1, 1]} : vector<8x256xf32> to vector<8x16xf32>
    %c0_10 = arith.constant 0 : index
    %c396 = arith.constant 396 : index
    %19 = vector.load %arg6[%c0_10, %c396] : memref<32x832xf32, #tpu.memory_space<vmem>>, vector<8x16xf32>
    tpu.vector_store %arg6[%c0_10, %c396], %18 {strides = array<i32>} : memref<32x832xf32, #tpu.memory_space<vmem>>, vector<8x16xf32>,
    %20 = vector.extract_strided_slice %1 {offsets = [0, 128], sizes = [8, 16], strides = [1, 1]} : vector<8x256xf32> to vector<8x16xf32>
    %c0_11 = arith.constant 0 : index
    %c420 = arith.constant 420 : index
    %21 = vector.load %arg6[%c0_11, %c420] : memref<32x832xf32, #tpu.memory_space<vmem>>, vector<8x16xf32>
    tpu.vector_store %arg6[%c0_11, %c420], %20 {strides = array<i32>} : memref<32x832xf32, #tpu.memory_space<vmem>>, vector<8x16xf32>,
    %22 = vector.extract_strided_slice %1 {offsets = [0, 144], sizes = [8, 16], strides = [1, 1]} : vector<8x256xf32> to vector<8x16xf32>
    %c0_12 = arith.constant 0 : index
    %c444 = arith.constant 444 : index
    %23 = vector.load %arg6[%c0_12, %c444] : memref<32x832xf32, #tpu.memory_space<vmem>>, vector<8x16xf32>
    tpu.vector_store %arg6[%c0_12, %c444], %22 {strides = array<i32>} : memref<32x832xf32, #tpu.memory_space<vmem>>, vector<8x16xf32>,
    %24 = vector.extract_strided_slice %1 {offsets = [0, 160], sizes = [8, 16], strides = [1, 1]} : vector<8x256xf32> to vector<8x16xf32>
    %c0_13 = arith.constant 0 : index
    %c468 = arith.constant 468 : index
    %25 = vector.load %arg6[%c0_13, %c468] : memref<32x832xf32, #tpu.memory_space<vmem>>, vector<8x16xf32>
    tpu.vector_store %arg6[%c0_13, %c468], %24 {strides = array<i32>} : memref<32x832xf32, #tpu.memory_space<vmem>>, vector<8x16xf32>,
    %26 = vector.extract_strided_slice %1 {offsets = [0, 176], sizes = [8, 16], strides = [1, 1]} : vector<8x256xf32> to vector<8x16xf32>
    %c0_14 = arith.constant 0 : index
    %c492 = arith.constant 492 : index
    %27 = vector.load %arg6[%c0_14, %c492] : memref<32x832xf32, #tpu.memory_space<vmem>>, vector<8x16xf32>
    tpu.vector_store %arg6[%c0_14, %c492], %26 {strides = array<i32>} : memref<32x832xf32, #tpu.memory_space<vmem>>, vector<8x16xf32>,
    %28 = vector.extract_strided_slice %1 {offsets = [0, 192], sizes = [8, 16], strides = [1, 1]} : vector<8x256xf32> to vector<8x16xf32>
    %c0_15 = arith.constant 0 : index
    %c516 = arith.constant 516 : index
    %29 = vector.load %arg6[%c0_15, %c516] : memref<32x832xf32, #tpu.memory_space<vmem>>, vector<8x16xf32>
    tpu.vector_store %arg6[%c0_15, %c516], %28 {strides = array<i32>} : memref<32x832xf32, #tpu.memory_space<vmem>>, vector<8x16xf32>,
    %30 = vector.extract_strided_slice %1 {offsets = [0, 208], sizes = [8, 16], strides = [1, 1]} : vector<8x256xf32> to vector<8x16xf32>
    %c0_16 = arith.constant 0 : index
    %c540 = arith.constant 540 : index
    %31 = vector.load %arg6[%c0_16, %c540] : memref<32x832xf32, #tpu.memory_space<vmem>>, vector<8x16xf32>
    tpu.vector_store %arg6[%c0_16, %c540], %30 {strides = array<i32>} : memref<32x832xf32, #tpu.memory_space<vmem>>, vector<8x16xf32>,
    %32 = vector.extract_strided_slice %1 {offsets = [0, 224], sizes = [8, 16], strides = [1, 1]} : vector<8x256xf32> to vector<8x16xf32>
    %c0_17 = arith.constant 0 : index
    %c564 = arith.constant 564 : index
    %33 = vector.load %arg6[%c0_17, %c564] : memref<32x832xf32, #tpu.memory_space<vmem>>, vector<8x16xf32>
    tpu.vector_store %arg6[%c0_17, %c564], %32 {strides = array<i32>} : memref<32x832xf32, #tpu.memory_space<vmem>>, vector<8x16xf32>,
    %34 = vector.extract_strided_slice %1 {offsets = [0, 240], sizes = [8, 16], strides = [1, 1]} : vector<8x256xf32> to vector<8x16xf32>
    %c0_18 = arith.constant 0 : index
    %c588 = arith.constant 588 : index
    %35 = vector.load %arg6[%c0_18, %c588] : memref<32x832xf32, #tpu.memory_space<vmem>>, vector<8x16xf32>
    tpu.vector_store %arg6[%c0_18, %c588], %34 {strides = array<i32>} : memref<32x832xf32, #tpu.memory_space<vmem>>, vector<8x16xf32>,
    %c0_19 = arith.constant 0 : index
    %c0_20 = arith.constant 0 : index
    %36 = vector.load %arg4[%c0_19, %c0_20] : memref<1x576xf32, #tpu.memory_space<vmem>>, vector<1x576xf32>
    %cst_21 = arith.constant 0.000000e+00 : f32
    %37 = vector.broadcast %cst_21 : f32 to vector<1x576xf32>
    %38 = arith.cmpf one, %36, %37 : vector<1x576xf32>
    %c0_22 = arith.constant 0 : index
    %c103 = arith.constant 103 : index
    %39 = vector.load %arg6[%c0_22, %c103] : memref<32x832xf32, #tpu.memory_space<vmem>>, vector<8x576xf32>
    %c0_23 = arith.constant 0 : index
    %c104 = arith.constant 104 : index
    %40 = vector.load %arg6[%c0_23, %c104] : memref<32x832xf32, #tpu.memory_space<vmem>>, vector<8x576xf32>
    %c0_24 = arith.constant 0 : index
    %c105 = arith.constant 105 : index
    %41 = vector.load %arg6[%c0_24, %c105] : memref<32x832xf32, #tpu.memory_space<vmem>>, vector<8x576xf32>
    %c0_25 = arith.constant 0 : index
    %c127 = arith.constant 127 : index
    %42 = vector.load %arg6[%c0_25, %c127] : memref<32x832xf32, #tpu.memory_space<vmem>>, vector<8x576xf32>
    %c0_26 = arith.constant 0 : index
    %c128_27 = arith.constant 128 : index
    %43 = vector.load %arg6[%c0_26, %c128_27] : memref<32x832xf32, #tpu.memory_space<vmem>>, vector<8x576xf32>
    %c0_28 = arith.constant 0 : index
    %c129 = arith.constant 129 : index
    %44 = vector.load %arg6[%c0_28, %c129] : memref<32x832xf32, #tpu.memory_space<vmem>>, vector<8x576xf32>
    %c0_29 = arith.constant 0 : index
    %c151 = arith.constant 151 : index
    %45 = vector.load %arg6[%c0_29, %c151] : memref<32x832xf32, #tpu.memory_space<vmem>>, vector<8x576xf32>
    %c0_30 = arith.constant 0 : index
    %c152 = arith.constant 152 : index
    %46 = vector.load %arg6[%c0_30, %c152] : memref<32x832xf32, #tpu.memory_space<vmem>>, vector<8x576xf32>
    %c0_31 = arith.constant 0 : index
    %c153 = arith.constant 153 : index
    %47 = vector.load %arg6[%c0_31, %c153] : memref<32x832xf32, #tpu.memory_space<vmem>>, vector<8x576xf32>
    %48 = tpu.concatenate %39, %40, %41, %42, %43, %44, %45, %46, %47 in 0 : vector<8x576xf32>, vector<8x576xf32>, vector<8x576xf32>, vector<8x576xf32>, vector<8x576xf32>, vector<8x576xf32>, vector<8x576xf32>, vector<8x576xf32>, vector<8x576xf32> -> vector<72x576xf32>
    %c0_32 = arith.constant 0 : index
    %c0_33 = arith.constant 0 : index
    %49 = vector.load %arg2[%c0_32, %c0_33] : memref<48x72xf32, #tpu.memory_space<vmem>>, vector<8x72xf32>
    %cst_34 = arith.constant dense<0.000000e+00> : vector<8x576xf32>
    %50 = tpu.matmul %49, %48, %cst_34 {dimension_numbers = #tpu.dot_dimension_numbers<[1], [0], [0], [1], [0, 0, 1, 1], [], []>} : vector<8x72xf32>, vector<72x576xf32>, vector<8x576xf32> -> vector<8x576xf32>
    %c0_35 = arith.constant 0 : index
    %c0_36 = arith.constant 0 : index
    %51 = vector.load %arg3[%c0_35, %c0_36] : memref<48x1xf32, #tpu.memory_space<vmem>>, vector<8x1xf32>
    %52 = vector.broadcast %51 : vector<8x1xf32> to vector<8x576xf32>
    %53 = arith.addf %50, %52 : vector<8x576xf32>
    %cst_37 = arith.constant 0.000000e+00 : f32
    %54 = vector.broadcast %cst_37 : f32 to vector<8x576xf32>
    %55 = arith.maximumf %53, %54 : vector<8x576xf32>
    %c0_38 = arith.constant 0 : index
    %c78 = arith.constant 78 : index
    %56 = vector.load %arg6[%c0_38, %c78] : memref<32x832xf32, #tpu.memory_space<vmem>>, vector<8x576xf32>
    %c0_39 = arith.constant 0 : index
    %c80 = arith.constant 80 : index
    %57 = vector.load %arg6[%c0_39, %c80] : memref<32x832xf32, #tpu.memory_space<vmem>>, vector<8x576xf32>
    %c0_40 = arith.constant 0 : index
    %c82 = arith.constant 82 : index
    %58 = vector.load %arg6[%c0_40, %c82] : memref<32x832xf32, #tpu.memory_space<vmem>>, vector<8x576xf32>
    %c0_41 = arith.constant 0 : index
    %c126 = arith.constant 126 : index
    %59 = vector.load %arg6[%c0_41, %c126] : memref<32x832xf32, #tpu.memory_space<vmem>>, vector<8x576xf32>
    %c0_42 = arith.constant 0 : index
    %c128_43 = arith.constant 128 : index
    %60 = vector.load %arg6[%c0_42, %c128_43] : memref<32x832xf32, #tpu.memory_space<vmem>>, vector<8x576xf32>
    %c0_44 = arith.constant 0 : index
    %c130 = arith.constant 130 : index
    %61 = vector.load %arg6[%c0_44, %c130] : memref<32x832xf32, #tpu.memory_space<vmem>>, vector<8x576xf32>
    %c0_45 = arith.constant 0 : index
    %c174 = arith.constant 174 : index
    %62 = vector.load %arg6[%c0_45, %c174] : memref<32x832xf32, #tpu.memory_space<vmem>>, vector<8x576xf32>
    %c0_46 = arith.constant 0 : index
    %c176 = arith.constant 176 : index
    %63 = vector.load %arg6[%c0_46, %c176] : memref<32x832xf32, #tpu.memory_space<vmem>>, vector<8x576xf32>
    %c0_47 = arith.constant 0 : index
    %c178 = arith.constant 178 : index
    %64 = vector.load %arg6[%c0_47, %c178] : memref<32x832xf32, #tpu.memory_space<vmem>>, vector<8x576xf32>
    %65 = tpu.concatenate %56, %57, %58, %59, %60, %61, %62, %63, %64 in 0 : vector<8x576xf32>, vector<8x576xf32>, vector<8x576xf32>, vector<8x576xf32>, vector<8x576xf32>, vector<8x576xf32>, vector<8x576xf32>, vector<8x576xf32>, vector<8x576xf32> -> vector<72x576xf32>
    %c8 = arith.constant 8 : index
    %c0_48 = arith.constant 0 : index
    %66 = vector.load %arg2[%c8, %c0_48] : memref<48x72xf32, #tpu.memory_space<vmem>>, vector<16x72xf32>
    %cst_49 = arith.constant dense<0.000000e+00> : vector<16x576xf32>
    %67 = tpu.matmul %66, %65, %cst_49 {dimension_numbers = #tpu.dot_dimension_numbers<[1], [0], [0], [1], [0, 0, 1, 1], [], []>} : vector<16x72xf32>, vector<72x576xf32>, vector<16x576xf32> -> vector<16x576xf32>
    %c8_50 = arith.constant 8 : index
    %c0_51 = arith.constant 0 : index
    %68 = vector.load %arg3[%c8_50, %c0_51] : memref<48x1xf32, #tpu.memory_space<vmem>>, vector<16x1xf32>
    %69 = vector.broadcast %68 : vector<16x1xf32> to vector<16x576xf32>
    %70 = arith.addf %67, %69 : vector<16x576xf32>
    %cst_52 = arith.constant 0.000000e+00 : f32
    %71 = vector.broadcast %cst_52 : f32 to vector<16x576xf32>
    %72 = arith.maximumf %70, %71 : vector<16x576xf32>
    %cst_53 = arith.constant 0.000000e+00 : f32
    %73 = vector.shape_cast %38 : vector<1x576xi1> to vector<1x576xi1>
    %74 = vector.broadcast %73 : vector<1x576xi1> to vector<8x576xi1>
    %75 = vector.broadcast %cst_53 : f32 to vector<8x576xf32>
    %76 = arith.select %74, %55, %75 : vector<8x576xi1>, vector<8x576xf32>
    %c8_54 = arith.constant 8 : index
    %c128_55 = arith.constant 128 : index
    %77 = vector.load %arg6[%c8_54, %c128_55] : memref<32x832xf32, #tpu.memory_space<vmem>>, vector<8x576xf32>
    tpu.vector_store %arg6[%c8_54, %c128_55], %76 {strides = array<i32>} : memref<32x832xf32, #tpu.memory_space<vmem>>, vector<8x576xf32>,
    %cst_56 = arith.constant 0.000000e+00 : f32
    %78 = vector.shape_cast %38 : vector<1x576xi1> to vector<1x576xi1>
    %79 = vector.broadcast %78 : vector<1x576xi1> to vector<16x576xi1>
    %80 = vector.broadcast %cst_56 : f32 to vector<16x576xf32>
    %81 = arith.select %79, %72, %80 : vector<16x576xi1>, vector<16x576xf32>
    %c16 = arith.constant 16 : index
    %c128_57 = arith.constant 128 : index
    %82 = vector.load %arg6[%c16, %c128_57] : memref<32x832xf32, #tpu.memory_space<vmem>>, vector<16x576xf32>
    tpu.vector_store %arg6[%c16, %c128_57], %81 {strides = array<i32>} : memref<32x832xf32, #tpu.memory_space<vmem>>, vector<16x576xf32>,
    %c8_58 = arith.constant 8 : index
    %c103_59 = arith.constant 103 : index
    %83 = vector.load %arg6[%c8_58, %c103_59] : memref<32x832xf32, #tpu.memory_space<vmem>>, vector<8x576xf32>
    %c8_60 = arith.constant 8 : index
    %c104_61 = arith.constant 104 : index
    %84 = vector.load %arg6[%c8_60, %c104_61] : memref<32x832xf32, #tpu.memory_space<vmem>>, vector<8x576xf32>
    %c8_62 = arith.constant 8 : index
    %c105_63 = arith.constant 105 : index
    %85 = vector.load %arg6[%c8_62, %c105_63] : memref<32x832xf32, #tpu.memory_space<vmem>>, vector<8x576xf32>
    %c8_64 = arith.constant 8 : index
    %c127_65 = arith.constant 127 : index
    %86 = vector.load %arg6[%c8_64, %c127_65] : memref<32x832xf32, #tpu.memory_space<vmem>>, vector<8x576xf32>
    %c8_66 = arith.constant 8 : index
    %c128_67 = arith.constant 128 : index
    %87 = vector.load %arg6[%c8_66, %c128_67] : memref<32x832xf32, #tpu.memory_space<vmem>>, vector<8x576xf32>
    %c8_68 = arith.constant 8 : index
    %c129_69 = arith.constant 129 : index
    %88 = vector.load %arg6[%c8_68, %c129_69] : memref<32x832xf32, #tpu.memory_space<vmem>>, vector<8x576xf32>
    %c8_70 = arith.constant 8 : index
    %c151_71 = arith.constant 151 : index
    %89 = vector.load %arg6[%c8_70, %c151_71] : memref<32x832xf32, #tpu.memory_space<vmem>>, vector<8x576xf32>
    %c8_72 = arith.constant 8 : index
    %c152_73 = arith.constant 152 : index
    %90 = vector.load %arg6[%c8_72, %c152_73] : memref<32x832xf32, #tpu.memory_space<vmem>>, vector<8x576xf32>
    %c8_74 = arith.constant 8 : index
    %c153_75 = arith.constant 153 : index
    %91 = vector.load %arg6[%c8_74, %c153_75] : memref<32x832xf32, #tpu.memory_space<vmem>>, vector<8x576xf32>
    %92 = tpu.concatenate %83, %84, %85, %86, %87, %88, %89, %90, %91 in 0 : vector<8x576xf32>, vector<8x576xf32>, vector<8x576xf32>, vector<8x576xf32>, vector<8x576xf32>, vector<8x576xf32>, vector<8x576xf32>, vector<8x576xf32>, vector<8x576xf32> -> vector<72x576xf32>
    %c24 = arith.constant 24 : index
    %c0_76 = arith.constant 0 : index
    %93 = vector.load %arg2[%c24, %c0_76] : memref<48x72xf32, #tpu.memory_space<vmem>>, vector<8x72xf32>
    %cst_77 = arith.constant dense<0.000000e+00> : vector<8x576xf32>
    %94 = tpu.matmul %93, %92, %cst_77 {dimension_numbers = #tpu.dot_dimension_numbers<[1], [0], [0], [1], [0, 0, 1, 1], [], []>} : vector<8x72xf32>, vector<72x576xf32>, vector<8x576xf32> -> vector<8x576xf32>
    %c24_78 = arith.constant 24 : index
    %c0_79 = arith.constant 0 : index
    %95 = vector.load %arg3[%c24_78, %c0_79] : memref<48x1xf32, #tpu.memory_space<vmem>>, vector<8x1xf32>
    %96 = vector.broadcast %95 : vector<8x1xf32> to vector<8x576xf32>
    %97 = arith.addf %94, %96 : vector<8x576xf32>
    %cst_80 = arith.constant 0.000000e+00 : f32
    %98 = vector.broadcast %cst_80 : f32 to vector<8x576xf32>
    %99 = arith.maximumf %97, %98 : vector<8x576xf32>
    %c16_81 = arith.constant 16 : index
    %c78_82 = arith.constant 78 : index
    %100 = vector.load %arg6[%c16_81, %c78_82] : memref<32x832xf32, #tpu.memory_space<vmem>>, vector<8x576xf32>
    %c16_83 = arith.constant 16 : index
    %c80_84 = arith.constant 80 : index
    %101 = vector.load %arg6[%c16_83, %c80_84] : memref<32x832xf32, #tpu.memory_space<vmem>>, vector<8x576xf32>
    %c16_85 = arith.constant 16 : index
    %c82_86 = arith.constant 82 : index
    %102 = vector.load %arg6[%c16_85, %c82_86] : memref<32x832xf32, #tpu.memory_space<vmem>>, vector<8x576xf32>
    %c16_87 = arith.constant 16 : index
    %c126_88 = arith.constant 126 : index
    %103 = vector.load %arg6[%c16_87, %c126_88] : memref<32x832xf32, #tpu.memory_space<vmem>>, vector<8x576xf32>
    %c16_89 = arith.constant 16 : index
    %c128_90 = arith.constant 128 : index
    %104 = vector.load %arg6[%c16_89, %c128_90] : memref<32x832xf32, #tpu.memory_space<vmem>>, vector<8x576xf32>
    %c16_91 = arith.constant 16 : index
    %c130_92 = arith.constant 130 : index
    %105 = vector.load %arg6[%c16_91, %c130_92] : memref<32x832xf32, #tpu.memory_space<vmem>>, vector<8x576xf32>
    %c16_93 = arith.constant 16 : index
    %c174_94 = arith.constant 174 : index
    %106 = vector.load %arg6[%c16_93, %c174_94] : memref<32x832xf32, #tpu.memory_space<vmem>>, vector<8x576xf32>
    %c16_95 = arith.constant 16 : index
    %c176_96 = arith.constant 176 : index
    %107 = vector.load %arg6[%c16_95, %c176_96] : memref<32x832xf32, #tpu.memory_space<vmem>>, vector<8x576xf32>
    %c16_97 = arith.constant 16 : index
    %c178_98 = arith.constant 178 : index
    %108 = vector.load %arg6[%c16_97, %c178_98] : memref<32x832xf32, #tpu.memory_space<vmem>>, vector<8x576xf32>
    %109 = tpu.concatenate %100, %101, %102, %103, %104, %105, %106, %107, %108 in 0 : vector<8x576xf32>, vector<8x576xf32>, vector<8x576xf32>, vector<8x576xf32>, vector<8x576xf32>, vector<8x576xf32>, vector<8x576xf32>, vector<8x576xf32>, vector<8x576xf32> -> vector<72x576xf32>
    %c32 = arith.constant 32 : index
    %c0_99 = arith.constant 0 : index
    %110 = vector.load %arg2[%c32, %c0_99] : memref<48x72xf32, #tpu.memory_space<vmem>>, vector<8x72xf32>
    %cst_100 = arith.constant dense<0.000000e+00> : vector<8x576xf32>
    %111 = tpu.matmul %110, %109, %cst_100 {dimension_numbers = #tpu.dot_dimension_numbers<[1], [0], [0], [1], [0, 0, 1, 1], [], []>} : vector<8x72xf32>, vector<72x576xf32>, vector<8x576xf32> -> vector<8x576xf32>
    %c32_101 = arith.constant 32 : index
    %c0_102 = arith.constant 0 : index
    %112 = vector.load %arg3[%c32_101, %c0_102] : memref<48x1xf32, #tpu.memory_space<vmem>>, vector<8x1xf32>
    %113 = vector.broadcast %112 : vector<8x1xf32> to vector<8x576xf32>
    %114 = arith.addf %111, %113 : vector<8x576xf32>
    %cst_103 = arith.constant 0.000000e+00 : f32
    %115 = vector.broadcast %cst_103 : f32 to vector<8x576xf32>
    %116 = arith.maximumf %114, %115 : vector<8x576xf32>
    %117 = arith.addf %99, %116 : vector<8x576xf32>
    %c24_104 = arith.constant 24 : index
    %c28 = arith.constant 28 : index
    %118 = vector.load %arg6[%c24_104, %c28] : memref<32x832xf32, #tpu.memory_space<vmem>>, vector<8x576xf32>
    %c24_105 = arith.constant 24 : index
    %c32_106 = arith.constant 32 : index
    %119 = vector.load %arg6[%c24_105, %c32_106] : memref<32x832xf32, #tpu.memory_space<vmem>>, vector<8x576xf32>
    %c24_107 = arith.constant 24 : index
    %c36 = arith.constant 36 : index
    %120 = vector.load %arg6[%c24_107, %c36] : memref<32x832xf32, #tpu.memory_space<vmem>>, vector<8x576xf32>
    %c24_108 = arith.constant 24 : index
    %c124 = arith.constant 124 : index
    %121 = vector.load %arg6[%c24_108, %c124] : memref<32x832xf32, #tpu.memory_space<vmem>>, vector<8x576xf32>
    %c24_109 = arith.constant 24 : index
    %c128_110 = arith.constant 128 : index
    %122 = vector.load %arg6[%c24_109, %c128_110] : memref<32x832xf32, #tpu.memory_space<vmem>>, vector<8x576xf32>
    %c24_111 = arith.constant 24 : index
    %c132 = arith.constant 132 : index
    %123 = vector.load %arg6[%c24_111, %c132] : memref<32x832xf32, #tpu.memory_space<vmem>>, vector<8x576xf32>
    %c24_112 = arith.constant 24 : index
    %c220 = arith.constant 220 : index
    %124 = vector.load %arg6[%c24_112, %c220] : memref<32x832xf32, #tpu.memory_space<vmem>>, vector<8x576xf32>
    %c24_113 = arith.constant 24 : index
    %c224 = arith.constant 224 : index
    %125 = vector.load %arg6[%c24_113, %c224] : memref<32x832xf32, #tpu.memory_space<vmem>>, vector<8x576xf32>
    %c24_114 = arith.constant 24 : index
    %c228_115 = arith.constant 228 : index
    %126 = vector.load %arg6[%c24_114, %c228_115] : memref<32x832xf32, #tpu.memory_space<vmem>>, vector<8x576xf32>
    %127 = tpu.concatenate %118, %119, %120, %121, %122, %123, %124, %125, %126 in 0 : vector<8x576xf32>, vector<8x576xf32>, vector<8x576xf32>, vector<8x576xf32>, vector<8x576xf32>, vector<8x576xf32>, vector<8x576xf32>, vector<8x576xf32>, vector<8x576xf32> -> vector<72x576xf32>
    %c40 = arith.constant 40 : index
    %c0_116 = arith.constant 0 : index
    %128 = vector.load %arg2[%c40, %c0_116] : memref<48x72xf32, #tpu.memory_space<vmem>>, vector<8x72xf32>
    %cst_117 = arith.constant dense<0.000000e+00> : vector<8x576xf32>
    %129 = tpu.matmul %128, %127, %cst_117 {dimension_numbers = #tpu.dot_dimension_numbers<[1], [0], [0], [1], [0, 0, 1, 1], [], []>} : vector<8x72xf32>, vector<72x576xf32>, vector<8x576xf32> -> vector<8x576xf32>
    %c40_118 = arith.constant 40 : index
    %c0_119 = arith.constant 0 : index
    %130 = vector.load %arg3[%c40_118, %c0_119] : memref<48x1xf32, #tpu.memory_space<vmem>>, vector<8x1xf32>
    %131 = vector.broadcast %130 : vector<8x1xf32> to vector<8x576xf32>
    %132 = arith.addf %129, %131 : vector<8x576xf32>
    %cst_120 = arith.constant 0.000000e+00 : f32
    %133 = vector.broadcast %cst_120 : f32 to vector<8x576xf32>
    %134 = arith.maximumf %132, %133 : vector<8x576xf32>
    %135 = arith.addf %117, %134 : vector<8x576xf32>
    %136 = vector.extract_strided_slice %135 {offsets = [0, 100], sizes = [8, 16], strides = [1, 1]} : vector<8x576xf32> to vector<8x16xf32>
    %137 = vector.extract_strided_slice %135 {offsets = [0, 124], sizes = [8, 16], strides = [1, 1]} : vector<8x576xf32> to vector<8x16xf32>
    %138 = vector.extract_strided_slice %135 {offsets = [0, 148], sizes = [8, 16], strides = [1, 1]} : vector<8x576xf32> to vector<8x16xf32>
    %139 = vector.extract_strided_slice %135 {offsets = [0, 172], sizes = [8, 16], strides = [1, 1]} : vector<8x576xf32> to vector<8x16xf32>
    %140 = vector.extract_strided_slice %135 {offsets = [0, 196], sizes = [8, 16], strides = [1, 1]} : vector<8x576xf32> to vector<8x16xf32>
    %141 = vector.extract_strided_slice %135 {offsets = [0, 220], sizes = [8, 16], strides = [1, 1]} : vector<8x576xf32> to vector<8x16xf32>
    %142 = vector.extract_strided_slice %135 {offsets = [0, 244], sizes = [8, 16], strides = [1, 1]} : vector<8x576xf32> to vector<8x16xf32>
    %143 = vector.extract_strided_slice %135 {offsets = [0, 268], sizes = [8, 16], strides = [1, 1]} : vector<8x576xf32> to vector<8x16xf32>
    %144 = vector.extract_strided_slice %135 {offsets = [0, 292], sizes = [8, 16], strides = [1, 1]} : vector<8x576xf32> to vector<8x16xf32>
    %145 = vector.extract_strided_slice %135 {offsets = [0, 316], sizes = [8, 16], strides = [1, 1]} : vector<8x576xf32> to vector<8x16xf32>
    %146 = vector.extract_strided_slice %135 {offsets = [0, 340], sizes = [8, 16], strides = [1, 1]} : vector<8x576xf32> to vector<8x16xf32>
    %147 = vector.extract_strided_slice %135 {offsets = [0, 364], sizes = [8, 16], strides = [1, 1]} : vector<8x576xf32> to vector<8x16xf32>
    %148 = vector.extract_strided_slice %135 {offsets = [0, 388], sizes = [8, 16], strides = [1, 1]} : vector<8x576xf32> to vector<8x16xf32>
    %149 = vector.extract_strided_slice %135 {offsets = [0, 412], sizes = [8, 16], strides = [1, 1]} : vector<8x576xf32> to vector<8x16xf32>
    %150 = vector.extract_strided_slice %135 {offsets = [0, 436], sizes = [8, 16], strides = [1, 1]} : vector<8x576xf32> to vector<8x16xf32>
    %151 = vector.extract_strided_slice %135 {offsets = [0, 460], sizes = [8, 16], strides = [1, 1]} : vector<8x576xf32> to vector<8x16xf32>
    %152 = tpu.concatenate %136, %137, %138, %139, %140, %141, %142, %143, %144, %145, %146, %147, %148, %149, %150, %151 in 1 : vector<8x16xf32>, vector<8x16xf32>, vector<8x16xf32>, vector<8x16xf32>, vector<8x16xf32>, vector<8x16xf32>, vector<8x16xf32>, vector<8x16xf32>, vector<8x16xf32>, vector<8x16xf32>, vector<8x16xf32>, vector<8x16xf32>, vector<8x16xf32>, vector<8x16xf32>, vector<8x16xf32>, vector<8x16xf32> -> vector<8x256xf32>
    %153 = arith.addf %1, %152 : vector<8x256xf32>
    %c0_121 = arith.constant 0 : index
    %c0_122 = arith.constant 0 : index
    %c0_123 = arith.constant 0 : index
    %154 = vector.load %arg5[%c0_121, %c0_122, %c0_123] : memref<1x8x256xf32, #tpu.memory_space<vmem>>, vector<1x8x256xf32>
    %155 = vector.shape_cast %154 : vector<1x8x256xf32> to vector<8x256xf32>
    %156 = vector.shape_cast %153 : vector<8x256xf32> to vector<1x8x256xf32>
    tpu.vector_store %arg5[%c0_121, %c0_122, %c0_123], %156 {strides = array<i32>} : memref<1x8x256xf32, #tpu.memory_space<vmem>>, vector<1x8x256xf32>,
    return
  }
  func.func @transform_0(%arg0: i32) -> (i32, i32, i32) {
    %c0_i32 = arith.constant 0 : i32
    %c0_i32_0 = arith.constant 0 : i32
    %c0_i32_1 = arith.constant 0 : i32
    return %arg0, %c0_i32, %c0_i32_0 : i32, i32, i32
  }
  func.func @transform_1(%arg0: i32) -> (i32, i32) {
    %c0_i32 = arith.constant 0 : i32
    %c0_i32_0 = arith.constant 0 : i32
    %c0_i32_1 = arith.constant 0 : i32
    return %c0_i32, %c0_i32_0 : i32, i32
  }
  func.func @transform_2(%arg0: i32) -> (i32, i32) {
    %c0_i32 = arith.constant 0 : i32
    %c0_i32_0 = arith.constant 0 : i32
    %c0_i32_1 = arith.constant 0 : i32
    return %c0_i32, %c0_i32_0 : i32, i32
  }
  func.func @transform_3(%arg0: i32) -> (i32, i32) {
    %c0_i32 = arith.constant 0 : i32
    %c0_i32_0 = arith.constant 0 : i32
    %c0_i32_1 = arith.constant 0 : i32
    return %c0_i32, %c0_i32_0 : i32, i32
  }
  func.func @transform_4(%arg0: i32) -> (i32, i32, i32) {
    %c0_i32 = arith.constant 0 : i32
    %c0_i32_0 = arith.constant 0 : i32
    %c0_i32_1 = arith.constant 0 : i32
    return %arg0, %c0_i32, %c0_i32_0 : i32, i32, i32
  }
}

</mosaic_0001>

<llo_original>
// kernel: resblock.1
$region0: #{resblock.1}
  #allocation0 [shape = 'u32[]', space=smem, size = 0x4, offset = 0x4, fixed_abs, tag = 'smem constant byte address 0x4 - core index']
  #allocation1 [shape = 'u32[144,128]{1,0:T(1,128)}', space=vmem, size = 0x12000, scoped, tag = 'internal scratch']
  #allocation2 [shape = 'f32[32,832]{1,0:T(8,128)}', space=vmem, size = 0x1c000, scoped, tag = 'scratch operand']
  %s0 = inlined_call_operand.vmem [shape: f32[2,8,256], index: 0, kind: input, shape index: {}]
  %s1 = inlined_call_operand.vmem [shape: f32[48,72], index: 1, kind: input, shape index: {}]
  %s2 = inlined_call_operand.vmem [shape: f32[48,1], index: 2, kind: input, shape index: {}]
  %s3 = inlined_call_operand.vmem [shape: f32[1,576], index: 3, kind: input, shape index: {}]
  %s4 = inlined_call_operand.vmem [shape: f32[2,8,256], index: 4, kind: output, shape index: {}]
  %s5 = sld [smem:[#allocation0]]
  $region49: #{resblock.1} parent=0
    _
  %s7 = ssub.s32 1, %s5
  %s8 = scalar_select 0, %s7, %s5
  loop: start=0, step=1, limit=4
  $region2: #{resblock.1} parent=0 // loop_pre_header
    _
  $region3: #{resblock.1} parent=0 // loop_header
    %s10 = sphi 0, %s14
    %p11 = scmp.ge.s32.totalorder %s10, 4
    %s20 = sphi 0, %s22
    %s23 = sphi 0, %s20
    %s24 = sphi 0, %s23
    %s40 = sphi 0, %s24
    %s44 = sphi 0, %s44
    %s46 = sphi 0, %s44
    %s47 = sphi 0, %s46
    %s61 = sphi 0, %s47
    %s65 = sphi 0, %s65
    %s67 = sphi 0, %s65
    %s68 = sphi 0, %s67
    %s82 = sphi 0, %s68
    %s86 = sphi 0, %s86
    %s88 = sphi 0, %s86
    %s89 = sphi 0, %s88
    %s103 = sphi 0, %s89
    %s109 = sphi 0, %s111
    %s112 = sphi 0, %s109
    %s113 = sphi 0, %s112
    %s129 = sphi 0, %s113
  $region4: #{resblock.1} parent=0 // loop_header_branch
    %13 = sbr.rel (%p11) target = $region8
  $region5: #{resblock.1} parent=0 // loop_body
    %s15 = ssub.s32 %s10, 1
    %s16 = ssub.s32 %s10, 2
    %s17 = sadd.s32 %s10, 1
    %s18 = ssub.s32 %s10, %s17
    %p19 = scmp.eq.s32.totalorder %s18, 0
    %s21 = sadd.s32 %s20, 1
    %s22 = scalar_select %p19, %s20, %s21
    %p25 = pneg %p19
    %p26 = scmp.eq.s32.totalorder %s10, 1
    %p27 = por %p25, %p26
    %p28 = scmp.ne.s32.totalorder %s20, %s23
    %p29 = scmp.eq.s32.totalorder %s10, 0
    %p30 = por %p28, %p29
    %p31 = scmp.ne.s32.totalorder %s20, %s23
    %p32 = scmp.eq.s32.totalorder %s15, 1
    %p33 = por %p31, %p32
    %p34 = scmp.ne.s32.totalorder %s23, %s24
    %p35 = scmp.eq.s32.totalorder %s15, 0
    %p36 = por %p34, %p35
    %p37 = scmp.ne.s32.totalorder %s23, %s24
    %p38 = scmp.eq.s32.totalorder %s16, 1
    %p39 = por %p37, %p38
    %p41 = scmp.ne.s32.totalorder %s24, %s40
    %p42 = scmp.eq.s32.totalorder %s16, 0
    %p43 = por %p41, %p42
    %s45 = sadd.s32 %s44, 1
    %p48 = scmp.eq.s32.totalorder %s10, 1
    %p49 = scmp.ne.s32.totalorder %s44, %s46
    %p50 = scmp.eq.s32.totalorder %s10, 0
    %p51 = por %p49, %p50
    %p52 = scmp.ne.s32.totalorder %s44, %s46
    %p53 = scmp.eq.s32.totalorder %s15, 1
    %p54 = por %p52, %p53
    %p55 = scmp.ne.s32.totalorder %s46, %s47
    %p56 = scmp.eq.s32.totalorder %s15, 0
    %p57 = por %p55, %p56
    %p58 = scmp.ne.s32.totalorder %s46, %s47
    %p59 = scmp.eq.s32.totalorder %s16, 1
    %p60 = por %p58, %p59
    %p62 = scmp.ne.s32.totalorder %s47, %s61
    %p63 = scmp.eq.s32.totalorder %s16, 0
    %p64 = por %p62, %p63
    %s66 = sadd.s32 %s65, 1
    %p69 = scmp.eq.s32.totalorder %s10, 1
    %p70 = scmp.ne.s32.totalorder %s65, %s67
    %p71 = scmp.eq.s32.totalorder %s10, 0
    %p72 = por %p70, %p71
    %p73 = scmp.ne.s32.totalorder %s65, %s67
    %p74 = scmp.eq.s32.totalorder %s15, 1
    %p75 = por %p73, %p74
    %p76 = scmp.ne.s32.totalorder %s67, %s68
    %p77 = scmp.eq.s32.totalorder %s15, 0
    %p78 = por %p76, %p77
    %p79 = scmp.ne.s32.totalorder %s67, %s68
    %p80 = scmp.eq.s32.totalorder %s16, 1
    %p81 = por %p79, %p80
    %p83 = scmp.ne.s32.totalorder %s68, %s82
    %p84 = scmp.eq.s32.totalorder %s16, 0
    %p85 = por %p83, %p84
    %s87 = sadd.s32 %s86, 1
    %p90 = scmp.eq.s32.totalorder %s10, 1
    %p91 = scmp.ne.s32.totalorder %s86, %s88
    %p92 = scmp.eq.s32.totalorder %s10, 0
    %p93 = por %p91, %p92
    %p94 = scmp.ne.s32.totalorder %s86, %s88
    %p95 = scmp.eq.s32.totalorder %s15, 1
    %p96 = por %p94, %p95
    %p97 = scmp.ne.s32.totalorder %s88, %s89
    %p98 = scmp.eq.s32.totalorder %s15, 0
    %p99 = por %p97, %p98
    %p100 = scmp.ne.s32.totalorder %s88, %s89
    %p101 = scmp.eq.s32.totalorder %s16, 1
    %p102 = por %p100, %p101
    %p104 = scmp.ne.s32.totalorder %s89, %s103
    %p105 = scmp.eq.s32.totalorder %s16, 0
    %p106 = por %p104, %p105
    %s107 = ssub.s32 %s10, %s17
    %p108 = scmp.eq.s32.totalorder %s107, 0
    %s110 = sadd.s32 %s109, 1
    %s111 = scalar_select %p108, %s109, %s110
    %p114 = pneg %p108
    %p115 = scmp.eq.s32.totalorder %s10, 1
    %p116 = por %p114, %p115
    %p117 = scmp.ne.s32.totalorder %s109, %s112
    %p118 = scmp.eq.s32.totalorder %s10, 0
    %p119 = por %p117, %p118
    %p120 = scmp.ne.s32.totalorder %s109, %s112
    %p121 = scmp.eq.s32.totalorder %s15, 1
    %p122 = por %p120, %p121
    %p123 = scmp.ne.s32.totalorder %s112, %s113
    %p124 = scmp.eq.s32.totalorder %s15, 0
    %p125 = por %p123, %p124
    %p126 = scmp.ne.s32.totalorder %s112, %s113
    %p127 = scmp.eq.s32.totalorder %s16, 1
    %p128 = por %p126, %p127
    %p130 = scmp.ne.s32.totalorder %s113, %s129
    %p131 = scmp.eq.s32.totalorder %s16, 0
    %p132 = por %p130, %p131
    %p133 = scmp.le.s32.totalorder 1, %s10
    %p134 = scmp.lt.s32.totalorder %s10, 3
    %p135 = pnand %p133, %p134
    %p136 = pneg %p135
    // Predicated region
    $region9: #{resblock.1} parent=5 // pred_check
      _
    $region10: #{resblock.1} parent=5 // pred_check_branch
      %138 = sbr.rel (%p135) target = $region12
    $region11: #{resblock.1} parent=5 // pred_region
      %s139 = ssub.s32 %s10, 1
      // Predicated region
      $region13: #{resblock.1} parent=11 // pred_check
        %p140 = pneg %p57
      $region14: #{resblock.1} parent=11 // pred_check_branch
        %142 = sbr.rel (%p140) target = $region16
      $region15: #{resblock.1} parent=11 // pred_region
        _
      $region16: #{resblock.1} parent=11 // pred_fallthru
        _
      // Predicated region
      $region17: #{resblock.1} parent=11 // pred_check
        %p143 = pneg %p78
      $region18: #{resblock.1} parent=11 // pred_check_branch
        %145 = sbr.rel (%p143) target = $region20
      $region19: #{resblock.1} parent=11 // pred_region
        _
      $region20: #{resblock.1} parent=11 // pred_fallthru
        _
      // Predicated region
      $region21: #{resblock.1} parent=11 // pred_check
        %p146 = pneg %p99
      $region22: #{resblock.1} parent=11 // pred_check_branch
        %148 = sbr.rel (%p146) target = $region24
      $region23: #{resblock.1} parent=11 // pred_region
        _
      $region24: #{resblock.1} parent=11 // pred_fallthru
        _
    $region12: #{resblock.1} parent=5 // pred_fallthru
      _
    %p149 = scmp.lt.s32.totalorder %s10, 2
    // Predicated region
    $region25: #{resblock.1} parent=5 // pred_check
      %p150 = pneg %p149
    $region26: #{resblock.1} parent=5 // pred_check_branch
      %152 = sbr.rel (%p150) target = $region28
    $region27: #{resblock.1} parent=5 // pred_region
      // Predicated region
      $region29: #{resblock.1} parent=27 // pred_check
        %p153 = pneg %p30
      $region30: #{resblock.1} parent=27 // pred_check_branch
        %155 = sbr.rel (%p153) target = $region32
      $region31: #{resblock.1} parent=27 // pred_region
        %p156 = scmp.lt.s32.totalorder %s10, 1
        %s157 = scalar_select %p156, %s10, 1
        %s158 = smul.addr %s157, 2
        %s159 = smul.addr %s158, 8
        %s160 = scalar_lea.vmem %s0, %s159
      $region32: #{resblock.1} parent=27 // pred_fallthru
        _
    $region28: #{resblock.1} parent=5 // pred_fallthru
      _
    %p161 = scmp.le.s32.totalorder 1, %s10
    %p162 = scmp.lt.s32.totalorder %s10, 3
    %p163 = pnand %p161, %p162
    %p164 = pneg %p163
    // Predicated region
    $region33: #{resblock.1} parent=5 // pred_check
      _
    $region34: #{resblock.1} parent=5 // pred_check_branch
      %166 = sbr.rel (%p163) target = $region36
    $region35: #{resblock.1} parent=5 // pred_region
      %s167 = ssub.s32 %s10, 1
      %p168 = scmp.lt.s32.totalorder %s15, 1
      %s169 = scalar_select %p168, %s15, 1
      %s170 = smul.addr %s169, 2
      %s171 = smul.addr %s170, 8
      %s172 = scalar_lea.vmem %s0, %s171
      %p173 = pneg %p36
      %p174 = pneg %p33
      %p175 = pneg %p57
      %p176 = pneg %p54
      %p177 = pneg %p78
      %p178 = pneg %p75
      %p179 = pneg %p99
      %p180 = pneg %p96
      %p181 = pneg %p125
      %p182 = pneg %p122
      %p183 = scmp.lt.s32.totalorder %s15, 1
      %s184 = scalar_select %p183, %s15, 1
      %s185 = smul.addr %s184, 2
      %s186 = smul.addr %s185, 8
      %s187 = scalar_lea.vmem %s4, %s186
      %p188 = scmp.lt.s32.totalorder %s15, 1
      %s189 = scalar_select %p188, %s15, 1
      %s190 = smul.addr %s189, 2
      %s191 = smul.addr %s190, 8
      %s192 = scalar_lea.vmem %s0, %s191
      %p193 = scmp.lt.s32.totalorder %s15, 1
      %s194 = scalar_select %p193, %s15, 1
      %s195 = smul.addr %s194, 2
      %s196 = smul.addr %s195, 8
      %s197 = scalar_lea.vmem %s4, %s196
      %v198 = vld [vmem:[%s192] sm:$0xff]
      %v199 = vld [vmem:[%s192 + $0x8] sm:$0xff]
      %200 = vst [vmem:[#allocation2 + $0x8] sm:$0xff] 0.0
      %201 = vst [vmem:[#allocation2 + $0x10] sm:$0xff] 0.0
      %202 = vst [vmem:[#allocation2 + $0x18] sm:$0xff] 0.0
      %203 = vst [vmem:[#allocation2 + $0x20] sm:$0xff] 0.0
      %vm204 = vcmask 523264
      %205 = vst.msk [vmem:[#allocation2 + $0x28] sm:$0xff] %vm204, 0.0
      %207 = vrot.lane.b32.xlu0 %v198, 100
      %v208 = vpop.permute.xlu0 %207
      %vm210 = vcmask 950048
      %211 = vst.msk [vmem:[#allocation2 + $0x8] sm:$0xff] %vm210, %v208
      %212 = vrot.lane.b32.xlu0 %v198, 108
      %v213 = vpop.permute.xlu0 %212
      %vm215 = vcmask 1048544
      %216 = vst.msk [vmem:[#allocation2 + $0x8] sm:$0xff] %vm215, %v213
      %vm217 = vcmask 97280
      %218 = vst.msk [vmem:[#allocation2 + $0x10] sm:$0xff] %vm217, %v213
      %219 = vrot.lane.b32.xlu0 %v198, 116
      %v220 = vpop.permute.xlu0 %219
      %vm222 = vcmask 294048
      %223 = vst.msk [vmem:[#allocation2 + $0x10] sm:$0xff] %vm222, %v220
      %224 = vrot.lane.b32.xlu0 %v198, 124
      %v225 = vpop.permute.xlu0 %224
      %vm227 = vcmask 490848
      %228 = vst.msk [vmem:[#allocation2 + $0x10] sm:$0xff] %vm227, %v225
      %229 = vrot.lane.b32.xlu0 %v198, 4
      %v230 = vpop.permute.xlu0 %229
      %vm232 = vcmask 687648
      %233 = vst.msk [vmem:[#allocation2 + $0x10] sm:$0xff] %vm232, %v230
      %234 = vrot.lane.b32.xlu0 %v198, 12
      %v235 = vpop.permute.xlu0 %234
      %vm237 = vcmask 884448
      %238 = vst.msk [vmem:[#allocation2 + $0x10] sm:$0xff] %vm237, %v235
      %239 = vrot.lane.b32.xlu0 %v198, 20
      %v240 = vpop.permute.xlu0 %239
      %vm242 = vcmask 1048480
      %243 = vst.msk [vmem:[#allocation2 + $0x10] sm:$0xff] %vm242, %v240
      %vm244 = vcmask 31744
      %245 = vst.msk [vmem:[#allocation2 + $0x18] sm:$0xff] %vm244, %v240
      %246 = vrot.lane.b32.xlu0 %v198, 28
      %v247 = vpop.permute.xlu0 %246
      %vm249 = vcmask 228448
      %250 = vst.msk [vmem:[#allocation2 + $0x18] sm:$0xff] %vm249, %v247
      %252 = vrot.lane.b32.xlu0 %v199, 36
      %v253 = vpop.permute.xlu0 %252
      %vm255 = vcmask 425248
      %256 = vst.msk [vmem:[#allocation2 + $0x18] sm:$0xff] %vm255, %v253
      %257 = vrot.lane.b32.xlu0 %v199, 44
      %v258 = vpop.permute.xlu0 %257
      %vm260 = vcmask 622048
      %261 = vst.msk [vmem:[#allocation2 + $0x18] sm:$0xff] %vm260, %v258
      %262 = vrot.lane.b32.xlu0 %v199, 52
      %v263 = vpop.permute.xlu0 %262
      %vm265 = vcmask 818848
      %266 = vst.msk [vmem:[#allocation2 + $0x18] sm:$0xff] %vm265, %v263
      %267 = vrot.lane.b32.xlu0 %v199, 60
      %v268 = vpop.permute.xlu0 %267
      %vm270 = vcmask 1015648
      %271 = vst.msk [vmem:[#allocation2 + $0x18] sm:$0xff] %vm270, %v268
      %272 = vrot.lane.b32.xlu0 %v199, 68
      %v273 = vpop.permute.xlu0 %272
      %vm275 = vcmask 162848
      %276 = vst.msk [vmem:[#allocation2 + $0x20] sm:$0xff] %vm275, %v273
      %277 = vrot.lane.b32.xlu0 %v199, 76
      %v278 = vpop.permute.xlu0 %277
      %vm280 = vcmask 359648
      %281 = vst.msk [vmem:[#allocation2 + $0x20] sm:$0xff] %vm280, %v278
      %282 = vrot.lane.b32.xlu0 %v199, 84
      %v283 = vpop.permute.xlu0 %282
      %vm285 = vcmask 556448
      %286 = vst.msk [vmem:[#allocation2 + $0x20] sm:$0xff] %vm285, %v283
      %287 = vrot.lane.b32.xlu0 %v199, 92
      %v288 = vpop.permute.xlu0 %287
      %vm290 = vcmask 753248
      %291 = vst.msk [vmem:[#allocation2 + $0x20] sm:$0xff] %vm290, %v288
      %v292 = vld [vmem:[%s3] sm:$0x1f]
      %vm293 = vcmp.ne.f32.partialorder %v292, 0.0
      %v294 = vld [vmem:[#allocation2] sm:$0xff]
      %v295 = vld [vmem:[#allocation2 + $0x8] sm:$0xff]
      %v296 = vld [vmem:[#allocation2 + $0x10] sm:$0xff]
      %v297 = vld [vmem:[#allocation2 + $0x18] sm:$0xff]
      %v298 = vld [vmem:[#allocation2 + $0x20] sm:$0xff]
      %v299 = vld [vmem:[#allocation2 + $0x28] sm:$0xff]
      %306 = vrot.lane.b32.xlu0 %v294, 127
      %v307 = vpop.permute.xlu0 %306
      %308 = vrot.lane.b32.xlu0 %v295, 127
      %v309 = vpop.permute.xlu0 %308
      %310 = vrot.lane.b32.xlu0 %v296, 127
      %v311 = vpop.permute.xlu0 %310
      %312 = vrot.lane.b32.xlu0 %v297, 127
      %v313 = vpop.permute.xlu0 %312
      %314 = vrot.lane.b32.xlu0 %v298, 127
      %v315 = vpop.permute.xlu0 %314
      %316 = vrot.lane.b32.xlu0 %v299, 127
      %v317 = vpop.permute.xlu0 %316
      %vm318 = vcmask 1039360
      %v319 = vsel %vm318, %v307, %v309
      %v320 = vsel %vm318, %v309, %v311
      %v321 = vsel %vm318, %v311, %v313
      %v322 = vsel %vm318, %v313, %v315
      %v323 = vsel %vm318, %v315, %v317
      %324 = vrot.lane.b32.xlu0 %v294, 126
      %v325 = vpop.permute.xlu0 %324
      %326 = vrot.lane.b32.xlu0 %v295, 126
      %v327 = vpop.permute.xlu0 %326
      %328 = vrot.lane.b32.xlu0 %v296, 126
      %v329 = vpop.permute.xlu0 %328
      %330 = vrot.lane.b32.xlu0 %v297, 126
      %v331 = vpop.permute.xlu0 %330
      %332 = vrot.lane.b32.xlu0 %v298, 126
      %v333 = vpop.permute.xlu0 %332
      %334 = vrot.lane.b32.xlu0 %v299, 126
      %v335 = vpop.permute.xlu0 %334
      %vm336 = vcmask 1031168
      %v337 = vsel %vm336, %v325, %v327
      %v338 = vsel %vm336, %v327, %v329
      %v339 = vsel %vm336, %v329, %v331
      %v340 = vsel %vm336, %v331, %v333
      %v341 = vsel %vm336, %v333, %v335
      %342 = vrot.lane.b32.xlu0 %v294, 104
      %v343 = vpop.permute.xlu0 %342
      %344 = vrot.lane.b32.xlu0 %v295, 104
      %v345 = vpop.permute.xlu0 %344
      %346 = vrot.lane.b32.xlu0 %v296, 104
      %v347 = vpop.permute.xlu0 %346
      %348 = vrot.lane.b32.xlu0 %v297, 104
      %v349 = vpop.permute.xlu0 %348
      %350 = vrot.lane.b32.xlu0 %v298, 104
      %v351 = vpop.permute.xlu0 %350
      %352 = vrot.lane.b32.xlu0 %v299, 104
      %v353 = vpop.permute.xlu0 %352
      %vm354 = vcmask 850944
      %v355 = vsel %vm354, %v343, %v345
      %v356 = vsel %vm354, %v345, %v347
      %v357 = vsel %vm354, %v347, %v349
      %v358 = vsel %vm354, %v349, %v351
      %v359 = vsel %vm354, %v351, %v353
      %360 = vrot.lane.b32.xlu0 %v295, 103
      %v361 = vpop.permute.xlu0 %360
      %362 = vrot.lane.b32.xlu0 %v296, 103
      %v363 = vpop.permute.xlu0 %362
      %364 = vrot.lane.b32.xlu0 %v297, 103
      %v365 = vpop.permute.xlu0 %364
      %366 = vrot.lane.b32.xlu0 %v298, 103
      %v367 = vpop.permute.xlu0 %366
      %368 = vrot.lane.b32.xlu0 %v299, 103
      %v369 = vpop.permute.xlu0 %368
      %vm370 = vcmask 842752
      %v371 = vsel %vm370, %v361, %v363
      %v372 = vsel %vm370, %v363, %v365
      %v373 = vsel %vm370, %v365, %v367
      %v374 = vsel %vm370, %v367, %v369
      %375 = vrot.lane.b32.xlu0 %v295, 102
      %v376 = vpop.permute.xlu0 %375
      %377 = vrot.lane.b32.xlu0 %v296, 102
      %v378 = vpop.permute.xlu0 %377
      %379 = vrot.lane.b32.xlu0 %v297, 102
      %v380 = vpop.permute.xlu0 %379
      %381 = vrot.lane.b32.xlu0 %v298, 102
      %v382 = vpop.permute.xlu0 %381
      %383 = vrot.lane.b32.xlu0 %v299, 102
      %v384 = vpop.permute.xlu0 %383
      %vm385 = vcmask 834560
      %v386 = vsel %vm385, %v376, %v378
      %v387 = vsel %vm385, %v378, %v380
      %v388 = vsel %vm385, %v380, %v382
      %v389 = vsel %vm385, %v382, %v384
      %390 = vrot.lane.b32.xlu0 %v295, 80
      %v391 = vpop.permute.xlu0 %390
      %392 = vrot.lane.b32.xlu0 %v296, 80
      %v393 = vpop.permute.xlu0 %392
      %394 = vrot.lane.b32.xlu0 %v297, 80
      %v395 = vpop.permute.xlu0 %394
      %396 = vrot.lane.b32.xlu0 %v298, 80
      %v397 = vpop.permute.xlu0 %396
      %398 = vrot.lane.b32.xlu0 %v299, 80
      %v399 = vpop.permute.xlu0 %398
      %vm400 = vcmask 654336
      %v401 = vsel %vm400, %v391, %v393
      %v402 = vsel %vm400, %v393, %v395
      %v403 = vsel %vm400, %v395, %v397
      %v404 = vsel %vm400, %v397, %v399
      %405 = vrot.lane.b32.xlu0 %v295, 79
      %v406 = vpop.permute.xlu0 %405
      %407 = vrot.lane.b32.xlu0 %v296, 79
      %v408 = vpop.permute.xlu0 %407
      %409 = vrot.lane.b32.xlu0 %v297, 79
      %v410 = vpop.permute.xlu0 %409
      %411 = vrot.lane.b32.xlu0 %v298, 79
      %v412 = vpop.permute.xlu0 %411
      %413 = vrot.lane.b32.xlu0 %v299, 79
      %v414 = vpop.permute.xlu0 %413
      %vm415 = vcmask 646144
      %v416 = vsel %vm415, %v406, %v408
      %v417 = vsel %vm415, %v408, %v410
      %v418 = vsel %vm415, %v410, %v412
      %v419 = vsel %vm415, %v412, %v414
      %420 = vrot.lane.b32.xlu0 %v295, 78
      %v421 = vpop.permute.xlu0 %420
      %422 = vrot.lane.b32.xlu0 %v296, 78
      %v423 = vpop.permute.xlu0 %422
      %424 = vrot.lane.b32.xlu0 %v297, 78
      %v425 = vpop.permute.xlu0 %424
      %426 = vrot.lane.b32.xlu0 %v298, 78
      %v427 = vpop.permute.xlu0 %426
      %428 = vrot.lane.b32.xlu0 %v299, 78
      %v429 = vpop.permute.xlu0 %428
      %vm430 = vcmask 637952
      %v431 = vsel %vm430, %v421, %v423
      %v432 = vsel %vm430, %v423, %v425
      %v433 = vsel %vm430, %v425, %v427
      %v434 = vsel %vm430, %v427, %v429
      %v435 = vld [vmem:[%s1] sm:$0xff]
      %v436 = vld [vmem:[%s2] sm:$0xff]
      %438 = vset.pattern.permute.xlu0 0
      %439 = vperm.xlu0 %438, %v436
      %v440 = vpop.permute.xlu0 %439
      %442 = vrot.lane.b32.xlu0 %v294, 25
      %v443 = vpop.permute.xlu0 %442
      %444 = vrot.lane.b32.xlu0 %v295, 25
      %v445 = vpop.permute.xlu0 %444
      %446 = vrot.lane.b32.xlu0 %v296, 25
      %v447 = vpop.permute.xlu0 %446
      %448 = vrot.lane.b32.xlu0 %v297, 25
      %v449 = vpop.permute.xlu0 %448
      %450 = vrot.lane.b32.xlu0 %v298, 25
      %v451 = vpop.permute.xlu0 %450
      %452 = vrot.lane.b32.xlu0 %v299, 25
      %v453 = vpop.permute.xlu0 %452
      %454 = vrot.lane.b32.xlu0 %v319, 25
      %v455 = vpop.permute.xlu0 %454
      %456 = vrot.lane.b32.xlu0 %v320, 25
      %v457 = vpop.permute.xlu0 %456
      %458 = vrot.lane.b32.xlu0 %v321, 25
      %v459 = vpop.permute.xlu0 %458
      %460 = vrot.lane.b32.xlu0 %v322, 25
      %v461 = vpop.permute.xlu0 %460
      %462 = vrot.lane.b32.xlu0 %v323, 25
      %v463 = vpop.permute.xlu0 %462
      %464 = vrot.lane.b32.xlu0 %v317, 25
      %v465 = vpop.permute.xlu0 %464
      %466 = vrot.lane.b32.xlu0 %v337, 25
      %v467 = vpop.permute.xlu0 %466
      %468 = vrot.lane.b32.xlu0 %v338, 25
      %v469 = vpop.permute.xlu0 %468
      %470 = vrot.lane.b32.xlu0 %v339, 25
      %v471 = vpop.permute.xlu0 %470
      %472 = vrot.lane.b32.xlu0 %v340, 25
      %v473 = vpop.permute.xlu0 %472
      %474 = vrot.lane.b32.xlu0 %v341, 25
      %v475 = vpop.permute.xlu0 %474
      %476 = vrot.lane.b32.xlu0 %v335, 25
      %v477 = vpop.permute.xlu0 %476
      %478 = vrot.lane.b32.xlu0 %v355, 25
      %v479 = vpop.permute.xlu0 %478
      %480 = vrot.lane.b32.xlu0 %v356, 25
      %v481 = vpop.permute.xlu0 %480
      %482 = vrot.lane.b32.xlu0 %v357, 25
      %v483 = vpop.permute.xlu0 %482
      %484 = vrot.lane.b32.xlu0 %v358, 25
      %v485 = vpop.permute.xlu0 %484
      %486 = vrot.lane.b32.xlu0 %v359, 25
      %v487 = vpop.permute.xlu0 %486
      %488 = vrot.lane.b32.xlu0 %v353, 25
      %v489 = vpop.permute.xlu0 %488
      %490 = vrot.lane.b32.xlu0 %v361, 25
      %v491 = vpop.permute.xlu0 %490
      %492 = vrot.lane.b32.xlu0 %v371, 25
      %v493 = vpop.permute.xlu0 %492
      %494 = vrot.lane.b32.xlu0 %v372, 25
      %v495 = vpop.permute.xlu0 %494
      %496 = vrot.lane.b32.xlu0 %v373, 25
      %v497 = vpop.permute.xlu0 %496
      %498 = vrot.lane.b32.xlu0 %v374, 25
      %v499 = vpop.permute.xlu0 %498
      %500 = vrot.lane.b32.xlu0 %v369, 25
      %v501 = vpop.permute.xlu0 %500
      %502 = vrot.lane.b32.xlu0 %v376, 25
      %v503 = vpop.permute.xlu0 %502
      %504 = vrot.lane.b32.xlu0 %v386, 25
      %v505 = vpop.permute.xlu0 %504
      %506 = vrot.lane.b32.xlu0 %v387, 25
      %v507 = vpop.permute.xlu0 %506
      %508 = vrot.lane.b32.xlu0 %v388, 25
      %v509 = vpop.permute.xlu0 %508
      %510 = vrot.lane.b32.xlu0 %v389, 25
      %v511 = vpop.permute.xlu0 %510
      %512 = vrot.lane.b32.xlu0 %v384, 25
      %v513 = vpop.permute.xlu0 %512
      %514 = vrot.lane.b32.xlu0 %v391, 25
      %v515 = vpop.permute.xlu0 %514
      %516 = vrot.lane.b32.xlu0 %v401, 25
      %v517 = vpop.permute.xlu0 %516
      %518 = vrot.lane.b32.xlu0 %v402, 25
      %v519 = vpop.permute.xlu0 %518
      %520 = vrot.lane.b32.xlu0 %v403, 25
      %v521 = vpop.permute.xlu0 %520
      %522 = vrot.lane.b32.xlu0 %v404, 25
      %v523 = vpop.permute.xlu0 %522
      %524 = vrot.lane.b32.xlu0 %v399, 25
      %v525 = vpop.permute.xlu0 %524
      %526 = vrot.lane.b32.xlu0 %v406, 25
      %v527 = vpop.permute.xlu0 %526
      %528 = vrot.lane.b32.xlu0 %v416, 25
      %v529 = vpop.permute.xlu0 %528
      %530 = vrot.lane.b32.xlu0 %v417, 25
      %v531 = vpop.permute.xlu0 %530
      %532 = vrot.lane.b32.xlu0 %v418, 25
      %v533 = vpop.permute.xlu0 %532
      %534 = vrot.lane.b32.xlu0 %v419, 25
      %v535 = vpop.permute.xlu0 %534
      %536 = vrot.lane.b32.xlu0 %v414, 25
      %v537 = vpop.permute.xlu0 %536
      %538 = vrot.lane.b32.xlu0 %v421, 25
      %v539 = vpop.permute.xlu0 %538
      %540 = vrot.lane.b32.xlu0 %v431, 25
      %v541 = vpop.permute.xlu0 %540
      %542 = vrot.lane.b32.xlu0 %v432, 25
      %v543 = vpop.permute.xlu0 %542
      %544 = vrot.lane.b32.xlu0 %v433, 25
      %v545 = vpop.permute.xlu0 %544
      %546 = vrot.lane.b32.xlu0 %v434, 25
      %v547 = vpop.permute.xlu0 %546
      %548 = vrot.lane.b32.xlu0 %v429, 25
      %v549 = vpop.permute.xlu0 %548
      %vm550 = vcmask 203776
      %v551 = vsel %vm550, %v443, %v445
      %v552 = vsel %vm550, %v445, %v447
      %v553 = vsel %vm550, %v447, %v449
      %v554 = vsel %vm550, %v449, %v451
      %v555 = vsel %vm550, %v451, %v453
      %v556 = vsel %vm550, %v455, %v457
      %v557 = vsel %vm550, %v457, %v459
      %v558 = vsel %vm550, %v459, %v461
      %v559 = vsel %vm550, %v461, %v463
      %v560 = vsel %vm550, %v463, %v465
      %v561 = vsel %vm550, %v467, %v469
      %v562 = vsel %vm550, %v469, %v471
      %v563 = vsel %vm550, %v471, %v473
      %v564 = vsel %vm550, %v473, %v475
      %v565 = vsel %vm550, %v475, %v477
      %v566 = vsel %vm550, %v479, %v481
      %v567 = vsel %vm550, %v481, %v483
      %v568 = vsel %vm550, %v483, %v485
      %v569 = vsel %vm550, %v485, %v487
      %v570 = vsel %vm550, %v487, %v489
      %v571 = vsel %vm550, %v491, %v493
      %v572 = vsel %vm550, %v493, %v495
      %v573 = vsel %vm550, %v495, %v497
      %v574 = vsel %vm550, %v497, %v499
      %v575 = vsel %vm550, %v499, %v501
      %v576 = vsel %vm550, %v503, %v505
      %v577 = vsel %vm550, %v505, %v507
      %v578 = vsel %vm550, %v507, %v509
      %v579 = vsel %vm550, %v509, %v511
      %v580 = vsel %vm550, %v511, %v513
      %v581 = vsel %vm550, %v515, %v517
      %v582 = vsel %vm550, %v517, %v519
      %v583 = vsel %vm550, %v519, %v521
      %v584 = vsel %vm550, %v521, %v523
      %v585 = vsel %vm550, %v523, %v525
      %v586 = vsel %vm550, %v527, %v529
      %v587 = vsel %vm550, %v529, %v531
      %v588 = vsel %vm550, %v531, %v533
      %v589 = vsel %vm550, %v533, %v535
      %v590 = vsel %vm550, %v535, %v537
      %v591 = vsel %vm550, %v539, %v541
      %v592 = vsel %vm550, %v541, %v543
      %v593 = vsel %vm550, %v543, %v545
      %v594 = vsel %vm550, %v545, %v547
      %v595 = vsel %vm550, %v547, %v549
      %vm641 = vcmask 588800
      %v643 = vsel %vm641, %v435, 0
      %645 = vmatprep.subr.mxu0 0.0
      %646 = vmatpush1.msra.mxu0 0.0
      %647 = vmatprep.subr.mxu0 0.0
      %648 = vmatpush1.msra.mxu0 0.0
      %649 = vmatprep.subr.mxu0 0.0
      %650 = vmatpush1.msra.mxu0 0.0
      %651 = vmatprep.subr.mxu0 0.0
      %652 = vmatpush1.msra.mxu0 0.0
      %653 = vmatprep.subr.mxu0 0.0
      %654 = vmatpush1.msra.mxu0 0.0
      %655 = vmatprep.subr.mxu0 0.0
      %656 = vmatpush1.msra.mxu0 0.0
      %657 = vmatprep.subr.mxu0 0.0
      %658 = vmatpush1.msra.mxu0 0.0
      %659 = vmatprep.subr.mxu0 %v592
      %660 = vmatpush1.msra.mxu0 %v591
      %661 = vmatprep.subr.mxu0 %v587
      %662 = vmatpush1.msra.mxu0 %v586
      %663 = vmatprep.subr.mxu0 %v582
      %664 = vmatpush1.msra.mxu0 %v581
      %665 = vmatprep.subr.mxu0 %v577
      %666 = vmatpush1.msra.mxu0 %v576
      %667 = vmatprep.subr.mxu0 %v572
      %668 = vmatpush1.msra.mxu0 %v571
      %669 = vmatprep.subr.mxu0 %v567
      %670 = vmatpush1.msra.mxu0 %v566
      %671 = vmatprep.subr.mxu0 %v562
      %672 = vmatpush1.msra.mxu0 %v561
      %673 = vmatprep.subr.mxu0 %v557
      %674 = vmatpush1.msra.mxu0 %v556
      %675 = vmatprep.subr.mxu0 %v552
      %676 = vmatpush1.msra.mxu0 %v551
      %677 = vmatprep.subr.mxu0 0.0
      %678 = vmatpush2.msra.mxu0 0.0
      %679 = vmatprep.subr.mxu0 0.0
      %680 = vmatpush2.msra.mxu0 0.0
      %681 = vmatprep.subr.mxu0 0.0
      %682 = vmatpush2.msra.mxu0 0.0
      %683 = vmatprep.subr.mxu0 0.0
      %684 = vmatpush2.msra.mxu0 0.0
      %685 = vmatprep.subr.mxu0 0.0
      %686 = vmatpush2.msra.mxu0 0.0
      %687 = vmatprep.subr.mxu0 0.0
      %688 = vmatpush2.msra.mxu0 0.0
      %689 = vmatprep.subr.mxu0 0.0
      %690 = vmatpush2.msra.mxu0 0.0
      %691 = vmatprep.subr.mxu0 0.0
      %692 = vmatpush2.msra.mxu0 0.0
      %693 = vmatprep.subr.mxu0 0.0
      %694 = vmatpush2.msra.mxu0 0.0
      %695 = vmatprep.subr.mxu0 0.0
      %696 = vmatpush2.msra.mxu0 0.0
      %697 = vmatprep.subr.mxu0 0.0
      %698 = vmatpush2.msra.mxu0 0.0
      %699 = vmatprep.subr.mxu0 0.0
      %700 = vmatpush2.msra.mxu0 0.0
      %701 = vmatprep.subr.mxu0 0.0
      %702 = vmatpush2.msra.mxu0 0.0
      %703 = vmatprep.subr.mxu0 0.0
      %704 = vmatpush2.msra.mxu0 0.0
      %705 = vmatprep.subr.mxu0 0.0
      %706 = vmatpush2.msra.mxu0 0.0
      %707 = vmatprep.subr.mxu0 0.0
      %708 = vmatpush2.msra.mxu0 0.0
      %709 = vmatprep.mubr.f32.mxu0 0.0
      %710 = vmatmul.mubr.f32.gmra.mxu0 %v643
      %v711 = vpop.f32.mrf.mxu0
      %v712 = vadd.f32 %v440, %v711
      %v713 = vpop.f32.mrf.mxu0
      %v714 = vadd.f32 %v440, %v713
      %715 = vdwg.mxu0
      %716 = vmatprep.subr.mxu0 0.0
      %717 = vmatpush1.msra.mxu0 0.0
      %718 = vmatprep.subr.mxu0 0.0
      %719 = vmatpush1.msra.mxu0 0.0
      %720 = vmatprep.subr.mxu0 0.0
      %721 = vmatpush1.msra.mxu0 0.0
      %722 = vmatprep.subr.mxu0 0.0
      %723 = vmatpush1.msra.mxu0 0.0
      %724 = vmatprep.subr.mxu0 0.0
      %725 = vmatpush1.msra.mxu0 0.0
      %726 = vmatprep.subr.mxu0 0.0
      %727 = vmatpush1.msra.mxu0 0.0
      %728 = vmatprep.subr.mxu0 0.0
      %729 = vmatpush1.msra.mxu0 0.0
      %730 = vmatprep.subr.mxu0 %v594
      %731 = vmatpush1.msra.mxu0 %v593
      %732 = vmatprep.subr.mxu0 %v589
      %733 = vmatpush1.msra.mxu0 %v588
      %734 = vmatprep.subr.mxu0 %v584
      %735 = vmatpush1.msra.mxu0 %v583
      %736 = vmatprep.subr.mxu0 %v579
      %737 = vmatpush1.msra.mxu0 %v578
      %738 = vmatprep.subr.mxu0 %v574
      %739 = vmatpush1.msra.mxu0 %v573
      %740 = vmatprep.subr.mxu0 %v569
      %741 = vmatpush1.msra.mxu0 %v568
      %742 = vmatprep.subr.mxu0 %v564
      %743 = vmatpush1.msra.mxu0 %v563
      %744 = vmatprep.subr.mxu0 %v559
      %745 = vmatpush1.msra.mxu0 %v558
      %746 = vmatprep.subr.mxu0 %v554
      %747 = vmatpush1.msra.mxu0 %v553
      %748 = vmatprep.subr.mxu0 0.0
      %749 = vmatpush2.msra.mxu0 0.0
      %750 = vmatprep.subr.mxu0 0.0
      %751 = vmatpush2.msra.mxu0 0.0
      %752 = vmatprep.subr.mxu0 0.0
      %753 = vmatpush2.msra.mxu0 0.0
      %754 = vmatprep.subr.mxu0 0.0
      %755 = vmatpush2.msra.mxu0 0.0
      %756 = vmatprep.subr.mxu0 0.0
      %757 = vmatpush2.msra.mxu0 0.0
      %758 = vmatprep.subr.mxu0 0.0
      %759 = vmatpush2.msra.mxu0 0.0
      %760 = vmatprep.subr.mxu0 0.0
      %761 = vmatpush2.msra.mxu0 0.0
      %762 = vmatprep.subr.mxu0 0.0
      %763 = vmatpush2.msra.mxu0 0.0
      %764 = vmatprep.subr.mxu0 0.0
      %765 = vmatpush2.msra.mxu0 0.0
      %766 = vmatprep.subr.mxu0 0.0
      %767 = vmatpush2.msra.mxu0 0.0
      %768 = vmatprep.subr.mxu0 0.0
      %769 = vmatpush2.msra.mxu0 0.0
      %770 = vmatprep.subr.mxu0 0.0
      %771 = vmatpush2.msra.mxu0 0.0
      %772 = vmatprep.subr.mxu0 0.0
      %773 = vmatpush2.msra.mxu0 0.0
      %774 = vmatprep.subr.mxu0 0.0
      %775 = vmatpush2.msra.mxu0 0.0
      %776 = vmatprep.subr.mxu0 0.0
      %777 = vmatpush2.msra.mxu0 0.0
      %778 = vmatprep.subr.mxu0 0.0
      %779 = vmatpush2.msra.mxu0 0.0
      %780 = vmatprep.mubr.f32.mxu0 0.0
      %781 = vmatmul.mubr.f32.gmra.mxu0 %v643
      %v782 = vpop.f32.mrf.mxu0
      %v783 = vadd.f32 %v440, %v782
      %v784 = vpop.f32.mrf.mxu0
      %v785 = vadd.f32 %v440, %v784
      %786 = vdwg.mxu0
      %787 = vmatprep.subr.mxu0 0.0
      %788 = vmatpush1.msra.mxu0 0.0
      %789 = vmatprep.subr.mxu0 0.0
      %790 = vmatpush1.msra.mxu0 0.0
      %791 = vmatprep.subr.mxu0 0.0
      %792 = vmatpush1.msra.mxu0 0.0
      %793 = vmatprep.subr.mxu0 0.0
      %794 = vmatpush1.msra.mxu0 0.0
      %795 = vmatprep.subr.mxu0 0.0
      %796 = vmatpush1.msra.mxu0 0.0
      %797 = vmatprep.subr.mxu0 0.0
      %798 = vmatpush1.msra.mxu0 0.0
      %799 = vmatprep.subr.mxu0 0.0
      %800 = vmatpush1.msra.mxu0 0.0
      %801 = vmatprep.subr.mxu0 0.0
      %802 = vmatpush1.msra.mxu0 %v595
      %803 = vmatprep.subr.mxu0 0.0
      %804 = vmatpush1.msra.mxu0 %v590
      %805 = vmatprep.subr.mxu0 0.0
      %806 = vmatpush1.msra.mxu0 %v585
      %807 = vmatprep.subr.mxu0 0.0
      %808 = vmatpush1.msra.mxu0 %v580
      %809 = vmatprep.subr.mxu0 0.0
      %810 = vmatpush1.msra.mxu0 %v575
      %811 = vmatprep.subr.mxu0 0.0
      %812 = vmatpush1.msra.mxu0 %v570
      %813 = vmatprep.subr.mxu0 0.0
      %814 = vmatpush1.msra.mxu0 %v565
      %815 = vmatprep.subr.mxu0 0.0
      %816 = vmatpush1.msra.mxu0 %v560
      %817 = vmatprep.subr.mxu0 0.0
      %818 = vmatpush1.msra.mxu0 %v555
      %819 = vmatprep.subr.mxu0 0.0
      %820 = vmatpush2.msra.mxu0 0.0
      %821 = vmatprep.subr.mxu0 0.0
      %822 = vmatpush2.msra.mxu0 0.0
      %823 = vmatprep.subr.mxu0 0.0
      %824 = vmatpush2.msra.mxu0 0.0
      %825 = vmatprep.subr.mxu0 0.0
      %826 = vmatpush2.msra.mxu0 0.0
      %827 = vmatprep.subr.mxu0 0.0
      %828 = vmatpush2.msra.mxu0 0.0
      %829 = vmatprep.subr.mxu0 0.0
      %830 = vmatpush2.msra.mxu0 0.0
      %831 = vmatprep.subr.mxu0 0.0
      %832 = vmatpush2.msra.mxu0 0.0
      %833 = vmatprep.subr.mxu0 0.0
      %834 = vmatpush2.msra.mxu0 0.0
      %835 = vmatprep.subr.mxu0 0.0
      %836 = vmatpush2.msra.mxu0 0.0
      %837 = vmatprep.subr.mxu0 0.0
      %838 = vmatpush2.msra.mxu0 0.0
      %839 = vmatprep.subr.mxu0 0.0
      %840 = vmatpush2.msra.mxu0 0.0
      %841 = vmatprep.subr.mxu0 0.0
      %842 = vmatpush2.msra.mxu0 0.0
      %843 = vmatprep.subr.mxu0 0.0
      %844 = vmatpush2.msra.mxu0 0.0
      %845 = vmatprep.subr.mxu0 0.0
      %846 = vmatpush2.msra.mxu0 0.0
      %847 = vmatprep.subr.mxu0 0.0
      %848 = vmatpush2.msra.mxu0 0.0
      %849 = vmatprep.subr.mxu0 0.0
      %850 = vmatpush2.msra.mxu0 0.0
      %851 = vmatprep.mubr.f32.mxu0 0.0
      %852 = vmatmul.mubr.f32.gmra.mxu0 %v643
      %v853 = vpop.f32.mrf.mxu0
      %v854 = vadd.f32 %v440, %v853
      %v855 = vpop.f32.mrf.mxu0
      %856 = vdwg.mxu0
      %v857 = vmax.f32 %v712, 0.0
      %v858 = vmax.f32 %v714, 0.0
      %v859 = vmax.f32 %v783, 0.0
      %v860 = vmax.f32 %v785, 0.0
      %v861 = vmax.f32 %v854, 0.0
      %862 = vrot.lane.b32.xlu0 %v294, 124
      %v863 = vpop.permute.xlu0 %862
      %864 = vrot.lane.b32.xlu0 %v295, 124
      %v865 = vpop.permute.xlu0 %864
      %866 = vrot.lane.b32.xlu0 %v296, 124
      %v867 = vpop.permute.xlu0 %866
      %868 = vrot.lane.b32.xlu0 %v297, 124
      %v869 = vpop.permute.xlu0 %868
      %870 = vrot.lane.b32.xlu0 %v298, 124
      %v871 = vpop.permute.xlu0 %870
      %872 = vrot.lane.b32.xlu0 %v299, 124
      %v873 = vpop.permute.xlu0 %872
      %vm874 = vcmask 1014784
      %v875 = vsel %vm874, %v863, %v865
      %v876 = vsel %vm874, %v865, %v867
      %v877 = vsel %vm874, %v867, %v869
      %v878 = vsel %vm874, %v869, %v871
      %v879 = vsel %vm874, %v871, %v873
      %880 = vrot.lane.b32.xlu0 %v294, 80
      %v881 = vpop.permute.xlu0 %880
      %v882 = vsel %vm400, %v881, %v391
      %883 = vrot.lane.b32.xlu0 %v295, 76
      %v884 = vpop.permute.xlu0 %883
      %885 = vrot.lane.b32.xlu0 %v296, 76
      %v886 = vpop.permute.xlu0 %885
      %887 = vrot.lane.b32.xlu0 %v297, 76
      %v888 = vpop.permute.xlu0 %887
      %889 = vrot.lane.b32.xlu0 %v298, 76
      %v890 = vpop.permute.xlu0 %889
      %891 = vrot.lane.b32.xlu0 %v299, 76
      %v892 = vpop.permute.xlu0 %891
      %vm893 = vcmask 621568
      %v894 = vsel %vm893, %v884, %v886
      %v895 = vsel %vm893, %v886, %v888
      %v896 = vsel %vm893, %v888, %v890
      %v897 = vsel %vm893, %v890, %v892
      %898 = vrot.lane.b32.xlu0 %v295, 32
      %v899 = vpop.permute.xlu0 %898
      %900 = vrot.lane.b32.xlu0 %v296, 32
      %v901 = vpop.permute.xlu0 %900
      %902 = vrot.lane.b32.xlu0 %v297, 32
      %v903 = vpop.permute.xlu0 %902
      %904 = vrot.lane.b32.xlu0 %v298, 32
      %v905 = vpop.permute.xlu0 %904
      %906 = vrot.lane.b32.xlu0 %v299, 32
      %v907 = vpop.permute.xlu0 %906
      %vm908 = vcmask 261120
      %v909 = vsel %vm908, %v899, %v901
      %v910 = vsel %vm908, %v901, %v903
      %v911 = vsel %vm908, %v903, %v905
      %v912 = vsel %vm908, %v905, %v907
      %913 = vrot.lane.b32.xlu0 %v295, 30
      %v914 = vpop.permute.xlu0 %913
      %915 = vrot.lane.b32.xlu0 %v296, 30
      %v916 = vpop.permute.xlu0 %915
      %917 = vrot.lane.b32.xlu0 %v297, 30
      %v918 = vpop.permute.xlu0 %917
      %919 = vrot.lane.b32.xlu0 %v298, 30
      %v920 = vpop.permute.xlu0 %919
      %921 = vrot.lane.b32.xlu0 %v299, 30
      %v922 = vpop.permute.xlu0 %921
      %vm923 = vcmask 244736
      %v924 = vsel %vm923, %v914, %v916
      %v925 = vsel %vm923, %v916, %v918
      %v926 = vsel %vm923, %v918, %v920
      %v927 = vsel %vm923, %v920, %v922
      %928 = vrot.lane.b32.xlu0 %v295, 28
      %v929 = vpop.permute.xlu0 %928
      %930 = vrot.lane.b32.xlu0 %v296, 28
      %v931 = vpop.permute.xlu0 %930
      %932 = vrot.lane.b32.xlu0 %v297, 28
      %v933 = vpop.permute.xlu0 %932
      %934 = vrot.lane.b32.xlu0 %v298, 28
      %v935 = vpop.permute.xlu0 %934
      %936 = vrot.lane.b32.xlu0 %v299, 28
      %v937 = vpop.permute.xlu0 %936
      %vm938 = vcmask 228352
      %v939 = vsel %vm938, %v929, %v931
      %v940 = vsel %vm938, %v931, %v933
      %v941 = vsel %vm938, %v933, %v935
      %v942 = vsel %vm938, %v935, %v937
      %v943 = vld [vmem:[%s1 + $0x8] sm:$0xff]
      %v944 = vld [vmem:[%s1 + $0x10] sm:$0xff]
      %v945 = vld [vmem:[%s2 + $0x8] sm:$0xff]
      %v946 = vld [vmem:[%s2 + $0x10] sm:$0xff]
      %948 = vset.pattern.permute.xlu0 0
      %949 = vperm.xlu0 %948, %v945
      %v950 = vpop.permute.xlu0 %949
      %953 = vset.pattern.permute.xlu0 0
      %954 = vperm.xlu0 %953, %v946
      %v955 = vpop.permute.xlu0 %954
      %957 = vrot.lane.b32.xlu0 %v294, 50
      %v958 = vpop.permute.xlu0 %957
      %959 = vrot.lane.b32.xlu0 %v295, 50
      %v960 = vpop.permute.xlu0 %959
      %961 = vrot.lane.b32.xlu0 %v296, 50
      %v962 = vpop.permute.xlu0 %961
      %963 = vrot.lane.b32.xlu0 %v297, 50
      %v964 = vpop.permute.xlu0 %963
      %965 = vrot.lane.b32.xlu0 %v298, 50
      %v966 = vpop.permute.xlu0 %965
      %967 = vrot.lane.b32.xlu0 %v299, 50
      %v968 = vpop.permute.xlu0 %967
      %969 = vrot.lane.b32.xlu0 %v337, 50
      %v970 = vpop.permute.xlu0 %969
      %971 = vrot.lane.b32.xlu0 %v338, 50
      %v972 = vpop.permute.xlu0 %971
      %973 = vrot.lane.b32.xlu0 %v339, 50
      %v974 = vpop.permute.xlu0 %973
      %975 = vrot.lane.b32.xlu0 %v340, 50
      %v976 = vpop.permute.xlu0 %975
      %977 = vrot.lane.b32.xlu0 %v341, 50
      %v978 = vpop.permute.xlu0 %977
      %979 = vrot.lane.b32.xlu0 %v335, 50
      %v980 = vpop.permute.xlu0 %979
      %981 = vrot.lane.b32.xlu0 %v875, 50
      %v982 = vpop.permute.xlu0 %981
      %983 = vrot.lane.b32.xlu0 %v876, 50
      %v984 = vpop.permute.xlu0 %983
      %985 = vrot.lane.b32.xlu0 %v877, 50
      %v986 = vpop.permute.xlu0 %985
      %987 = vrot.lane.b32.xlu0 %v878, 50
      %v988 = vpop.permute.xlu0 %987
      %989 = vrot.lane.b32.xlu0 %v879, 50
      %v990 = vpop.permute.xlu0 %989
      %991 = vrot.lane.b32.xlu0 %v873, 50
      %v992 = vpop.permute.xlu0 %991
      %993 = vrot.lane.b32.xlu0 %v882, 50
      %v994 = vpop.permute.xlu0 %993
      %995 = vrot.lane.b32.xlu0 %v401, 50
      %v996 = vpop.permute.xlu0 %995
      %997 = vrot.lane.b32.xlu0 %v402, 50
      %v998 = vpop.permute.xlu0 %997
      %999 = vrot.lane.b32.xlu0 %v403, 50
      %v1000 = vpop.permute.xlu0 %999
      %1001 = vrot.lane.b32.xlu0 %v404, 50
      %v1002 = vpop.permute.xlu0 %1001
      %1003 = vrot.lane.b32.xlu0 %v399, 50
      %v1004 = vpop.permute.xlu0 %1003
      %1005 = vrot.lane.b32.xlu0 %v421, 50
      %v1006 = vpop.permute.xlu0 %1005
      %1007 = vrot.lane.b32.xlu0 %v431, 50
      %v1008 = vpop.permute.xlu0 %1007
      %1009 = vrot.lane.b32.xlu0 %v432, 50
      %v1010 = vpop.permute.xlu0 %1009
      %1011 = vrot.lane.b32.xlu0 %v433, 50
      %v1012 = vpop.permute.xlu0 %1011
      %1013 = vrot.lane.b32.xlu0 %v434, 50
      %v1014 = vpop.permute.xlu0 %1013
      %1015 = vrot.lane.b32.xlu0 %v429, 50
      %v1016 = vpop.permute.xlu0 %1015
      %1017 = vrot.lane.b32.xlu0 %v884, 50
      %v1018 = vpop.permute.xlu0 %1017
      %1019 = vrot.lane.b32.xlu0 %v894, 50
      %v1020 = vpop.permute.xlu0 %1019
      %1021 = vrot.lane.b32.xlu0 %v895, 50
      %v1022 = vpop.permute.xlu0 %1021
      %1023 = vrot.lane.b32.xlu0 %v896, 50
      %v1024 = vpop.permute.xlu0 %1023
      %1025 = vrot.lane.b32.xlu0 %v897, 50
      %v1026 = vpop.permute.xlu0 %1025
      %1027 = vrot.lane.b32.xlu0 %v892, 50
      %v1028 = vpop.permute.xlu0 %1027
      %1029 = vrot.lane.b32.xlu0 %v899, 50
      %v1030 = vpop.permute.xlu0 %1029
      %1031 = vrot.lane.b32.xlu0 %v909, 50
      %v1032 = vpop.permute.xlu0 %1031
      %1033 = vrot.lane.b32.xlu0 %v910, 50
      %v1034 = vpop.permute.xlu0 %1033
      %1035 = vrot.lane.b32.xlu0 %v911, 50
      %v1036 = vpop.permute.xlu0 %1035
      %1037 = vrot.lane.b32.xlu0 %v912, 50
      %v1038 = vpop.permute.xlu0 %1037
      %1039 = vrot.lane.b32.xlu0 %v907, 50
      %v1040 = vpop.permute.xlu0 %1039
      %1041 = vrot.lane.b32.xlu0 %v914, 50
      %v1042 = vpop.permute.xlu0 %1041
      %1043 = vrot.lane.b32.xlu0 %v924, 50
      %v1044 = vpop.permute.xlu0 %1043
      %1045 = vrot.lane.b32.xlu0 %v925, 50
      %v1046 = vpop.permute.xlu0 %1045
      %1047 = vrot.lane.b32.xlu0 %v926, 50
      %v1048 = vpop.permute.xlu0 %1047
      %1049 = vrot.lane.b32.xlu0 %v927, 50
      %v1050 = vpop.permute.xlu0 %1049
      %1051 = vrot.lane.b32.xlu0 %v922, 50
      %v1052 = vpop.permute.xlu0 %1051
      %1053 = vrot.lane.b32.xlu0 %v929, 50
      %v1054 = vpop.permute.xlu0 %1053
      %1055 = vrot.lane.b32.xlu0 %v939, 50
      %v1056 = vpop.permute.xlu0 %1055
      %1057 = vrot.lane.b32.xlu0 %v940, 50
      %v1058 = vpop.permute.xlu0 %1057
      %1059 = vrot.lane.b32.xlu0 %v941, 50
      %v1060 = vpop.permute.xlu0 %1059
      %1061 = vrot.lane.b32.xlu0 %v942, 50
      %v1062 = vpop.permute.xlu0 %1061
      %1063 = vrot.lane.b32.xlu0 %v937, 50
      %v1064 = vpop.permute.xlu0 %1063
      %vm1065 = vcmask 408576
      %v1066 = vsel %vm1065, %v958, %v960
      %v1067 = vsel %vm1065, %v960, %v962
      %v1068 = vsel %vm1065, %v962, %v964
      %v1069 = vsel %vm1065, %v964, %v966
      %v1070 = vsel %vm1065, %v966, %v968
      %v1071 = vsel %vm1065, %v970, %v972
      %v1072 = vsel %vm1065, %v972, %v974
      %v1073 = vsel %vm1065, %v974, %v976
      %v1074 = vsel %vm1065, %v976, %v978
      %v1075 = vsel %vm1065, %v978, %v980
      %v1076 = vsel %vm1065, %v982, %v984
      %v1077 = vsel %vm1065, %v984, %v986
      %v1078 = vsel %vm1065, %v986, %v988
      %v1079 = vsel %vm1065, %v988, %v990
      %v1080 = vsel %vm1065, %v990, %v992
      %v1081 = vsel %vm1065, %v994, %v996
      %v1082 = vsel %vm1065, %v996, %v998
      %v1083 = vsel %vm1065, %v998, %v1000
      %v1084 = vsel %vm1065, %v1000, %v1002
      %v1085 = vsel %vm1065, %v1002, %v1004
      %v1086 = vsel %vm1065, %v1006, %v1008
      %v1087 = vsel %vm1065, %v1008, %v1010
      %v1088 = vsel %vm1065, %v1010, %v1012
      %v1089 = vsel %vm1065, %v1012, %v1014
      %v1090 = vsel %vm1065, %v1014, %v1016
      %v1091 = vsel %vm1065, %v1018, %v1020
      %v1092 = vsel %vm1065, %v1020, %v1022
      %v1093 = vsel %vm1065, %v1022, %v1024
      %v1094 = vsel %vm1065, %v1024, %v1026
      %v1095 = vsel %vm1065, %v1026, %v1028
      %v1096 = vsel %vm1065, %v1030, %v1032
      %v1097 = vsel %vm1065, %v1032, %v1034
      %v1098 = vsel %vm1065, %v1034, %v1036
      %v1099 = vsel %vm1065, %v1036, %v1038
      %v1100 = vsel %vm1065, %v1038, %v1040
      %v1101 = vsel %vm1065, %v1042, %v1044
      %v1102 = vsel %vm1065, %v1044, %v1046
      %v1103 = vsel %vm1065, %v1046, %v1048
      %v1104 = vsel %vm1065, %v1048, %v1050
      %v1105 = vsel %vm1065, %v1050, %v1052
      %v1106 = vsel %vm1065, %v1054, %v1056
      %v1107 = vsel %vm1065, %v1056, %v1058
      %v1108 = vsel %vm1065, %v1058, %v1060
      %v1109 = vsel %vm1065, %v1060, %v1062
      %v1110 = vsel %vm1065, %v1062, %v1064
      %v1157 = vsel %vm641, %v943, 0
      %v1160 = vsel %vm641, %v944, 0
      %1162 = vmatprep.subr.mxu0 0.0
      %1163 = vmatpush1.msra.mxu0 0.0
      %1164 = vmatprep.subr.mxu0 0.0
      %1165 = vmatpush1.msra.mxu0 0.0
      %1166 = vmatprep.subr.mxu0 0.0
      %1167 = vmatpush1.msra.mxu0 0.0
      %1168 = vmatprep.subr.mxu0 0.0
      %1169 = vmatpush1.msra.mxu0 0.0
      %1170 = vmatprep.subr.mxu0 0.0
      %1171 = vmatpush1.msra.mxu0 0.0
      %1172 = vmatprep.subr.mxu0 0.0
      %1173 = vmatpush1.msra.mxu0 0.0
      %1174 = vmatprep.subr.mxu0 0.0
      %1175 = vmatpush1.msra.mxu0 0.0
      %1176 = vmatprep.subr.mxu0 %v1107
      %1177 = vmatpush1.msra.mxu0 %v1106
      %1178 = vmatprep.subr.mxu0 %v1102
      %1179 = vmatpush1.msra.mxu0 %v1101
      %1180 = vmatprep.subr.mxu0 %v1097
      %1181 = vmatpush1.msra.mxu0 %v1096
      %1182 = vmatprep.subr.mxu0 %v1092
      %1183 = vmatpush1.msra.mxu0 %v1091
      %1184 = vmatprep.subr.mxu0 %v1087
      %1185 = vmatpush1.msra.mxu0 %v1086
      %1186 = vmatprep.subr.mxu0 %v1082
      %1187 = vmatpush1.msra.mxu0 %v1081
      %1188 = vmatprep.subr.mxu0 %v1077
      %1189 = vmatpush1.msra.mxu0 %v1076
      %1190 = vmatprep.subr.mxu0 %v1072
      %1191 = vmatpush1.msra.mxu0 %v1071
      %1192 = vmatprep.subr.mxu0 %v1067
      %1193 = vmatpush1.msra.mxu0 %v1066
      %1194 = vmatprep.subr.mxu0 0.0
      %1195 = vmatpush2.msra.mxu0 0.0
      %1196 = vmatprep.subr.mxu0 0.0
      %1197 = vmatpush2.msra.mxu0 0.0
      %1198 = vmatprep.subr.mxu0 0.0
      %1199 = vmatpush2.msra.mxu0 0.0
      %1200 = vmatprep.subr.mxu0 0.0
      %1201 = vmatpush2.msra.mxu0 0.0
      %1202 = vmatprep.subr.mxu0 0.0
      %1203 = vmatpush2.msra.mxu0 0.0
      %1204 = vmatprep.subr.mxu0 0.0
      %1205 = vmatpush2.msra.mxu0 0.0
      %1206 = vmatprep.subr.mxu0 0.0
      %1207 = vmatpush2.msra.mxu0 0.0
      %1208 = vmatprep.subr.mxu0 0.0
      %1209 = vmatpush2.msra.mxu0 0.0
      %1210 = vmatprep.subr.mxu0 0.0
      %1211 = vmatpush2.msra.mxu0 0.0
      %1212 = vmatprep.subr.mxu0 0.0
      %1213 = vmatpush2.msra.mxu0 0.0
      %1214 = vmatprep.subr.mxu0 0.0
      %1215 = vmatpush2.msra.mxu0 0.0
      %1216 = vmatprep.subr.mxu0 0.0
      %1217 = vmatpush2.msra.mxu0 0.0
      %1218 = vmatprep.subr.mxu0 0.0
      %1219 = vmatpush2.msra.mxu0 0.0
      %1220 = vmatprep.subr.mxu0 0.0
      %1221 = vmatpush2.msra.mxu0 0.0
      %1222 = vmatprep.subr.mxu0 0.0
      %1223 = vmatpush2.msra.mxu0 0.0
      %1224 = vmatprep.subr.mxu0 0.0
      %1225 = vmatpush2.msra.mxu0 0.0
      %1226 = vmatprep.mubr.f32.mxu0 0.0
      %1227 = vmatmul.mubr.f32.gmra.mxu0 %v1157
      %v1228 = vpop.f32.mrf.mxu0
      %v1229 = vadd.f32 %v950, %v1228
      %v1230 = vpop.f32.mrf.mxu0
      %v1231 = vadd.f32 %v950, %v1230
      %1232 = vmatprep.mubr.f32.mxu0 0.0
      %1233 = vmatmul.mubr.f32.gmra.mxu0 %v1160
      %v1234 = vpop.f32.mrf.mxu0
      %v1235 = vadd.f32 %v955, %v1234
      %v1236 = vpop.f32.mrf.mxu0
      %v1237 = vadd.f32 %v955, %v1236
      %1238 = vdwg.mxu0
      %1239 = vmatprep.subr.mxu0 0.0
      %1240 = vmatpush1.msra.mxu0 0.0
      %1241 = vmatprep.subr.mxu0 0.0
      %1242 = vmatpush1.msra.mxu0 0.0
      %1243 = vmatprep.subr.mxu0 0.0
      %1244 = vmatpush1.msra.mxu0 0.0
      %1245 = vmatprep.subr.mxu0 0.0
      %1246 = vmatpush1.msra.mxu0 0.0
      %1247 = vmatprep.subr.mxu0 0.0
      %1248 = vmatpush1.msra.mxu0 0.0
      %1249 = vmatprep.subr.mxu0 0.0
      %1250 = vmatpush1.msra.mxu0 0.0
      %1251 = vmatprep.subr.mxu0 0.0
      %1252 = vmatpush1.msra.mxu0 0.0
      %1253 = vmatprep.subr.mxu0 %v1109
      %1254 = vmatpush1.msra.mxu0 %v1108
      %1255 = vmatprep.subr.mxu0 %v1104
      %1256 = vmatpush1.msra.mxu0 %v1103
      %1257 = vmatprep.subr.mxu0 %v1099
      %1258 = vmatpush1.msra.mxu0 %v1098
      %1259 = vmatprep.subr.mxu0 %v1094
      %1260 = vmatpush1.msra.mxu0 %v1093
      %1261 = vmatprep.subr.mxu0 %v1089
      %1262 = vmatpush1.msra.mxu0 %v1088
      %1263 = vmatprep.subr.mxu0 %v1084
      %1264 = vmatpush1.msra.mxu0 %v1083
      %1265 = vmatprep.subr.mxu0 %v1079
      %1266 = vmatpush1.msra.mxu0 %v1078
      %1267 = vmatprep.subr.mxu0 %v1074
      %1268 = vmatpush1.msra.mxu0 %v1073
      %1269 = vmatprep.subr.mxu0 %v1069
      %1270 = vmatpush1.msra.mxu0 %v1068
      %1271 = vmatprep.subr.mxu0 0.0
      %1272 = vmatpush2.msra.mxu0 0.0
      %1273 = vmatprep.subr.mxu0 0.0
      %1274 = vmatpush2.msra.mxu0 0.0
      %1275 = vmatprep.subr.mxu0 0.0
      %1276 = vmatpush2.msra.mxu0 0.0
      %1277 = vmatprep.subr.mxu0 0.0
      %1278 = vmatpush2.msra.mxu0 0.0
      %1279 = vmatprep.subr.mxu0 0.0
      %1280 = vmatpush2.msra.mxu0 0.0
      %1281 = vmatprep.subr.mxu0 0.0
      %1282 = vmatpush2.msra.mxu0 0.0
      %1283 = vmatprep.subr.mxu0 0.0
      %1284 = vmatpush2.msra.mxu0 0.0
      %1285 = vmatprep.subr.mxu0 0.0
      %1286 = vmatpush2.msra.mxu0 0.0
      %1287 = vmatprep.subr.mxu0 0.0
      %1288 = vmatpush2.msra.mxu0 0.0
      %1289 = vmatprep.subr.mxu0 0.0
      %1290 = vmatpush2.msra.mxu0 0.0
      %1291 = vmatprep.subr.mxu0 0.0
      %1292 = vmatpush2.msra.mxu0 0.0
      %1293 = vmatprep.subr.mxu0 0.0
      %1294 = vmatpush2.msra.mxu0 0.0
      %1295 = vmatprep.subr.mxu0 0.0
      %1296 = vmatpush2.msra.mxu0 0.0
      %1297 = vmatprep.subr.mxu0 0.0
      %1298 = vmatpush2.msra.mxu0 0.0
      %1299 = vmatprep.subr.mxu0 0.0
      %1300 = vmatpush2.msra.mxu0 0.0
      %1301 = vmatprep.subr.mxu0 0.0
      %1302 = vmatpush2.msra.mxu0 0.0
      %1303 = vmatprep.mubr.f32.mxu0 0.0
      %1304 = vmatmul.mubr.f32.gmra.mxu0 %v1157
      %v1305 = vpop.f32.mrf.mxu0
      %v1306 = vadd.f32 %v950, %v1305
      %v1307 = vpop.f32.mrf.mxu0
      %v1308 = vadd.f32 %v950, %v1307
      %1309 = vmatprep.mubr.f32.mxu0 0.0
      %1310 = vmatmul.mubr.f32.gmra.mxu0 %v1160
      %v1311 = vpop.f32.mrf.mxu0
      %v1312 = vadd.f32 %v955, %v1311
      %v1313 = vpop.f32.mrf.mxu0
      %v1314 = vadd.f32 %v955, %v1313
      %1315 = vdwg.mxu0
      %1316 = vmatprep.subr.mxu0 0.0
      %1317 = vmatpush1.msra.mxu0 0.0
      %1318 = vmatprep.subr.mxu0 0.0
      %1319 = vmatpush1.msra.mxu0 0.0
      %1320 = vmatprep.subr.mxu0 0.0
      %1321 = vmatpush1.msra.mxu0 0.0
      %1322 = vmatprep.subr.mxu0 0.0
      %1323 = vmatpush1.msra.mxu0 0.0
      %1324 = vmatprep.subr.mxu0 0.0
      %1325 = vmatpush1.msra.mxu0 0.0
      %1326 = vmatprep.subr.mxu0 0.0
      %1327 = vmatpush1.msra.mxu0 0.0
      %1328 = vmatprep.subr.mxu0 0.0
      %1329 = vmatpush1.msra.mxu0 0.0
      %1330 = vmatprep.subr.mxu0 0.0
      %1331 = vmatpush1.msra.mxu0 %v1110
      %1332 = vmatprep.subr.mxu0 0.0
      %1333 = vmatpush1.msra.mxu0 %v1105
      %1334 = vmatprep.subr.mxu0 0.0
      %1335 = vmatpush1.msra.mxu0 %v1100
      %1336 = vmatprep.subr.mxu0 0.0
      %1337 = vmatpush1.msra.mxu0 %v1095
      %1338 = vmatprep.subr.mxu0 0.0
      %1339 = vmatpush1.msra.mxu0 %v1090
      %1340 = vmatprep.subr.mxu0 0.0
      %1341 = vmatpush1.msra.mxu0 %v1085
      %1342 = vmatprep.subr.mxu0 0.0
      %1343 = vmatpush1.msra.mxu0 %v1080
      %1344 = vmatprep.subr.mxu0 0.0
      %1345 = vmatpush1.msra.mxu0 %v1075
      %1346 = vmatprep.subr.mxu0 0.0
      %1347 = vmatpush1.msra.mxu0 %v1070
      %1348 = vmatprep.subr.mxu0 0.0
      %1349 = vmatpush2.msra.mxu0 0.0
      %1350 = vmatprep.subr.mxu0 0.0
      %1351 = vmatpush2.msra.mxu0 0.0
      %1352 = vmatprep.subr.mxu0 0.0
      %1353 = vmatpush2.msra.mxu0 0.0
      %1354 = vmatprep.subr.mxu0 0.0
      %1355 = vmatpush2.msra.mxu0 0.0
      %1356 = vmatprep.subr.mxu0 0.0
      %1357 = vmatpush2.msra.mxu0 0.0
      %1358 = vmatprep.subr.mxu0 0.0
      %1359 = vmatpush2.msra.mxu0 0.0
      %1360 = vmatprep.subr.mxu0 0.0
      %1361 = vmatpush2.msra.mxu0 0.0
      %1362 = vmatprep.subr.mxu0 0.0
      %1363 = vmatpush2.msra.mxu0 0.0
      %1364 = vmatprep.subr.mxu0 0.0
      %1365 = vmatpush2.msra.mxu0 0.0
      %1366 = vmatprep.subr.mxu0 0.0
      %1367 = vmatpush2.msra.mxu0 0.0
      %1368 = vmatprep.subr.mxu0 0.0
      %1369 = vmatpush2.msra.mxu0 0.0
      %1370 = vmatprep.subr.mxu0 0.0
      %1371 = vmatpush2.msra.mxu0 0.0
      %1372 = vmatprep.subr.mxu0 0.0
      %1373 = vmatpush2.msra.mxu0 0.0
      %1374 = vmatprep.subr.mxu0 0.0
      %1375 = vmatpush2.msra.mxu0 0.0
      %1376 = vmatprep.subr.mxu0 0.0
      %1377 = vmatpush2.msra.mxu0 0.0
      %1378 = vmatprep.subr.mxu0 0.0
      %1379 = vmatpush2.msra.mxu0 0.0
      %1380 = vmatprep.mubr.f32.mxu0 0.0
      %1381 = vmatmul.mubr.f32.gmra.mxu0 %v1157
      %v1382 = vpop.f32.mrf.mxu0
      %v1383 = vadd.f32 %v950, %v1382
      %v1384 = vpop.f32.mrf.mxu0
      %1385 = vmatprep.mubr.f32.mxu0 0.0
      %1386 = vmatmul.mubr.f32.gmra.mxu0 %v1160
      %v1387 = vpop.f32.mrf.mxu0
      %v1388 = vadd.f32 %v955, %v1387
      %v1389 = vpop.f32.mrf.mxu0
      %1390 = vdwg.mxu0
      %v1391 = vmax.f32 %v1229, 0.0
      %v1392 = vmax.f32 %v1231, 0.0
      %v1393 = vmax.f32 %v1306, 0.0
      %v1394 = vmax.f32 %v1308, 0.0
      %v1395 = vmax.f32 %v1383, 0.0
      %v1396 = vmax.f32 %v1235, 0.0
      %v1397 = vmax.f32 %v1237, 0.0
      %v1398 = vmax.f32 %v1312, 0.0
      %v1399 = vmax.f32 %v1314, 0.0
      %v1400 = vmax.f32 %v1388, 0.0
      %v1401 = vsel %vm293, 1, 0
      %v1402 = vlaneseq
      %v1403 = vshrl.u32 %v1402, 7
      %v1404 = vsub.s32 0, %v1403
      %v1405 = vrot.slane %v1401, %v1404
      %v1406 = vlaneseq
      %v1407 = vshrl.u32 %v1406, 7
      %v1408 = vsub.s32 1, %v1407
      %v1409 = vrot.slane %v1401, %v1408
      %v1410 = vlaneseq
      %v1411 = vshrl.u32 %v1410, 7
      %v1412 = vsub.s32 2, %v1411
      %v1413 = vrot.slane %v1401, %v1412
      %v1414 = vlaneseq
      %v1415 = vshrl.u32 %v1414, 7
      %v1416 = vsub.s32 3, %v1415
      %v1417 = vrot.slane %v1401, %v1416
      %v1418 = vlaneseq
      %v1419 = vshrl.u32 %v1418, 7
      %v1420 = vsub.s32 4, %v1419
      %v1421 = vrot.slane %v1401, %v1420
      %vm1422 = vcmp.eq.s32.totalorder %v1405, 1
      %vm1423 = vcmp.eq.s32.totalorder %v1409, 1
      %vm1424 = vcmp.eq.s32.totalorder %v1413, 1
      %vm1425 = vcmp.eq.s32.totalorder %v1417, 1
      %vm1426 = vcmp.eq.s32.totalorder %v1421, 1
      %v1427 = vsel %vm1422, %v857, 0.0
      %v1428 = vsel %vm1423, %v858, 0.0
      %v1429 = vsel %vm1424, %v859, 0.0
      %v1430 = vsel %vm1425, %v860, 0.0
      %v1431 = vsel %vm1426, %v861, 0.0
      %1432 = vst [vmem:[#allocation2 + $0x40] sm:$0xff] %v1427
      %1433 = vst [vmem:[#allocation2 + $0x48] sm:$0xff] %v1428
      %1434 = vst [vmem:[#allocation2 + $0x50] sm:$0xff] %v1429
      %1435 = vst [vmem:[#allocation2 + $0x58] sm:$0xff] %v1430
      %1436 = vst.msk [vmem:[#allocation2 + $0x60] sm:$0xff] %vm204, %v1431
      %v1437 = vsel %vm1422, %v1391, 0.0
      %v1438 = vsel %vm1423, %v1392, 0.0
      %v1439 = vsel %vm1424, %v1393, 0.0
      %v1440 = vsel %vm1425, %v1394, 0.0
      %v1441 = vsel %vm1426, %v1395, 0.0
      %v1442 = vsel %vm1422, %v1396, 0.0
      %v1443 = vsel %vm1423, %v1397, 0.0
      %v1444 = vsel %vm1424, %v1398, 0.0
      %v1445 = vsel %vm1425, %v1399, 0.0
      %v1446 = vsel %vm1426, %v1400, 0.0
      %1447 = vst [vmem:[#allocation2 + $0x78] sm:$0xff] %v1437
      %1448 = vst [vmem:[#allocation2 + $0x80] sm:$0xff] %v1438
      %1449 = vst [vmem:[#allocation2 + $0x88] sm:$0xff] %v1439
      %1450 = vst [vmem:[#allocation2 + $0x90] sm:$0xff] %v1440
      %1451 = vst.msk [vmem:[#allocation2 + $0x98] sm:$0xff] %vm204, %v1441
      %1452 = vst [vmem:[#allocation2 + $0xb0] sm:$0xff] %v1442
      %1453 = vst [vmem:[#allocation2 + $0xb8] sm:$0xff] %v1443
      %1454 = vst [vmem:[#allocation2 + $0xc0] sm:$0xff] %v1444
      %1455 = vst [vmem:[#allocation2 + $0xc8] sm:$0xff] %v1445
      %1456 = vst.msk [vmem:[#allocation2 + $0xd0] sm:$0xff] %vm204, %v1446
      %v1457 = vld [vmem:[#allocation2 + $0x38] sm:$0xff]
      %v1458 = vld [vmem:[#allocation2 + $0x40] sm:$0xff]
      %v1459 = vld [vmem:[#allocation2 + $0x48] sm:$0xff]
      %v1460 = vld [vmem:[#allocation2 + $0x50] sm:$0xff]
      %v1461 = vld [vmem:[#allocation2 + $0x58] sm:$0xff]
      %v1462 = vld [vmem:[#allocation2 + $0x60] sm:$0xff]
      %1469 = vrot.lane.b32.xlu0 %v1457, 127
      %v1470 = vpop.permute.xlu0 %1469
      %1471 = vrot.lane.b32.xlu0 %v1458, 127
      %v1472 = vpop.permute.xlu0 %1471
      %1473 = vrot.lane.b32.xlu0 %v1459, 127
      %v1474 = vpop.permute.xlu0 %1473
      %1475 = vrot.lane.b32.xlu0 %v1460, 127
      %v1476 = vpop.permute.xlu0 %1475
      %1477 = vrot.lane.b32.xlu0 %v1461, 127
      %v1478 = vpop.permute.xlu0 %1477
      %1479 = vrot.lane.b32.xlu0 %v1462, 127
      %v1480 = vpop.permute.xlu0 %1479
      %v1481 = vsel %vm318, %v1470, %v1472
      %v1482 = vsel %vm318, %v1472, %v1474
      %v1483 = vsel %vm318, %v1474, %v1476
      %v1484 = vsel %vm318, %v1476, %v1478
      %v1485 = vsel %vm318, %v1478, %v1480
      %1486 = vrot.lane.b32.xlu0 %v1457, 126
      %v1487 = vpop.permute.xlu0 %1486
      %1488 = vrot.lane.b32.xlu0 %v1458, 126
      %v1489 = vpop.permute.xlu0 %1488
      %1490 = vrot.lane.b32.xlu0 %v1459, 126
      %v1491 = vpop.permute.xlu0 %1490
      %1492 = vrot.lane.b32.xlu0 %v1460, 126
      %v1493 = vpop.permute.xlu0 %1492
      %1494 = vrot.lane.b32.xlu0 %v1461, 126
      %v1495 = vpop.permute.xlu0 %1494
      %1496 = vrot.lane.b32.xlu0 %v1462, 126
      %v1497 = vpop.permute.xlu0 %1496
      %v1498 = vsel %vm336, %v1487, %v1489
      %v1499 = vsel %vm336, %v1489, %v1491
      %v1500 = vsel %vm336, %v1491, %v1493
      %v1501 = vsel %vm336, %v1493, %v1495
      %v1502 = vsel %vm336, %v1495, %v1497
      %1503 = vrot.lane.b32.xlu0 %v1457, 104
      %v1504 = vpop.permute.xlu0 %1503
      %1505 = vrot.lane.b32.xlu0 %v1458, 104
      %v1506 = vpop.permute.xlu0 %1505
      %1507 = vrot.lane.b32.xlu0 %v1459, 104
      %v1508 = vpop.permute.xlu0 %1507
      %1509 = vrot.lane.b32.xlu0 %v1460, 104
      %v1510 = vpop.permute.xlu0 %1509
      %1511 = vrot.lane.b32.xlu0 %v1461, 104
      %v1512 = vpop.permute.xlu0 %1511
      %1513 = vrot.lane.b32.xlu0 %v1462, 104
      %v1514 = vpop.permute.xlu0 %1513
      %v1515 = vsel %vm354, %v1504, %v1506
      %v1516 = vsel %vm354, %v1506, %v1508
      %v1517 = vsel %vm354, %v1508, %v1510
      %v1518 = vsel %vm354, %v1510, %v1512
      %v1519 = vsel %vm354, %v1512, %v1514
      %1520 = vrot.lane.b32.xlu0 %v1458, 103
      %v1521 = vpop.permute.xlu0 %1520
      %1522 = vrot.lane.b32.xlu0 %v1459, 103
      %v1523 = vpop.permute.xlu0 %1522
      %1524 = vrot.lane.b32.xlu0 %v1460, 103
      %v1525 = vpop.permute.xlu0 %1524
      %1526 = vrot.lane.b32.xlu0 %v1461, 103
      %v1527 = vpop.permute.xlu0 %1526
      %1528 = vrot.lane.b32.xlu0 %v1462, 103
      %v1529 = vpop.permute.xlu0 %1528
      %v1530 = vsel %vm370, %v1521, %v1523
      %v1531 = vsel %vm370, %v1523, %v1525
      %v1532 = vsel %vm370, %v1525, %v1527
      %v1533 = vsel %vm370, %v1527, %v1529
      %1534 = vrot.lane.b32.xlu0 %v1458, 102
      %v1535 = vpop.permute.xlu0 %1534
      %1536 = vrot.lane.b32.xlu0 %v1459, 102
      %v1537 = vpop.permute.xlu0 %1536
      %1538 = vrot.lane.b32.xlu0 %v1460, 102
      %v1539 = vpop.permute.xlu0 %1538
      %1540 = vrot.lane.b32.xlu0 %v1461, 102
      %v1541 = vpop.permute.xlu0 %1540
      %1542 = vrot.lane.b32.xlu0 %v1462, 102
      %v1543 = vpop.permute.xlu0 %1542
      %v1544 = vsel %vm385, %v1535, %v1537
      %v1545 = vsel %vm385, %v1537, %v1539
      %v1546 = vsel %vm385, %v1539, %v1541
      %v1547 = vsel %vm385, %v1541, %v1543
      %1548 = vrot.lane.b32.xlu0 %v1458, 80
      %v1549 = vpop.permute.xlu0 %1548
      %1550 = vrot.lane.b32.xlu0 %v1459, 80
      %v1551 = vpop.permute.xlu0 %1550
      %1552 = vrot.lane.b32.xlu0 %v1460, 80
      %v1553 = vpop.permute.xlu0 %1552
      %1554 = vrot.lane.b32.xlu0 %v1461, 80
      %v1555 = vpop.permute.xlu0 %1554
      %1556 = vrot.lane.b32.xlu0 %v1462, 80
      %v1557 = vpop.permute.xlu0 %1556
      %v1558 = vsel %vm400, %v1549, %v1551
      %v1559 = vsel %vm400, %v1551, %v1553
      %v1560 = vsel %vm400, %v1553, %v1555
      %v1561 = vsel %vm400, %v1555, %v1557
      %1562 = vrot.lane.b32.xlu0 %v1458, 79
      %v1563 = vpop.permute.xlu0 %1562
      %1564 = vrot.lane.b32.xlu0 %v1459, 79
      %v1565 = vpop.permute.xlu0 %1564
      %1566 = vrot.lane.b32.xlu0 %v1460, 79
      %v1567 = vpop.permute.xlu0 %1566
      %1568 = vrot.lane.b32.xlu0 %v1461, 79
      %v1569 = vpop.permute.xlu0 %1568
      %1570 = vrot.lane.b32.xlu0 %v1462, 79
      %v1571 = vpop.permute.xlu0 %1570
      %v1572 = vsel %vm415, %v1563, %v1565
      %v1573 = vsel %vm415, %v1565, %v1567
      %v1574 = vsel %vm415, %v1567, %v1569
      %v1575 = vsel %vm415, %v1569, %v1571
      %1576 = vrot.lane.b32.xlu0 %v1458, 78
      %v1577 = vpop.permute.xlu0 %1576
      %1578 = vrot.lane.b32.xlu0 %v1459, 78
      %v1579 = vpop.permute.xlu0 %1578
      %1580 = vrot.lane.b32.xlu0 %v1460, 78
      %v1581 = vpop.permute.xlu0 %1580
      %1582 = vrot.lane.b32.xlu0 %v1461, 78
      %v1583 = vpop.permute.xlu0 %1582
      %1584 = vrot.lane.b32.xlu0 %v1462, 78
      %v1585 = vpop.permute.xlu0 %1584
      %v1586 = vsel %vm430, %v1577, %v1579
      %v1587 = vsel %vm430, %v1579, %v1581
      %v1588 = vsel %vm430, %v1581, %v1583
      %v1589 = vsel %vm430, %v1583, %v1585
      %v1590 = vld [vmem:[%s1 + $0x18] sm:$0xff]
      %v1591 = vld [vmem:[%s2 + $0x18] sm:$0xff]
      %1593 = vset.pattern.permute.xlu0 0
      %1594 = vperm.xlu0 %1593, %v1591
      %v1595 = vpop.permute.xlu0 %1594
      %1597 = vrot.lane.b32.xlu0 %v1457, 25
      %v1598 = vpop.permute.xlu0 %1597
      %1599 = vrot.lane.b32.xlu0 %v1458, 25
      %v1600 = vpop.permute.xlu0 %1599
      %1601 = vrot.lane.b32.xlu0 %v1459, 25
      %v1602 = vpop.permute.xlu0 %1601
      %1603 = vrot.lane.b32.xlu0 %v1460, 25
      %v1604 = vpop.permute.xlu0 %1603
      %1605 = vrot.lane.b32.xlu0 %v1461, 25
      %v1606 = vpop.permute.xlu0 %1605
      %1607 = vrot.lane.b32.xlu0 %v1481, 25
      %v1608 = vpop.permute.xlu0 %1607
      %1609 = vrot.lane.b32.xlu0 %v1482, 25
      %v1610 = vpop.permute.xlu0 %1609
      %1611 = vrot.lane.b32.xlu0 %v1483, 25
      %v1612 = vpop.permute.xlu0 %1611
      %1613 = vrot.lane.b32.xlu0 %v1484, 25
      %v1614 = vpop.permute.xlu0 %1613
      %1615 = vrot.lane.b32.xlu0 %v1485, 25
      %v1616 = vpop.permute.xlu0 %1615
      %1617 = vrot.lane.b32.xlu0 %v1498, 25
      %v1618 = vpop.permute.xlu0 %1617
      %1619 = vrot.lane.b32.xlu0 %v1499, 25
      %v1620 = vpop.permute.xlu0 %1619
      %1621 = vrot.lane.b32.xlu0 %v1500, 25
      %v1622 = vpop.permute.xlu0 %1621
      %1623 = vrot.lane.b32.xlu0 %v1501, 25
      %v1624 = vpop.permute.xlu0 %1623
      %1625 = vrot.lane.b32.xlu0 %v1502, 25
      %v1626 = vpop.permute.xlu0 %1625
      %1627 = vrot.lane.b32.xlu0 %v1515, 25
      %v1628 = vpop.permute.xlu0 %1627
      %1629 = vrot.lane.b32.xlu0 %v1516, 25
      %v1630 = vpop.permute.xlu0 %1629
      %1631 = vrot.lane.b32.xlu0 %v1517, 25
      %v1632 = vpop.permute.xlu0 %1631
      %1633 = vrot.lane.b32.xlu0 %v1518, 25
      %v1634 = vpop.permute.xlu0 %1633
      %1635 = vrot.lane.b32.xlu0 %v1519, 25
      %v1636 = vpop.permute.xlu0 %1635
      %1637 = vrot.lane.b32.xlu0 %v1521, 25
      %v1638 = vpop.permute.xlu0 %1637
      %1639 = vrot.lane.b32.xlu0 %v1530, 25
      %v1640 = vpop.permute.xlu0 %1639
      %1641 = vrot.lane.b32.xlu0 %v1531, 25
      %v1642 = vpop.permute.xlu0 %1641
      %1643 = vrot.lane.b32.xlu0 %v1532, 25
      %v1644 = vpop.permute.xlu0 %1643
      %1645 = vrot.lane.b32.xlu0 %v1533, 25
      %v1646 = vpop.permute.xlu0 %1645
      %1647 = vrot.lane.b32.xlu0 %v1535, 25
      %v1648 = vpop.permute.xlu0 %1647
      %1649 = vrot.lane.b32.xlu0 %v1544, 25
      %v1650 = vpop.permute.xlu0 %1649
      %1651 = vrot.lane.b32.xlu0 %v1545, 25
      %v1652 = vpop.permute.xlu0 %1651
      %1653 = vrot.lane.b32.xlu0 %v1546, 25
      %v1654 = vpop.permute.xlu0 %1653
      %1655 = vrot.lane.b32.xlu0 %v1547, 25
      %v1656 = vpop.permute.xlu0 %1655
      %1657 = vrot.lane.b32.xlu0 %v1549, 25
      %v1658 = vpop.permute.xlu0 %1657
      %1659 = vrot.lane.b32.xlu0 %v1558, 25
      %v1660 = vpop.permute.xlu0 %1659
      %1661 = vrot.lane.b32.xlu0 %v1559, 25
      %v1662 = vpop.permute.xlu0 %1661
      %1663 = vrot.lane.b32.xlu0 %v1560, 25
      %v1664 = vpop.permute.xlu0 %1663
      %1665 = vrot.lane.b32.xlu0 %v1561, 25
      %v1666 = vpop.permute.xlu0 %1665
      %1667 = vrot.lane.b32.xlu0 %v1563, 25
      %v1668 = vpop.permute.xlu0 %1667
      %1669 = vrot.lane.b32.xlu0 %v1572, 25
      %v1670 = vpop.permute.xlu0 %1669
      %1671 = vrot.lane.b32.xlu0 %v1573, 25
      %v1672 = vpop.permute.xlu0 %1671
      %1673 = vrot.lane.b32.xlu0 %v1574, 25
      %v1674 = vpop.permute.xlu0 %1673
      %1675 = vrot.lane.b32.xlu0 %v1575, 25
      %v1676 = vpop.permute.xlu0 %1675
      %1677 = vrot.lane.b32.xlu0 %v1577, 25
      %v1678 = vpop.permute.xlu0 %1677
      %1679 = vrot.lane.b32.xlu0 %v1586, 25
      %v1680 = vpop.permute.xlu0 %1679
      %1681 = vrot.lane.b32.xlu0 %v1587, 25
      %v1682 = vpop.permute.xlu0 %1681
      %1683 = vrot.lane.b32.xlu0 %v1588, 25
      %v1684 = vpop.permute.xlu0 %1683
      %1685 = vrot.lane.b32.xlu0 %v1589, 25
      %v1686 = vpop.permute.xlu0 %1685
      %v1687 = vsel %vm550, %v1598, %v1600
      %v1688 = vsel %vm550, %v1600, %v1602
      %v1689 = vsel %vm550, %v1602, %v1604
      %v1690 = vsel %vm550, %v1604, %v1606
      %v1691 = vsel %vm550, %v1608, %v1610
      %v1692 = vsel %vm550, %v1610, %v1612
      %v1693 = vsel %vm550, %v1612, %v1614
      %v1694 = vsel %vm550, %v1614, %v1616
      %v1695 = vsel %vm550, %v1618, %v1620
      %v1696 = vsel %vm550, %v1620, %v1622
      %v1697 = vsel %vm550, %v1622, %v1624
      %v1698 = vsel %vm550, %v1624, %v1626
      %v1699 = vsel %vm550, %v1628, %v1630
      %v1700 = vsel %vm550, %v1630, %v1632
      %v1701 = vsel %vm550, %v1632, %v1634
      %v1702 = vsel %vm550, %v1634, %v1636
      %v1703 = vsel %vm550, %v1638, %v1640
      %v1704 = vsel %vm550, %v1640, %v1642
      %v1705 = vsel %vm550, %v1642, %v1644
      %v1706 = vsel %vm550, %v1644, %v1646
      %v1707 = vsel %vm550, %v1648, %v1650
      %v1708 = vsel %vm550, %v1650, %v1652
      %v1709 = vsel %vm550, %v1652, %v1654
      %v1710 = vsel %vm550, %v1654, %v1656
      %v1711 = vsel %vm550, %v1658, %v1660
      %v1712 = vsel %vm550, %v1660, %v1662
      %v1713 = vsel %vm550, %v1662, %v1664
      %v1714 = vsel %vm550, %v1664, %v1666
      %v1715 = vsel %vm550, %v1668, %v1670
      %v1716 = vsel %vm550, %v1670, %v1672
      %v1717 = vsel %vm550, %v1672, %v1674
      %v1718 = vsel %vm550, %v1674, %v1676
      %v1719 = vsel %vm550, %v1678, %v1680
      %v1720 = vsel %vm550, %v1680, %v1682
      %v1721 = vsel %vm550, %v1682, %v1684
      %v1722 = vsel %vm550, %v1684, %v1686
      %v1760 = vsel %vm641, %v1590, 0
      %1762 = vmatprep.subr.mxu0 0.0
      %1763 = vmatpush1.msra.mxu0 0.0
      %1764 = vmatprep.subr.mxu0 0.0
      %1765 = vmatpush1.msra.mxu0 0.0
      %1766 = vmatprep.subr.mxu0 0.0
      %1767 = vmatpush1.msra.mxu0 0.0
      %1768 = vmatprep.subr.mxu0 0.0
      %1769 = vmatpush1.msra.mxu0 0.0
      %1770 = vmatprep.subr.mxu0 0.0
      %1771 = vmatpush1.msra.mxu0 0.0
      %1772 = vmatprep.subr.mxu0 0.0
      %1773 = vmatpush1.msra.mxu0 0.0
      %1774 = vmatprep.subr.mxu0 0.0
      %1775 = vmatpush1.msra.mxu0 0.0
      %1776 = vmatprep.subr.mxu0 %v1720
      %1777 = vmatpush1.msra.mxu0 %v1719
      %1778 = vmatprep.subr.mxu0 %v1716
      %1779 = vmatpush1.msra.mxu0 %v1715
      %1780 = vmatprep.subr.mxu0 %v1712
      %1781 = vmatpush1.msra.mxu0 %v1711
      %1782 = vmatprep.subr.mxu0 %v1708
      %1783 = vmatpush1.msra.mxu0 %v1707
      %1784 = vmatprep.subr.mxu0 %v1704
      %1785 = vmatpush1.msra.mxu0 %v1703
      %1786 = vmatprep.subr.mxu0 %v1700
      %1787 = vmatpush1.msra.mxu0 %v1699
      %1788 = vmatprep.subr.mxu0 %v1696
      %1789 = vmatpush1.msra.mxu0 %v1695
      %1790 = vmatprep.subr.mxu0 %v1692
      %1791 = vmatpush1.msra.mxu0 %v1691
      %1792 = vmatprep.subr.mxu0 %v1688
      %1793 = vmatpush1.msra.mxu0 %v1687
      %1794 = vmatprep.subr.mxu0 0.0
      %1795 = vmatpush2.msra.mxu0 0.0
      %1796 = vmatprep.subr.mxu0 0.0
      %1797 = vmatpush2.msra.mxu0 0.0
      %1798 = vmatprep.subr.mxu0 0.0
      %1799 = vmatpush2.msra.mxu0 0.0
      %1800 = vmatprep.subr.mxu0 0.0
      %1801 = vmatpush2.msra.mxu0 0.0
      %1802 = vmatprep.subr.mxu0 0.0
      %1803 = vmatpush2.msra.mxu0 0.0
      %1804 = vmatprep.subr.mxu0 0.0
      %1805 = vmatpush2.msra.mxu0 0.0
      %1806 = vmatprep.subr.mxu0 0.0
      %1807 = vmatpush2.msra.mxu0 0.0
      %1808 = vmatprep.subr.mxu0 0.0
      %1809 = vmatpush2.msra.mxu0 0.0
      %1810 = vmatprep.subr.mxu0 0.0
      %1811 = vmatpush2.msra.mxu0 0.0
      %1812 = vmatprep.subr.mxu0 0.0
      %1813 = vmatpush2.msra.mxu0 0.0
      %1814 = vmatprep.subr.mxu0 0.0
      %1815 = vmatpush2.msra.mxu0 0.0
      %1816 = vmatprep.subr.mxu0 0.0
      %1817 = vmatpush2.msra.mxu0 0.0
      %1818 = vmatprep.subr.mxu0 0.0
      %1819 = vmatpush2.msra.mxu0 0.0
      %1820 = vmatprep.subr.mxu0 0.0
      %1821 = vmatpush2.msra.mxu0 0.0
      %1822 = vmatprep.subr.mxu0 0.0
      %1823 = vmatpush2.msra.mxu0 0.0
      %1824 = vmatprep.subr.mxu0 0.0
      %1825 = vmatpush2.msra.mxu0 0.0
      %1826 = vmatprep.mubr.f32.mxu0 0.0
      %1827 = vmatmul.mubr.f32.gmra.mxu0 %v1760
      %v1828 = vpop.f32.mrf.mxu0
      %v1829 = vadd.f32 %v1595, %v1828
      %v1830 = vpop.f32.mrf.mxu0
      %v1831 = vadd.f32 %v1595, %v1830
      %1832 = vdwg.mxu0
      %1833 = vmatprep.subr.mxu0 0.0
      %1834 = vmatpush1.msra.mxu0 0.0
      %1835 = vmatprep.subr.mxu0 0.0
      %1836 = vmatpush1.msra.mxu0 0.0
      %1837 = vmatprep.subr.mxu0 0.0
      %1838 = vmatpush1.msra.mxu0 0.0
      %1839 = vmatprep.subr.mxu0 0.0
      %1840 = vmatpush1.msra.mxu0 0.0
      %1841 = vmatprep.subr.mxu0 0.0
      %1842 = vmatpush1.msra.mxu0 0.0
      %1843 = vmatprep.subr.mxu0 0.0
      %1844 = vmatpush1.msra.mxu0 0.0
      %1845 = vmatprep.subr.mxu0 0.0
      %1846 = vmatpush1.msra.mxu0 0.0
      %1847 = vmatprep.subr.mxu0 %v1722
      %1848 = vmatpush1.msra.mxu0 %v1721
      %1849 = vmatprep.subr.mxu0 %v1718
      %1850 = vmatpush1.msra.mxu0 %v1717
      %1851 = vmatprep.subr.mxu0 %v1714
      %1852 = vmatpush1.msra.mxu0 %v1713
      %1853 = vmatprep.subr.mxu0 %v1710
      %1854 = vmatpush1.msra.mxu0 %v1709
      %1855 = vmatprep.subr.mxu0 %v1706
      %1856 = vmatpush1.msra.mxu0 %v1705
      %1857 = vmatprep.subr.mxu0 %v1702
      %1858 = vmatpush1.msra.mxu0 %v1701
      %1859 = vmatprep.subr.mxu0 %v1698
      %1860 = vmatpush1.msra.mxu0 %v1697
      %1861 = vmatprep.subr.mxu0 %v1694
      %1862 = vmatpush1.msra.mxu0 %v1693
      %1863 = vmatprep.subr.mxu0 %v1690
      %1864 = vmatpush1.msra.mxu0 %v1689
      %1865 = vmatprep.subr.mxu0 0.0
      %1866 = vmatpush2.msra.mxu0 0.0
      %1867 = vmatprep.subr.mxu0 0.0
      %1868 = vmatpush2.msra.mxu0 0.0
      %1869 = vmatprep.subr.mxu0 0.0
      %1870 = vmatpush2.msra.mxu0 0.0
      %1871 = vmatprep.subr.mxu0 0.0
      %1872 = vmatpush2.msra.mxu0 0.0
      %1873 = vmatprep.subr.mxu0 0.0
      %1874 = vmatpush2.msra.mxu0 0.0
      %1875 = vmatprep.subr.mxu0 0.0
      %1876 = vmatpush2.msra.mxu0 0.0
      %1877 = vmatprep.subr.mxu0 0.0
      %1878 = vmatpush2.msra.mxu0 0.0
      %1879 = vmatprep.subr.mxu0 0.0
      %1880 = vmatpush2.msra.mxu0 0.0
      %1881 = vmatprep.subr.mxu0 0.0
      %1882 = vmatpush2.msra.mxu0 0.0
      %1883 = vmatprep.subr.mxu0 0.0
      %1884 = vmatpush2.msra.mxu0 0.0
      %1885 = vmatprep.subr.mxu0 0.0
      %1886 = vmatpush2.msra.mxu0 0.0
      %1887 = vmatprep.subr.mxu0 0.0
      %1888 = vmatpush2.msra.mxu0 0.0
      %1889 = vmatprep.subr.mxu0 0.0
      %1890 = vmatpush2.msra.mxu0 0.0
      %1891 = vmatprep.subr.mxu0 0.0
      %1892 = vmatpush2.msra.mxu0 0.0
      %1893 = vmatprep.subr.mxu0 0.0
      %1894 = vmatpush2.msra.mxu0 0.0
      %1895 = vmatprep.subr.mxu0 0.0
      %1896 = vmatpush2.msra.mxu0 0.0
      %1897 = vmatprep.mubr.f32.mxu0 0.0
      %1898 = vmatmul.mubr.f32.gmra.mxu0 %v1760
      %v1899 = vpop.f32.mrf.mxu0
      %v1900 = vadd.f32 %v1595, %v1899
      %v1901 = vpop.f32.mrf.mxu0
      %v1902 = vadd.f32 %v1595, %v1901
      %1903 = vdwg.mxu0
      %v1904 = vmax.f32 %v1829, 0.0
      %v1905 = vmax.f32 %v1831, 0.0
      %v1906 = vmax.f32 %v1900, 0.0
      %v1907 = vmax.f32 %v1902, 0.0
      %v1908 = vld [vmem:[#allocation2 + $0x70] sm:$0xff]
      %v1909 = vld [vmem:[#allocation2 + $0x78] sm:$0xff]
      %v1910 = vld [vmem:[#allocation2 + $0x80] sm:$0xff]
      %v1911 = vld [vmem:[#allocation2 + $0x88] sm:$0xff]
      %v1912 = vld [vmem:[#allocation2 + $0x90] sm:$0xff]
      %v1913 = vld [vmem:[#allocation2 + $0x98] sm:$0xff]
      %1920 = vrot.lane.b32.xlu0 %v1908, 126
      %v1921 = vpop.permute.xlu0 %1920
      %1922 = vrot.lane.b32.xlu0 %v1909, 126
      %v1923 = vpop.permute.xlu0 %1922
      %1924 = vrot.lane.b32.xlu0 %v1910, 126
      %v1925 = vpop.permute.xlu0 %1924
      %1926 = vrot.lane.b32.xlu0 %v1911, 126
      %v1927 = vpop.permute.xlu0 %1926
      %1928 = vrot.lane.b32.xlu0 %v1912, 126
      %v1929 = vpop.permute.xlu0 %1928
      %1930 = vrot.lane.b32.xlu0 %v1913, 126
      %v1931 = vpop.permute.xlu0 %1930
      %v1932 = vsel %vm336, %v1921, %v1923
      %v1933 = vsel %vm336, %v1923, %v1925
      %v1934 = vsel %vm336, %v1925, %v1927
      %v1935 = vsel %vm336, %v1927, %v1929
      %v1936 = vsel %vm336, %v1929, %v1931
      %1937 = vrot.lane.b32.xlu0 %v1908, 124
      %v1938 = vpop.permute.xlu0 %1937
      %1939 = vrot.lane.b32.xlu0 %v1909, 124
      %v1940 = vpop.permute.xlu0 %1939
      %1941 = vrot.lane.b32.xlu0 %v1910, 124
      %v1942 = vpop.permute.xlu0 %1941
      %1943 = vrot.lane.b32.xlu0 %v1911, 124
      %v1944 = vpop.permute.xlu0 %1943
      %1945 = vrot.lane.b32.xlu0 %v1912, 124
      %v1946 = vpop.permute.xlu0 %1945
      %1947 = vrot.lane.b32.xlu0 %v1913, 124
      %v1948 = vpop.permute.xlu0 %1947
      %v1949 = vsel %vm874, %v1938, %v1940
      %v1950 = vsel %vm874, %v1940, %v1942
      %v1951 = vsel %vm874, %v1942, %v1944
      %v1952 = vsel %vm874, %v1944, %v1946
      %v1953 = vsel %vm874, %v1946, %v1948
      %1954 = vrot.lane.b32.xlu0 %v1908, 80
      %v1955 = vpop.permute.xlu0 %1954
      %1956 = vrot.lane.b32.xlu0 %v1909, 80
      %v1957 = vpop.permute.xlu0 %1956
      %1958 = vrot.lane.b32.xlu0 %v1910, 80
      %v1959 = vpop.permute.xlu0 %1958
      %1960 = vrot.lane.b32.xlu0 %v1911, 80
      %v1961 = vpop.permute.xlu0 %1960
      %1962 = vrot.lane.b32.xlu0 %v1912, 80
      %v1963 = vpop.permute.xlu0 %1962
      %1964 = vrot.lane.b32.xlu0 %v1913, 80
      %v1965 = vpop.permute.xlu0 %1964
      %v1966 = vsel %vm400, %v1955, %v1957
      %v1967 = vsel %vm400, %v1957, %v1959
      %v1968 = vsel %vm400, %v1959, %v1961
      %v1969 = vsel %vm400, %v1961, %v1963
      %v1970 = vsel %vm400, %v1963, %v1965
      %1971 = vrot.lane.b32.xlu0 %v1909, 78
      %v1972 = vpop.permute.xlu0 %1971
      %1973 = vrot.lane.b32.xlu0 %v1910, 78
      %v1974 = vpop.permute.xlu0 %1973
      %1975 = vrot.lane.b32.xlu0 %v1911, 78
      %v1976 = vpop.permute.xlu0 %1975
      %1977 = vrot.lane.b32.xlu0 %v1912, 78
      %v1978 = vpop.permute.xlu0 %1977
      %1979 = vrot.lane.b32.xlu0 %v1913, 78
      %v1980 = vpop.permute.xlu0 %1979
      %v1981 = vsel %vm430, %v1972, %v1974
      %v1982 = vsel %vm430, %v1974, %v1976
      %v1983 = vsel %vm430, %v1976, %v1978
      %v1984 = vsel %vm430, %v1978, %v1980
      %1985 = vrot.lane.b32.xlu0 %v1909, 76
      %v1986 = vpop.permute.xlu0 %1985
      %1987 = vrot.lane.b32.xlu0 %v1910, 76
      %v1988 = vpop.permute.xlu0 %1987
      %1989 = vrot.lane.b32.xlu0 %v1911, 76
      %v1990 = vpop.permute.xlu0 %1989
      %1991 = vrot.lane.b32.xlu0 %v1912, 76
      %v1992 = vpop.permute.xlu0 %1991
      %1993 = vrot.lane.b32.xlu0 %v1913, 76
      %v1994 = vpop.permute.xlu0 %1993
      %v1995 = vsel %vm893, %v1986, %v1988
      %v1996 = vsel %vm893, %v1988, %v1990
      %v1997 = vsel %vm893, %v1990, %v1992
      %v1998 = vsel %vm893, %v1992, %v1994
      %1999 = vrot.lane.b32.xlu0 %v1909, 32
      %v2000 = vpop.permute.xlu0 %1999
      %2001 = vrot.lane.b32.xlu0 %v1910, 32
      %v2002 = vpop.permute.xlu0 %2001
      %2003 = vrot.lane.b32.xlu0 %v1911, 32
      %v2004 = vpop.permute.xlu0 %2003
      %2005 = vrot.lane.b32.xlu0 %v1912, 32
      %v2006 = vpop.permute.xlu0 %2005
      %2007 = vrot.lane.b32.xlu0 %v1913, 32
      %v2008 = vpop.permute.xlu0 %2007
      %v2009 = vsel %vm908, %v2000, %v2002
      %v2010 = vsel %vm908, %v2002, %v2004
      %v2011 = vsel %vm908, %v2004, %v2006
      %v2012 = vsel %vm908, %v2006, %v2008
      %2013 = vrot.lane.b32.xlu0 %v1909, 30
      %v2014 = vpop.permute.xlu0 %2013
      %2015 = vrot.lane.b32.xlu0 %v1910, 30
      %v2016 = vpop.permute.xlu0 %2015
      %2017 = vrot.lane.b32.xlu0 %v1911, 30
      %v2018 = vpop.permute.xlu0 %2017
      %2019 = vrot.lane.b32.xlu0 %v1912, 30
      %v2020 = vpop.permute.xlu0 %2019
      %2021 = vrot.lane.b32.xlu0 %v1913, 30
      %v2022 = vpop.permute.xlu0 %2021
      %v2023 = vsel %vm923, %v2014, %v2016
      %v2024 = vsel %vm923, %v2016, %v2018
      %v2025 = vsel %vm923, %v2018, %v2020
      %v2026 = vsel %vm923, %v2020, %v2022
      %2027 = vrot.lane.b32.xlu0 %v1909, 28
      %v2028 = vpop.permute.xlu0 %2027
      %2029 = vrot.lane.b32.xlu0 %v1910, 28
      %v2030 = vpop.permute.xlu0 %2029
      %2031 = vrot.lane.b32.xlu0 %v1911, 28
      %v2032 = vpop.permute.xlu0 %2031
      %2033 = vrot.lane.b32.xlu0 %v1912, 28
      %v2034 = vpop.permute.xlu0 %2033
      %2035 = vrot.lane.b32.xlu0 %v1913, 28
      %v2036 = vpop.permute.xlu0 %2035
      %v2037 = vsel %vm938, %v2028, %v2030
      %v2038 = vsel %vm938, %v2030, %v2032
      %v2039 = vsel %vm938, %v2032, %v2034
      %v2040 = vsel %vm938, %v2034, %v2036
      %v2041 = vld [vmem:[%s1 + $0x20] sm:$0xff]
      %v2042 = vld [vmem:[%s2 + $0x20] sm:$0xff]
      %2044 = vset.pattern.permute.xlu0 0
      %2045 = vperm.xlu0 %2044, %v2042
      %v2046 = vpop.permute.xlu0 %2045
      %2048 = vrot.lane.b32.xlu0 %v1908, 50
      %v2049 = vpop.permute.xlu0 %2048
      %2050 = vrot.lane.b32.xlu0 %v1909, 50
      %v2051 = vpop.permute.xlu0 %2050
      %2052 = vrot.lane.b32.xlu0 %v1910, 50
      %v2053 = vpop.permute.xlu0 %2052
      %2054 = vrot.lane.b32.xlu0 %v1911, 50
      %v2055 = vpop.permute.xlu0 %2054
      %2056 = vrot.lane.b32.xlu0 %v1912, 50
      %v2057 = vpop.permute.xlu0 %2056
      %2058 = vrot.lane.b32.xlu0 %v1932, 50
      %v2059 = vpop.permute.xlu0 %2058
      %2060 = vrot.lane.b32.xlu0 %v1933, 50
      %v2061 = vpop.permute.xlu0 %2060
      %2062 = vrot.lane.b32.xlu0 %v1934, 50
      %v2063 = vpop.permute.xlu0 %2062
      %2064 = vrot.lane.b32.xlu0 %v1935, 50
      %v2065 = vpop.permute.xlu0 %2064
      %2066 = vrot.lane.b32.xlu0 %v1936, 50
      %v2067 = vpop.permute.xlu0 %2066
      %2068 = vrot.lane.b32.xlu0 %v1949, 50
      %v2069 = vpop.permute.xlu0 %2068
      %2070 = vrot.lane.b32.xlu0 %v1950, 50
      %v2071 = vpop.permute.xlu0 %2070
      %2072 = vrot.lane.b32.xlu0 %v1951, 50
      %v2073 = vpop.permute.xlu0 %2072
      %2074 = vrot.lane.b32.xlu0 %v1952, 50
      %v2075 = vpop.permute.xlu0 %2074
      %2076 = vrot.lane.b32.xlu0 %v1953, 50
      %v2077 = vpop.permute.xlu0 %2076
      %2078 = vrot.lane.b32.xlu0 %v1966, 50
      %v2079 = vpop.permute.xlu0 %2078
      %2080 = vrot.lane.b32.xlu0 %v1967, 50
      %v2081 = vpop.permute.xlu0 %2080
      %2082 = vrot.lane.b32.xlu0 %v1968, 50
      %v2083 = vpop.permute.xlu0 %2082
      %2084 = vrot.lane.b32.xlu0 %v1969, 50
      %v2085 = vpop.permute.xlu0 %2084
      %2086 = vrot.lane.b32.xlu0 %v1970, 50
      %v2087 = vpop.permute.xlu0 %2086
      %2088 = vrot.lane.b32.xlu0 %v1972, 50
      %v2089 = vpop.permute.xlu0 %2088
      %2090 = vrot.lane.b32.xlu0 %v1981, 50
      %v2091 = vpop.permute.xlu0 %2090
      %2092 = vrot.lane.b32.xlu0 %v1982, 50
      %v2093 = vpop.permute.xlu0 %2092
      %2094 = vrot.lane.b32.xlu0 %v1983, 50
      %v2095 = vpop.permute.xlu0 %2094
      %2096 = vrot.lane.b32.xlu0 %v1984, 50
      %v2097 = vpop.permute.xlu0 %2096
      %2098 = vrot.lane.b32.xlu0 %v1986, 50
      %v2099 = vpop.permute.xlu0 %2098
      %2100 = vrot.lane.b32.xlu0 %v1995, 50
      %v2101 = vpop.permute.xlu0 %2100
      %2102 = vrot.lane.b32.xlu0 %v1996, 50
      %v2103 = vpop.permute.xlu0 %2102
      %2104 = vrot.lane.b32.xlu0 %v1997, 50
      %v2105 = vpop.permute.xlu0 %2104
      %2106 = vrot.lane.b32.xlu0 %v1998, 50
      %v2107 = vpop.permute.xlu0 %2106
      %2108 = vrot.lane.b32.xlu0 %v2000, 50
      %v2109 = vpop.permute.xlu0 %2108
      %2110 = vrot.lane.b32.xlu0 %v2009, 50
      %v2111 = vpop.permute.xlu0 %2110
      %2112 = vrot.lane.b32.xlu0 %v2010, 50
      %v2113 = vpop.permute.xlu0 %2112
      %2114 = vrot.lane.b32.xlu0 %v2011, 50
      %v2115 = vpop.permute.xlu0 %2114
      %2116 = vrot.lane.b32.xlu0 %v2012, 50
      %v2117 = vpop.permute.xlu0 %2116
      %2118 = vrot.lane.b32.xlu0 %v2014, 50
      %v2119 = vpop.permute.xlu0 %2118
      %2120 = vrot.lane.b32.xlu0 %v2023, 50
      %v2121 = vpop.permute.xlu0 %2120
      %2122 = vrot.lane.b32.xlu0 %v2024, 50
      %v2123 = vpop.permute.xlu0 %2122
      %2124 = vrot.lane.b32.xlu0 %v2025, 50
      %v2125 = vpop.permute.xlu0 %2124
      %2126 = vrot.lane.b32.xlu0 %v2026, 50
      %v2127 = vpop.permute.xlu0 %2126
      %2128 = vrot.lane.b32.xlu0 %v2028, 50
      %v2129 = vpop.permute.xlu0 %2128
      %2130 = vrot.lane.b32.xlu0 %v2037, 50
      %v2131 = vpop.permute.xlu0 %2130
      %2132 = vrot.lane.b32.xlu0 %v2038, 50
      %v2133 = vpop.permute.xlu0 %2132
      %2134 = vrot.lane.b32.xlu0 %v2039, 50
      %v2135 = vpop.permute.xlu0 %2134
      %2136 = vrot.lane.b32.xlu0 %v2040, 50
      %v2137 = vpop.permute.xlu0 %2136
      %v2138 = vsel %vm1065, %v2049, %v2051
      %v2139 = vsel %vm1065, %v2051, %v2053
      %v2140 = vsel %vm1065, %v2053, %v2055
      %v2141 = vsel %vm1065, %v2055, %v2057
      %v2142 = vsel %vm1065, %v2059, %v2061
      %v2143 = vsel %vm1065, %v2061, %v2063
      %v2144 = vsel %vm1065, %v2063, %v2065
      %v2145 = vsel %vm1065, %v2065, %v2067
      %v2146 = vsel %vm1065, %v2069, %v2071
      %v2147 = vsel %vm1065, %v2071, %v2073
      %v2148 = vsel %vm1065, %v2073, %v2075
      %v2149 = vsel %vm1065, %v2075, %v2077
      %v2150 = vsel %vm1065, %v2079, %v2081
      %v2151 = vsel %vm1065, %v2081, %v2083
      %v2152 = vsel %vm1065, %v2083, %v2085
      %v2153 = vsel %vm1065, %v2085, %v2087
      %v2154 = vsel %vm1065, %v2089, %v2091
      %v2155 = vsel %vm1065, %v2091, %v2093
      %v2156 = vsel %vm1065, %v2093, %v2095
      %v2157 = vsel %vm1065, %v2095, %v2097
      %v2158 = vsel %vm1065, %v2099, %v2101
      %v2159 = vsel %vm1065, %v2101, %v2103
      %v2160 = vsel %vm1065, %v2103, %v2105
      %v2161 = vsel %vm1065, %v2105, %v2107
      %v2162 = vsel %vm1065, %v2109, %v2111
      %v2163 = vsel %vm1065, %v2111, %v2113
      %v2164 = vsel %vm1065, %v2113, %v2115
      %v2165 = vsel %vm1065, %v2115, %v2117
      %v2166 = vsel %vm1065, %v2119, %v2121
      %v2167 = vsel %vm1065, %v2121, %v2123
      %v2168 = vsel %vm1065, %v2123, %v2125
      %v2169 = vsel %vm1065, %v2125, %v2127
      %v2170 = vsel %vm1065, %v2129, %v2131
      %v2171 = vsel %vm1065, %v2131, %v2133
      %v2172 = vsel %vm1065, %v2133, %v2135
      %v2173 = vsel %vm1065, %v2135, %v2137
      %v2211 = vsel %vm641, %v2041, 0
      %2213 = vmatprep.subr.mxu0 0.0
      %2214 = vmatpush1.msra.mxu0 0.0
      %2215 = vmatprep.subr.mxu0 0.0
      %2216 = vmatpush1.msra.mxu0 0.0
      %2217 = vmatprep.subr.mxu0 0.0
      %2218 = vmatpush1.msra.mxu0 0.0
      %2219 = vmatprep.subr.mxu0 0.0
      %2220 = vmatpush1.msra.mxu0 0.0
      %2221 = vmatprep.subr.mxu0 0.0
      %2222 = vmatpush1.msra.mxu0 0.0
      %2223 = vmatprep.subr.mxu0 0.0
      %2224 = vmatpush1.msra.mxu0 0.0
      %2225 = vmatprep.subr.mxu0 0.0
      %2226 = vmatpush1.msra.mxu0 0.0
      %2227 = vmatprep.subr.mxu0 %v2171
      %2228 = vmatpush1.msra.mxu0 %v2170
      %2229 = vmatprep.subr.mxu0 %v2167
      %2230 = vmatpush1.msra.mxu0 %v2166
      %2231 = vmatprep.subr.mxu0 %v2163
      %2232 = vmatpush1.msra.mxu0 %v2162
      %2233 = vmatprep.subr.mxu0 %v2159
      %2234 = vmatpush1.msra.mxu0 %v2158
      %2235 = vmatprep.subr.mxu0 %v2155
      %2236 = vmatpush1.msra.mxu0 %v2154
      %2237 = vmatprep.subr.mxu0 %v2151
      %2238 = vmatpush1.msra.mxu0 %v2150
      %2239 = vmatprep.subr.mxu0 %v2147
      %2240 = vmatpush1.msra.mxu0 %v2146
      %2241 = vmatprep.subr.mxu0 %v2143
      %2242 = vmatpush1.msra.mxu0 %v2142
      %2243 = vmatprep.subr.mxu0 %v2139
      %2244 = vmatpush1.msra.mxu0 %v2138
      %2245 = vmatprep.subr.mxu0 0.0
      %2246 = vmatpush2.msra.mxu0 0.0
      %2247 = vmatprep.subr.mxu0 0.0
      %2248 = vmatpush2.msra.mxu0 0.0
      %2249 = vmatprep.subr.mxu0 0.0
      %2250 = vmatpush2.msra.mxu0 0.0
      %2251 = vmatprep.subr.mxu0 0.0
      %2252 = vmatpush2.msra.mxu0 0.0
      %2253 = vmatprep.subr.mxu0 0.0
      %2254 = vmatpush2.msra.mxu0 0.0
      %2255 = vmatprep.subr.mxu0 0.0
      %2256 = vmatpush2.msra.mxu0 0.0
      %2257 = vmatprep.subr.mxu0 0.0
      %2258 = vmatpush2.msra.mxu0 0.0
      %2259 = vmatprep.subr.mxu0 0.0
      %2260 = vmatpush2.msra.mxu0 0.0
      %2261 = vmatprep.subr.mxu0 0.0
      %2262 = vmatpush2.msra.mxu0 0.0
      %2263 = vmatprep.subr.mxu0 0.0
      %2264 = vmatpush2.msra.mxu0 0.0
      %2265 = vmatprep.subr.mxu0 0.0
      %2266 = vmatpush2.msra.mxu0 0.0
      %2267 = vmatprep.subr.mxu0 0.0
      %2268 = vmatpush2.msra.mxu0 0.0
      %2269 = vmatprep.subr.mxu0 0.0
      %2270 = vmatpush2.msra.mxu0 0.0
      %2271 = vmatprep.subr.mxu0 0.0
      %2272 = vmatpush2.msra.mxu0 0.0
      %2273 = vmatprep.subr.mxu0 0.0
      %2274 = vmatpush2.msra.mxu0 0.0
      %2275 = vmatprep.subr.mxu0 0.0
      %2276 = vmatpush2.msra.mxu0 0.0
      %2277 = vmatprep.mubr.f32.mxu0 0.0
      %2278 = vmatmul.mubr.f32.gmra.mxu0 %v2211
      %v2279 = vpop.f32.mrf.mxu0
      %v2280 = vadd.f32 %v2046, %v2279
      %v2281 = vpop.f32.mrf.mxu0
      %v2282 = vadd.f32 %v2046, %v2281
      %2283 = vdwg.mxu0
      %2284 = vmatprep.subr.mxu0 0.0
      %2285 = vmatpush1.msra.mxu0 0.0
      %2286 = vmatprep.subr.mxu0 0.0
      %2287 = vmatpush1.msra.mxu0 0.0
      %2288 = vmatprep.subr.mxu0 0.0
      %2289 = vmatpush1.msra.mxu0 0.0
      %2290 = vmatprep.subr.mxu0 0.0
      %2291 = vmatpush1.msra.mxu0 0.0
      %2292 = vmatprep.subr.mxu0 0.0
      %2293 = vmatpush1.msra.mxu0 0.0
      %2294 = vmatprep.subr.mxu0 0.0
      %2295 = vmatpush1.msra.mxu0 0.0
      %2296 = vmatprep.subr.mxu0 0.0
      %2297 = vmatpush1.msra.mxu0 0.0
      %2298 = vmatprep.subr.mxu0 %v2173
      %2299 = vmatpush1.msra.mxu0 %v2172
      %2300 = vmatprep.subr.mxu0 %v2169
      %2301 = vmatpush1.msra.mxu0 %v2168
      %2302 = vmatprep.subr.mxu0 %v2165
      %2303 = vmatpush1.msra.mxu0 %v2164
      %2304 = vmatprep.subr.mxu0 %v2161
      %2305 = vmatpush1.msra.mxu0 %v2160
      %2306 = vmatprep.subr.mxu0 %v2157
      %2307 = vmatpush1.msra.mxu0 %v2156
      %2308 = vmatprep.subr.mxu0 %v2153
      %2309 = vmatpush1.msra.mxu0 %v2152
      %2310 = vmatprep.subr.mxu0 %v2149
      %2311 = vmatpush1.msra.mxu0 %v2148
      %2312 = vmatprep.subr.mxu0 %v2145
      %2313 = vmatpush1.msra.mxu0 %v2144
      %2314 = vmatprep.subr.mxu0 %v2141
      %2315 = vmatpush1.msra.mxu0 %v2140
      %2316 = vmatprep.subr.mxu0 0.0
      %2317 = vmatpush2.msra.mxu0 0.0
      %2318 = vmatprep.subr.mxu0 0.0
      %2319 = vmatpush2.msra.mxu0 0.0
      %2320 = vmatprep.subr.mxu0 0.0
      %2321 = vmatpush2.msra.mxu0 0.0
      %2322 = vmatprep.subr.mxu0 0.0
      %2323 = vmatpush2.msra.mxu0 0.0
      %2324 = vmatprep.subr.mxu0 0.0
      %2325 = vmatpush2.msra.mxu0 0.0
      %2326 = vmatprep.subr.mxu0 0.0
      %2327 = vmatpush2.msra.mxu0 0.0
      %2328 = vmatprep.subr.mxu0 0.0
      %2329 = vmatpush2.msra.mxu0 0.0
      %2330 = vmatprep.subr.mxu0 0.0
      %2331 = vmatpush2.msra.mxu0 0.0
      %2332 = vmatprep.subr.mxu0 0.0
      %2333 = vmatpush2.msra.mxu0 0.0
      %2334 = vmatprep.subr.mxu0 0.0
      %2335 = vmatpush2.msra.mxu0 0.0
      %2336 = vmatprep.subr.mxu0 0.0
      %2337 = vmatpush2.msra.mxu0 0.0
      %2338 = vmatprep.subr.mxu0 0.0
      %2339 = vmatpush2.msra.mxu0 0.0
      %2340 = vmatprep.subr.mxu0 0.0
      %2341 = vmatpush2.msra.mxu0 0.0
      %2342 = vmatprep.subr.mxu0 0.0
      %2343 = vmatpush2.msra.mxu0 0.0
      %2344 = vmatprep.subr.mxu0 0.0
      %2345 = vmatpush2.msra.mxu0 0.0
      %2346 = vmatprep.subr.mxu0 0.0
      %2347 = vmatpush2.msra.mxu0 0.0
      %2348 = vmatprep.mubr.f32.mxu0 0.0
      %2349 = vmatmul.mubr.f32.gmra.mxu0 %v2211
      %v2350 = vpop.f32.mrf.mxu0
      %v2351 = vadd.f32 %v2046, %v2350
      %v2352 = vpop.f32.mrf.mxu0
      %v2353 = vadd.f32 %v2046, %v2352
      %2354 = vdwg.mxu0
      %v2355 = vmax.f32 %v2280, 0.0
      %v2356 = vmax.f32 %v2282, 0.0
      %v2357 = vmax.f32 %v2351, 0.0
      %v2358 = vmax.f32 %v2353, 0.0
      %v2359 = vadd.f32 %v1904, %v2355
      %v2360 = vadd.f32 %v1905, %v2356
      %v2361 = vadd.f32 %v1906, %v2357
      %v2362 = vadd.f32 %v1907, %v2358
      %v2363 = vld [vmem:[#allocation2 + $0xa8] sm:$0xff]
      %v2364 = vld [vmem:[#allocation2 + $0xb0] sm:$0xff]
      %v2365 = vld [vmem:[#allocation2 + $0xb8] sm:$0xff]
      %v2366 = vld [vmem:[#allocation2 + $0xc0] sm:$0xff]
      %v2367 = vld [vmem:[#allocation2 + $0xc8] sm:$0xff]
      %v2368 = vld [vmem:[#allocation2 + $0xd0] sm:$0xff]
      %v2369 = vld [vmem:[#allocation2 + $0xd8] sm:$0xff]
      %2375 = vrot.lane.b32.xlu0 %v2363, 124
      %v2376 = vpop.permute.xlu0 %2375
      %2377 = vrot.lane.b32.xlu0 %v2364, 124
      %v2378 = vpop.permute.xlu0 %2377
      %2379 = vrot.lane.b32.xlu0 %v2365, 124
      %v2380 = vpop.permute.xlu0 %2379
      %2381 = vrot.lane.b32.xlu0 %v2366, 124
      %v2382 = vpop.permute.xlu0 %2381
      %2383 = vrot.lane.b32.xlu0 %v2367, 124
      %v2384 = vpop.permute.xlu0 %2383
      %v2385 = vsel %vm874, %v2376, %v2378
      %v2386 = vsel %vm874, %v2378, %v2380
      %v2387 = vsel %vm874, %v2380, %v2382
      %v2388 = vsel %vm874, %v2382, %v2384
      %2389 = vrot.lane.b32.xlu0 %v2363, 120
      %v2390 = vpop.permute.xlu0 %2389
      %2391 = vrot.lane.b32.xlu0 %v2364, 120
      %v2392 = vpop.permute.xlu0 %2391
      %2393 = vrot.lane.b32.xlu0 %v2365, 120
      %v2394 = vpop.permute.xlu0 %2393
      %2395 = vrot.lane.b32.xlu0 %v2366, 120
      %v2396 = vpop.permute.xlu0 %2395
      %2397 = vrot.lane.b32.xlu0 %v2367, 120
      %v2398 = vpop.permute.xlu0 %2397
      %vm2399 = vcmask 982016
      %v2400 = vsel %vm2399, %v2390, %v2392
      %v2401 = vsel %vm2399, %v2392, %v2394
      %v2402 = vsel %vm2399, %v2394, %v2396
      %v2403 = vsel %vm2399, %v2396, %v2398
      %2405 = vrot.lane.b32.xlu0 %v2363, 32
      %v2406 = vpop.permute.xlu0 %2405
      %2407 = vrot.lane.b32.xlu0 %v2364, 32
      %v2408 = vpop.permute.xlu0 %2407
      %2409 = vrot.lane.b32.xlu0 %v2365, 32
      %v2410 = vpop.permute.xlu0 %2409
      %2411 = vrot.lane.b32.xlu0 %v2366, 32
      %v2412 = vpop.permute.xlu0 %2411
      %2413 = vrot.lane.b32.xlu0 %v2367, 32
      %v2414 = vpop.permute.xlu0 %2413
      %2415 = vrot.lane.b32.xlu0 %v2368, 32
      %v2416 = vpop.permute.xlu0 %2415
      %v2417 = vsel %vm908, %v2406, %v2408
      %v2418 = vsel %vm908, %v2408, %v2410
      %v2419 = vsel %vm908, %v2410, %v2412
      %v2420 = vsel %vm908, %v2412, %v2414
      %v2421 = vsel %vm908, %v2414, %v2416
      %2422 = vrot.lane.b32.xlu0 %v2364, 28
      %v2423 = vpop.permute.xlu0 %2422
      %2424 = vrot.lane.b32.xlu0 %v2365, 28
      %v2425 = vpop.permute.xlu0 %2424
      %2426 = vrot.lane.b32.xlu0 %v2366, 28
      %v2427 = vpop.permute.xlu0 %2426
      %2428 = vrot.lane.b32.xlu0 %v2367, 28
      %v2429 = vpop.permute.xlu0 %2428
      %2430 = vrot.lane.b32.xlu0 %v2368, 28
      %v2431 = vpop.permute.xlu0 %2430
      %v2432 = vsel %vm938, %v2423, %v2425
      %v2433 = vsel %vm938, %v2425, %v2427
      %v2434 = vsel %vm938, %v2427, %v2429
      %v2435 = vsel %vm938, %v2429, %v2431
      %2436 = vrot.lane.b32.xlu0 %v2364, 24
      %v2437 = vpop.permute.xlu0 %2436
      %2438 = vrot.lane.b32.xlu0 %v2365, 24
      %v2439 = vpop.permute.xlu0 %2438
      %2440 = vrot.lane.b32.xlu0 %v2366, 24
      %v2441 = vpop.permute.xlu0 %2440
      %2442 = vrot.lane.b32.xlu0 %v2367, 24
      %v2443 = vpop.permute.xlu0 %2442
      %2444 = vrot.lane.b32.xlu0 %v2368, 24
      %v2445 = vpop.permute.xlu0 %2444
      %vm2446 = vcmask 195584
      %v2447 = vsel %vm2446, %v2437, %v2439
      %v2448 = vsel %vm2446, %v2439, %v2441
      %v2449 = vsel %vm2446, %v2441, %v2443
      %v2450 = vsel %vm2446, %v2443, %v2445
      %2452 = vrot.lane.b32.xlu0 %v2364, 64
      %v2453 = vpop.permute.xlu0 %2452
      %2454 = vrot.lane.b32.xlu0 %v2365, 64
      %v2455 = vpop.permute.xlu0 %2454
      %2456 = vrot.lane.b32.xlu0 %v2366, 64
      %v2457 = vpop.permute.xlu0 %2456
      %2458 = vrot.lane.b32.xlu0 %v2367, 64
      %v2459 = vpop.permute.xlu0 %2458
      %2460 = vrot.lane.b32.xlu0 %v2368, 64
      %v2461 = vpop.permute.xlu0 %2460
      %2462 = vrot.lane.b32.xlu0 %v2369, 64
      %v2463 = vpop.permute.xlu0 %2462
      %v2464 = vsel %vm204, %v2453, %v2455
      %v2465 = vsel %vm204, %v2455, %v2457
      %v2466 = vsel %vm204, %v2457, %v2459
      %v2467 = vsel %vm204, %v2459, %v2461
      %v2468 = vsel %vm204, %v2461, %v2463
      %2469 = vrot.lane.b32.xlu0 %v2364, 60
      %v2470 = vpop.permute.xlu0 %2469
      %2471 = vrot.lane.b32.xlu0 %v2365, 60
      %v2472 = vpop.permute.xlu0 %2471
      %2473 = vrot.lane.b32.xlu0 %v2366, 60
      %v2474 = vpop.permute.xlu0 %2473
      %2475 = vrot.lane.b32.xlu0 %v2367, 60
      %v2476 = vpop.permute.xlu0 %2475
      %2477 = vrot.lane.b32.xlu0 %v2368, 60
      %v2478 = vpop.permute.xlu0 %2477
      %2479 = vrot.lane.b32.xlu0 %v2369, 60
      %v2480 = vpop.permute.xlu0 %2479
      %vm2481 = vcmask 490496
      %v2482 = vsel %vm2481, %v2470, %v2472
      %v2483 = vsel %vm2481, %v2472, %v2474
      %v2484 = vsel %vm2481, %v2474, %v2476
      %v2485 = vsel %vm2481, %v2476, %v2478
      %v2486 = vsel %vm2481, %v2478, %v2480
      %2487 = vrot.lane.b32.xlu0 %v2364, 56
      %v2488 = vpop.permute.xlu0 %2487
      %2489 = vrot.lane.b32.xlu0 %v2365, 56
      %v2490 = vpop.permute.xlu0 %2489
      %2491 = vrot.lane.b32.xlu0 %v2366, 56
      %v2492 = vpop.permute.xlu0 %2491
      %2493 = vrot.lane.b32.xlu0 %v2367, 56
      %v2494 = vpop.permute.xlu0 %2493
      %2495 = vrot.lane.b32.xlu0 %v2368, 56
      %v2496 = vpop.permute.xlu0 %2495
      %2497 = vrot.lane.b32.xlu0 %v2369, 56
      %v2498 = vpop.permute.xlu0 %2497
      %vm2499 = vcmask 457728
      %v2500 = vsel %vm2499, %v2488, %v2490
      %v2501 = vsel %vm2499, %v2490, %v2492
      %v2502 = vsel %vm2499, %v2492, %v2494
      %v2503 = vsel %vm2499, %v2494, %v2496
      %v2504 = vsel %vm2499, %v2496, %v2498
      %v2505 = vld [vmem:[%s1 + $0x28] sm:$0xff]
      %v2506 = vld [vmem:[%s2 + $0x28] sm:$0xff]
      %2508 = vset.pattern.permute.xlu0 0
      %2509 = vperm.xlu0 %2508, %v2506
      %v2510 = vpop.permute.xlu0 %2509
      %2512 = vrot.lane.b32.xlu0 %v2363, 100
      %v2513 = vpop.permute.xlu0 %2512
      %2514 = vrot.lane.b32.xlu0 %v2364, 100
      %v2515 = vpop.permute.xlu0 %2514
      %2516 = vrot.lane.b32.xlu0 %v2365, 100
      %v2517 = vpop.permute.xlu0 %2516
      %2518 = vrot.lane.b32.xlu0 %v2366, 100
      %v2519 = vpop.permute.xlu0 %2518
      %2520 = vrot.lane.b32.xlu0 %v2367, 100
      %v2521 = vpop.permute.xlu0 %2520
      %2522 = vrot.lane.b32.xlu0 %v2385, 100
      %v2523 = vpop.permute.xlu0 %2522
      %2524 = vrot.lane.b32.xlu0 %v2386, 100
      %v2525 = vpop.permute.xlu0 %2524
      %2526 = vrot.lane.b32.xlu0 %v2387, 100
      %v2527 = vpop.permute.xlu0 %2526
      %2528 = vrot.lane.b32.xlu0 %v2388, 100
      %v2529 = vpop.permute.xlu0 %2528
      %2530 = vrot.lane.b32.xlu0 %v2384, 100
      %v2531 = vpop.permute.xlu0 %2530
      %2532 = vrot.lane.b32.xlu0 %v2400, 100
      %v2533 = vpop.permute.xlu0 %2532
      %2534 = vrot.lane.b32.xlu0 %v2401, 100
      %v2535 = vpop.permute.xlu0 %2534
      %2536 = vrot.lane.b32.xlu0 %v2402, 100
      %v2537 = vpop.permute.xlu0 %2536
      %2538 = vrot.lane.b32.xlu0 %v2403, 100
      %v2539 = vpop.permute.xlu0 %2538
      %2540 = vrot.lane.b32.xlu0 %v2398, 100
      %v2541 = vpop.permute.xlu0 %2540
      %2542 = vrot.lane.b32.xlu0 %v2417, 100
      %v2543 = vpop.permute.xlu0 %2542
      %2544 = vrot.lane.b32.xlu0 %v2418, 100
      %v2545 = vpop.permute.xlu0 %2544
      %2546 = vrot.lane.b32.xlu0 %v2419, 100
      %v2547 = vpop.permute.xlu0 %2546
      %2548 = vrot.lane.b32.xlu0 %v2420, 100
      %v2549 = vpop.permute.xlu0 %2548
      %2550 = vrot.lane.b32.xlu0 %v2421, 100
      %v2551 = vpop.permute.xlu0 %2550
      %2552 = vrot.lane.b32.xlu0 %v2423, 100
      %v2553 = vpop.permute.xlu0 %2552
      %2554 = vrot.lane.b32.xlu0 %v2432, 100
      %v2555 = vpop.permute.xlu0 %2554
      %2556 = vrot.lane.b32.xlu0 %v2433, 100
      %v2557 = vpop.permute.xlu0 %2556
      %2558 = vrot.lane.b32.xlu0 %v2434, 100
      %v2559 = vpop.permute.xlu0 %2558
      %2560 = vrot.lane.b32.xlu0 %v2435, 100
      %v2561 = vpop.permute.xlu0 %2560
      %2562 = vrot.lane.b32.xlu0 %v2437, 100
      %v2563 = vpop.permute.xlu0 %2562
      %2564 = vrot.lane.b32.xlu0 %v2447, 100
      %v2565 = vpop.permute.xlu0 %2564
      %2566 = vrot.lane.b32.xlu0 %v2448, 100
      %v2567 = vpop.permute.xlu0 %2566
      %2568 = vrot.lane.b32.xlu0 %v2449, 100
      %v2569 = vpop.permute.xlu0 %2568
      %2570 = vrot.lane.b32.xlu0 %v2450, 100
      %v2571 = vpop.permute.xlu0 %2570
      %2572 = vrot.lane.b32.xlu0 %v2464, 100
      %v2573 = vpop.permute.xlu0 %2572
      %2574 = vrot.lane.b32.xlu0 %v2465, 100
      %v2575 = vpop.permute.xlu0 %2574
      %2576 = vrot.lane.b32.xlu0 %v2466, 100
      %v2577 = vpop.permute.xlu0 %2576
      %2578 = vrot.lane.b32.xlu0 %v2467, 100
      %v2579 = vpop.permute.xlu0 %2578
      %2580 = vrot.lane.b32.xlu0 %v2468, 100
      %v2581 = vpop.permute.xlu0 %2580
      %2582 = vrot.lane.b32.xlu0 %v2482, 100
      %v2583 = vpop.permute.xlu0 %2582
      %2584 = vrot.lane.b32.xlu0 %v2483, 100
      %v2585 = vpop.permute.xlu0 %2584
      %2586 = vrot.lane.b32.xlu0 %v2484, 100
      %v2587 = vpop.permute.xlu0 %2586
      %2588 = vrot.lane.b32.xlu0 %v2485, 100
      %v2589 = vpop.permute.xlu0 %2588
      %2590 = vrot.lane.b32.xlu0 %v2486, 100
      %v2591 = vpop.permute.xlu0 %2590
      %2592 = vrot.lane.b32.xlu0 %v2500, 100
      %v2593 = vpop.permute.xlu0 %2592
      %2594 = vrot.lane.b32.xlu0 %v2501, 100
      %v2595 = vpop.permute.xlu0 %2594
      %2596 = vrot.lane.b32.xlu0 %v2502, 100
      %v2597 = vpop.permute.xlu0 %2596
      %2598 = vrot.lane.b32.xlu0 %v2503, 100
      %v2599 = vpop.permute.xlu0 %2598
      %2600 = vrot.lane.b32.xlu0 %v2504, 100
      %v2601 = vpop.permute.xlu0 %2600
      %vm2602 = vcmask 818176
      %v2603 = vsel %vm2602, %v2513, %v2515
      %v2604 = vsel %vm2602, %v2515, %v2517
      %v2605 = vsel %vm2602, %v2517, %v2519
      %v2606 = vsel %vm2602, %v2519, %v2521
      %v2607 = vsel %vm2602, %v2523, %v2525
      %v2608 = vsel %vm2602, %v2525, %v2527
      %v2609 = vsel %vm2602, %v2527, %v2529
      %v2610 = vsel %vm2602, %v2529, %v2531
      %v2611 = vsel %vm2602, %v2533, %v2535
      %v2612 = vsel %vm2602, %v2535, %v2537
      %v2613 = vsel %vm2602, %v2537, %v2539
      %v2614 = vsel %vm2602, %v2539, %v2541
      %v2615 = vsel %vm2602, %v2543, %v2545
      %v2616 = vsel %vm2602, %v2545, %v2547
      %v2617 = vsel %vm2602, %v2547, %v2549
      %v2618 = vsel %vm2602, %v2549, %v2551
      %v2619 = vsel %vm2602, %v2553, %v2555
      %v2620 = vsel %vm2602, %v2555, %v2557
      %v2621 = vsel %vm2602, %v2557, %v2559
      %v2622 = vsel %vm2602, %v2559, %v2561
      %v2623 = vsel %vm2602, %v2563, %v2565
      %v2624 = vsel %vm2602, %v2565, %v2567
      %v2625 = vsel %vm2602, %v2567, %v2569
      %v2626 = vsel %vm2602, %v2569, %v2571
      %v2627 = vsel %vm2602, %v2573, %v2575
      %v2628 = vsel %vm2602, %v2575, %v2577
      %v2629 = vsel %vm2602, %v2577, %v2579
      %v2630 = vsel %vm2602, %v2579, %v2581
      %v2631 = vsel %vm2602, %v2583, %v2585
      %v2632 = vsel %vm2602, %v2585, %v2587
      %v2633 = vsel %vm2602, %v2587, %v2589
      %v2634 = vsel %vm2602, %v2589, %v2591
      %v2635 = vsel %vm2602, %v2593, %v2595
      %v2636 = vsel %vm2602, %v2595, %v2597
      %v2637 = vsel %vm2602, %v2597, %v2599
      %v2638 = vsel %vm2602, %v2599, %v2601
      %v2676 = vsel %vm641, %v2505, 0
      %2678 = vmatprep.subr.mxu0 0.0
      %2679 = vmatpush1.msra.mxu0 0.0
      %2680 = vmatprep.subr.mxu0 0.0
      %2681 = vmatpush1.msra.mxu0 0.0
      %2682 = vmatprep.subr.mxu0 0.0
      %2683 = vmatpush1.msra.mxu0 0.0
      %2684 = vmatprep.subr.mxu0 0.0
      %2685 = vmatpush1.msra.mxu0 0.0
      %2686 = vmatprep.subr.mxu0 0.0
      %2687 = vmatpush1.msra.mxu0 0.0
      %2688 = vmatprep.subr.mxu0 0.0
      %2689 = vmatpush1.msra.mxu0 0.0
      %2690 = vmatprep.subr.mxu0 0.0
      %2691 = vmatpush1.msra.mxu0 0.0
      %2692 = vmatprep.subr.mxu0 %v2636
      %2693 = vmatpush1.msra.mxu0 %v2635
      %2694 = vmatprep.subr.mxu0 %v2632
      %2695 = vmatpush1.msra.mxu0 %v2631
      %2696 = vmatprep.subr.mxu0 %v2628
      %2697 = vmatpush1.msra.mxu0 %v2627
      %2698 = vmatprep.subr.mxu0 %v2624
      %2699 = vmatpush1.msra.mxu0 %v2623
      %2700 = vmatprep.subr.mxu0 %v2620
      %2701 = vmatpush1.msra.mxu0 %v2619
      %2702 = vmatprep.subr.mxu0 %v2616
      %2703 = vmatpush1.msra.mxu0 %v2615
      %2704 = vmatprep.subr.mxu0 %v2612
      %2705 = vmatpush1.msra.mxu0 %v2611
      %2706 = vmatprep.subr.mxu0 %v2608
      %2707 = vmatpush1.msra.mxu0 %v2607
      %2708 = vmatprep.subr.mxu0 %v2604
      %2709 = vmatpush1.msra.mxu0 %v2603
      %2710 = vmatprep.subr.mxu0 0.0
      %2711 = vmatpush2.msra.mxu0 0.0
      %2712 = vmatprep.subr.mxu0 0.0
      %2713 = vmatpush2.msra.mxu0 0.0
      %2714 = vmatprep.subr.mxu0 0.0
      %2715 = vmatpush2.msra.mxu0 0.0
      %2716 = vmatprep.subr.mxu0 0.0
      %2717 = vmatpush2.msra.mxu0 0.0
      %2718 = vmatprep.subr.mxu0 0.0
      %2719 = vmatpush2.msra.mxu0 0.0
      %2720 = vmatprep.subr.mxu0 0.0
      %2721 = vmatpush2.msra.mxu0 0.0
      %2722 = vmatprep.subr.mxu0 0.0
      %2723 = vmatpush2.msra.mxu0 0.0
      %2724 = vmatprep.subr.mxu0 0.0
      %2725 = vmatpush2.msra.mxu0 0.0
      %2726 = vmatprep.subr.mxu0 0.0
      %2727 = vmatpush2.msra.mxu0 0.0
      %2728 = vmatprep.subr.mxu0 0.0
      %2729 = vmatpush2.msra.mxu0 0.0
      %2730 = vmatprep.subr.mxu0 0.0
      %2731 = vmatpush2.msra.mxu0 0.0
      %2732 = vmatprep.subr.mxu0 0.0
      %2733 = vmatpush2.msra.mxu0 0.0
      %2734 = vmatprep.subr.mxu0 0.0
      %2735 = vmatpush2.msra.mxu0 0.0
      %2736 = vmatprep.subr.mxu0 0.0
      %2737 = vmatpush2.msra.mxu0 0.0
      %2738 = vmatprep.subr.mxu0 0.0
      %2739 = vmatpush2.msra.mxu0 0.0
      %2740 = vmatprep.subr.mxu0 0.0
      %2741 = vmatpush2.msra.mxu0 0.0
      %2742 = vmatprep.mubr.f32.mxu0 0.0
      %2743 = vmatmul.mubr.f32.gmra.mxu0 %v2676
      %v2744 = vpop.f32.mrf.mxu0
      %v2745 = vadd.f32 %v2510, %v2744
      %v2746 = vpop.f32.mrf.mxu0
      %v2747 = vadd.f32 %v2510, %v2746
      %2748 = vdwg.mxu0
      %2749 = vmatprep.subr.mxu0 0.0
      %2750 = vmatpush1.msra.mxu0 0.0
      %2751 = vmatprep.subr.mxu0 0.0
      %2752 = vmatpush1.msra.mxu0 0.0
      %2753 = vmatprep.subr.mxu0 0.0
      %2754 = vmatpush1.msra.mxu0 0.0
      %2755 = vmatprep.subr.mxu0 0.0
      %2756 = vmatpush1.msra.mxu0 0.0
      %2757 = vmatprep.subr.mxu0 0.0
      %2758 = vmatpush1.msra.mxu0 0.0
      %2759 = vmatprep.subr.mxu0 0.0
      %2760 = vmatpush1.msra.mxu0 0.0
      %2761 = vmatprep.subr.mxu0 0.0
      %2762 = vmatpush1.msra.mxu0 0.0
      %2763 = vmatprep.subr.mxu0 %v2638
      %2764 = vmatpush1.msra.mxu0 %v2637
      %2765 = vmatprep.subr.mxu0 %v2634
      %2766 = vmatpush1.msra.mxu0 %v2633
      %2767 = vmatprep.subr.mxu0 %v2630
      %2768 = vmatpush1.msra.mxu0 %v2629
      %2769 = vmatprep.subr.mxu0 %v2626
      %2770 = vmatpush1.msra.mxu0 %v2625
      %2771 = vmatprep.subr.mxu0 %v2622
      %2772 = vmatpush1.msra.mxu0 %v2621
      %2773 = vmatprep.subr.mxu0 %v2618
      %2774 = vmatpush1.msra.mxu0 %v2617
      %2775 = vmatprep.subr.mxu0 %v2614
      %2776 = vmatpush1.msra.mxu0 %v2613
      %2777 = vmatprep.subr.mxu0 %v2610
      %2778 = vmatpush1.msra.mxu0 %v2609
      %2779 = vmatprep.subr.mxu0 %v2606
      %2780 = vmatpush1.msra.mxu0 %v2605
      %2781 = vmatprep.subr.mxu0 0.0
      %2782 = vmatpush2.msra.mxu0 0.0
      %2783 = vmatprep.subr.mxu0 0.0
      %2784 = vmatpush2.msra.mxu0 0.0
      %2785 = vmatprep.subr.mxu0 0.0
      %2786 = vmatpush2.msra.mxu0 0.0
      %2787 = vmatprep.subr.mxu0 0.0
      %2788 = vmatpush2.msra.mxu0 0.0
      %2789 = vmatprep.subr.mxu0 0.0
      %2790 = vmatpush2.msra.mxu0 0.0
      %2791 = vmatprep.subr.mxu0 0.0
      %2792 = vmatpush2.msra.mxu0 0.0
      %2793 = vmatprep.subr.mxu0 0.0
      %2794 = vmatpush2.msra.mxu0 0.0
      %2795 = vmatprep.subr.mxu0 0.0
      %2796 = vmatpush2.msra.mxu0 0.0
      %2797 = vmatprep.subr.mxu0 0.0
      %2798 = vmatpush2.msra.mxu0 0.0
      %2799 = vmatprep.subr.mxu0 0.0
      %2800 = vmatpush2.msra.mxu0 0.0
      %2801 = vmatprep.subr.mxu0 0.0
      %2802 = vmatpush2.msra.mxu0 0.0
      %2803 = vmatprep.subr.mxu0 0.0
      %2804 = vmatpush2.msra.mxu0 0.0
      %2805 = vmatprep.subr.mxu0 0.0
      %2806 = vmatpush2.msra.mxu0 0.0
      %2807 = vmatprep.subr.mxu0 0.0
      %2808 = vmatpush2.msra.mxu0 0.0
      %2809 = vmatprep.subr.mxu0 0.0
      %2810 = vmatpush2.msra.mxu0 0.0
      %2811 = vmatprep.subr.mxu0 0.0
      %2812 = vmatpush2.msra.mxu0 0.0
      %2813 = vmatprep.mubr.f32.mxu0 0.0
      %2814 = vmatmul.mubr.f32.gmra.mxu0 %v2676
      %v2815 = vpop.f32.mrf.mxu0
      %v2816 = vadd.f32 %v2510, %v2815
      %v2817 = vpop.f32.mrf.mxu0
      %v2818 = vadd.f32 %v2510, %v2817
      %2819 = vdwg.mxu0
      %v2820 = vmax.f32 %v2745, 0.0
      %v2821 = vmax.f32 %v2747, 0.0
      %v2822 = vmax.f32 %v2816, 0.0
      %v2823 = vmax.f32 %v2818, 0.0
      %v2824 = vadd.f32 %v2359, %v2820
      %v2825 = vadd.f32 %v2360, %v2821
      %v2826 = vadd.f32 %v2361, %v2822
      %v2827 = vadd.f32 %v2362, %v2823
      %2829 = vrot.lane.b32.xlu0 %v2824, 28
      %v2830 = vpop.permute.xlu0 %2829
      %2833 = vrot.lane.b32.xlu0 %v2824, 20
      %v2834 = vpop.permute.xlu0 %2833
      %2835 = vrot.lane.b32.xlu0 %v2825, 20
      %v2836 = vpop.permute.xlu0 %2835
      %vm2837 = vcmask 162816
      %v2838 = vsel %vm2837, %v2834, %v2836
      %2840 = vrot.lane.b32.xlu0 %v2825, 12
      %v2841 = vpop.permute.xlu0 %2840
      %2843 = vrot.lane.b32.xlu0 %v2825, 4
      %v2844 = vpop.permute.xlu0 %2843
      %2846 = vrot.lane.b32.xlu0 %v2825, 124
      %v2847 = vpop.permute.xlu0 %2846
      %2849 = vrot.lane.b32.xlu0 %v2825, 116
      %v2850 = vpop.permute.xlu0 %2849
      %2853 = vrot.lane.b32.xlu0 %v2825, 108
      %v2854 = vpop.permute.xlu0 %2853
      %2855 = vrot.lane.b32.xlu0 %v2826, 108
      %v2856 = vpop.permute.xlu0 %2855
      %vm2857 = vcmask 883712
      %v2858 = vsel %vm2857, %v2854, %v2856
      %2860 = vrot.lane.b32.xlu0 %v2826, 100
      %v2861 = vpop.permute.xlu0 %2860
      %2863 = vrot.lane.b32.xlu0 %v2826, 92
      %v2864 = vpop.permute.xlu0 %2863
      %2866 = vrot.lane.b32.xlu0 %v2826, 84
      %v2867 = vpop.permute.xlu0 %2866
      %2869 = vrot.lane.b32.xlu0 %v2826, 76
      %v2870 = vpop.permute.xlu0 %2869
      %2872 = vrot.lane.b32.xlu0 %v2826, 68
      %v2873 = vpop.permute.xlu0 %2872
      %2876 = vrot.lane.b32.xlu0 %v2827, 60
      %v2877 = vpop.permute.xlu0 %2876
      %2879 = vrot.lane.b32.xlu0 %v2827, 52
      %v2880 = vpop.permute.xlu0 %2879
      %2882 = vrot.lane.b32.xlu0 %v2827, 44
      %v2883 = vpop.permute.xlu0 %2882
      %2885 = vrot.lane.b32.xlu0 %v2827, 36
      %v2886 = vpop.permute.xlu0 %2885
      %vm2888 = vcmask 130048
      %v2889 = vsel %vm2888, %v2830, %v2838
      %v2890 = vsel %vm908, %v2889, %v2841
      %vm2891 = vcmask 392192
      %v2892 = vsel %vm2891, %v2890, %v2844
      %v2893 = vsel %vm204, %v2892, %v2847
      %v2894 = vsel %vm400, %v2893, %v2850
      %vm2895 = vcmask 785408
      %v2896 = vsel %vm2895, %v2894, %v2858
      %vm2897 = vcmask 916480
      %v2898 = vsel %vm2897, %v2896, %v2861
      %v2899 = vsel %vm2888, %v2864, %v2867
      %v2900 = vsel %vm908, %v2899, %v2870
      %v2901 = vsel %vm2891, %v2900, %v2873
      %v2902 = vsel %vm204, %v2901, %v2877
      %v2903 = vsel %vm400, %v2902, %v2880
      %v2904 = vsel %vm2895, %v2903, %v2883
      %v2905 = vsel %vm2897, %v2904, %v2886
      %v2906 = vadd.f32 %v198, %v2898
      %v2907 = vadd.f32 %v199, %v2905
      %2908 = vst [vmem:[%s197] sm:$0xff] %v2906
      %2909 = vst [vmem:[%s197 + $0x8] sm:$0xff] %v2907
      %p2910 = scmp.lt.s32.totalorder %s15, 1
      %s2911 = scalar_select %p2910, %s15, 1
      %s2912 = smul.addr %s2911, 2
      %s2913 = smul.addr %s2912, 8
      %s2914 = scalar_lea.vmem %s4, %s2913
      // Predicated region
      $region37: #{resblock.1} parent=35 // pred_check
        %p2915 = pneg %p122
      $region38: #{resblock.1} parent=35 // pred_check_branch
        %2917 = sbr.rel (%p2915) target = $region40
      $region39: #{resblock.1} parent=35 // pred_region
        _
      $region40: #{resblock.1} parent=35 // pred_fallthru
        _
    $region36: #{resblock.1} parent=5 // pred_fallthru
      _
    %p2918 = scmp.le.s32.totalorder 2, %s10
    // Predicated region
    $region41: #{resblock.1} parent=5 // pred_check
      %p2919 = pneg %p2918
    $region42: #{resblock.1} parent=5 // pred_check_branch
      %2921 = sbr.rel (%p2919) target = $region44
    $region43: #{resblock.1} parent=5 // pred_region
      %s2922 = ssub.s32 %s10, 2
      // Predicated region
      $region45: #{resblock.1} parent=43 // pred_check
        %p2923 = pneg %p128
      $region46: #{resblock.1} parent=43 // pred_check_branch
        %2925 = sbr.rel (%p2923) target = $region48
      $region47: #{resblock.1} parent=43 // pred_region
        %p2926 = scmp.lt.s32.totalorder %s16, 1
        %s2927 = scalar_select %p2926, %s16, 1
        %s2928 = smul.addr %s2927, 2
        %s2929 = smul.addr %s2928, 8
        %s2930 = scalar_lea.vmem %s4, %s2929
      $region48: #{resblock.1} parent=43 // pred_fallthru
        _
    $region44: #{resblock.1} parent=5 // pred_fallthru
      _
  $region6: #{resblock.1} parent=0 // loop_footer
    %s14 = sadd.s32 1, %s10
  $region7: #{resblock.1} parent=0 // loop_footer_branch
    %9 = sbr.rel target = $region3
  $region8: #{resblock.1} parent=0 // loop_exit
    _

</llo_original>
